<compile_context>
chip_gen: v6e
topology: v6e:2x2x1
jax: 0.10.0
libtpu: 0.0.40
codegen_flags: <defaults>
</compile_context>

<pallas_src>
import functools
import math

import jax
import jax.numpy as jnp
from jax import lax
from jax.experimental import pallas as pl
from jax.experimental.pallas import tpu as pltpu

PADW = 128                      # lane-dense padded width for MLP / GraphConv slabs
_ROW_TILE = 256                 # target rows per block for row-tiled kernels
_VMEM_LIMIT = 48 * 1024 * 1024  # > v5e/v6e default scoped limit, < v7x 64 MiB physical


def _row_tile(n, target=_ROW_TILE, align=8):
    """Largest divisor of n that is <= target and a multiple of `align` (fallback: n)."""
    if n <= target:
        return n
    for t in range(target, align - 1, -1):
        if n % t == 0 and t % align == 0:
            return t
    return n


def _cparams(n_axes, semantics="parallel", vmem=None):
    kw = {"dimension_semantics": tuple([semantics] * n_axes)}
    if vmem is not None:
        kw["vmem_limit_bytes"] = vmem
    return pltpu.CompilerParams(**kw)


# ----------------------------------------------------------------------------
# Fused RDN stand-in: 4x (3x3 conv as one im2col matmul) + residual, all in VMEM
# ----------------------------------------------------------------------------
def _rdn_kernel(x_ref, w1, b1, w2, b2, w3, b3, w4, b4, o_ref, pad_buf):
    xp = x_ref[0]                               # [H+2, W+2, 3] bf16 (zero-padded border)
    hp, wp, _ = xp.shape
    h, w = hp - 2, wp - 2
    fdim = o_ref.shape[-1]

    def conv_value(xpad, w_ref, b_ref, relu=False):
        cin = xpad.shape[-1]
        taps = jnp.concatenate(
            [xpad[di:di + h, dj:dj + w, :].reshape(h * w, cin)
             for di in range(3) for dj in range(3)], axis=-1)          # [HW, 9*cin]
        y = jnp.dot(taps, w_ref[...], preferred_element_type=jnp.float32) + b_ref[...]
        return jnp.maximum(y, 0.0) if relu else y

    def conv_buf(w_ref, b_ref, relu=False):
        taps = jnp.concatenate(
            [pad_buf[di:di + h, dj:dj + w, :].reshape(h * w, fdim)
             for di in range(3) for dj in range(3)], axis=-1)           # [HW, 9*F]
        y = jnp.dot(taps, w_ref[...], preferred_element_type=jnp.float32) + b_ref[...]
        return jnp.maximum(y, 0.0) if relu else y

    def stage(y_flat):        # write [HW, F] into the interior of the zero-bordered scratch
        pad_buf[1:h + 1, 1:w + 1, :] = y_flat.reshape(h, w, fdim).astype(pad_buf.dtype)

    pad_buf[...] = jnp.zeros_like(pad_buf)       # zero border (interior overwritten per stage)
    f_m1 = conv_value(xp, w1, b1)                # [HW, F] f32
    stage(f_m1)
    f0 = conv_buf(w2, b2)
    stage(f0)
    f1 = conv_buf(w3, b3, relu=True)
    stage(f1)
    out = conv_buf(w4, b4) + f_m1                # residual add fused
    o_ref[0] = out.reshape(h, w, fdim).astype(o_ref.dtype)


def rdn_forward(rdn_params, img):
    """Fused 4-conv residual stack, one pallas_call, grid over batch images."""
    # TODO(synk): for large imsize, tile over H row-strips with a 4-row halo (v7x 64 MiB VMEM).
    bsz, h, w, cin = img.shape
    (w1, b1), (w2, b2), (w3, b3), (w4, b4) = rdn_params
    fdim = w1.shape[1]
    xp = jnp.pad(img, ((0, 0), (1, 1), (1, 1), (0, 0))).astype(jnp.bfloat16)

    def cspec(shape):
        return pl.BlockSpec(shape, lambda i: (0, 0))

    return pl.pallas_call(
        _rdn_kernel,
        out_shape=jax.ShapeDtypeStruct((bsz, h, w, fdim), jnp.bfloat16),
        grid=(bsz,),
        in_specs=[pl.BlockSpec((1, h + 2, w + 2, cin), lambda i: (i, 0, 0, 0)),
                  cspec(w1.shape), cspec(b1.shape),
                  cspec(w2.shape), cspec(b2.shape),
                  cspec(w3.shape), cspec(b3.shape),
                  cspec(w4.shape), cspec(b4.shape)],
        out_specs=pl.BlockSpec((1, h, w, fdim), lambda i: (i, 0, 0, 0)),
        scratch_shapes=[pltpu.VMEM((h + 2, w + 2, fdim), jnp.bfloat16)],
        compiler_params=_cparams(1, "parallel", vmem=_VMEM_LIMIT),
    )(xp, w1, b1, w2, b2, w3, b3, w4, b4)


# ----------------------------------------------------------------------------
# Fused FCBlock: compact bf16 input, all layers in VMEM, lane-dense 128-wide slab out
# ----------------------------------------------------------------------------
def _mlp_kernel(*refs, n_layers, out_f, extra_w):
    if extra_w:
        x_ref, w0_ref, wr_ref, b_ref, e_ref, o_ref = refs
    else:
        x_ref, w0_ref, wr_ref, b_ref, o_ref = refs
    h = jnp.dot(x_ref[...], w0_ref[...], preferred_element_type=jnp.float32) + b_ref[0]
    for l in range(1, n_layers):
        h = jnp.maximum(h, 0.0)   # TODO(synk): FCBlock nonlinearity assumed to be ReLU.
        h = jnp.dot(h.astype(jnp.bfloat16), wr_ref[l - 1],
                    preferred_element_type=jnp.float32) + b_ref[l]
    o_ref[...] = h.astype(o_ref.dtype)
    if extra_w:   # fuse the [qtr | centroids] concat of the reference
        o_ref[:, out_f:out_f + extra_w] = e_ref[...].astype(o_ref.dtype)


def pallas_fcblock(mlp, x, extra=None):
    """Whole FCBlock in one pallas_call; returns the lane-dense [N, 128] bf16 slab."""
    n, in_w = x.shape
    L = mlp["n_layers"]
    tile = _row_tile(n)
    specs = [
        pl.BlockSpec((tile, in_w), lambda i: (i, 0)),
        pl.BlockSpec((in_w, PADW), lambda i: (0, 0)),
        pl.BlockSpec((L - 1, PADW, PADW), lambda i: (0, 0, 0)),
        pl.BlockSpec((L, 1, PADW), lambda i: (0, 0, 0)),
    ]
    args = [x.astype(jnp.bfloat16), mlp["w0"], mlp["wr"], mlp["b"]]
    extra_w = 0
    if extra is not None:
        extra_w = extra.shape[1]
        specs.append(pl.BlockSpec((tile, extra_w), lambda i: (i, 0)))
        args.append(extra.astype(jnp.bfloat16))
    return pl.pallas_call(
        functools.partial(_mlp_kernel, n_layers=L, out_f=mlp["out_f"], extra_w=extra_w),
        out_shape=jax.ShapeDtypeStruct((n, PADW), jnp.bfloat16),
        grid=(n // tile,),
        in_specs=specs,
        out_specs=pl.BlockSpec((tile, PADW), lambda i: (i, 0)),
        compiler_params=_cparams(1),
    )(*args)


# ----------------------------------------------------------------------------
# GraphConv (aggr='max'): single fused K=2*128 contraction on the padded slabs
# ----------------------------------------------------------------------------
def _graphconv_kernel(agg_ref, x_ref, w_ref, b_ref, o_ref):
    h = jnp.concatenate([agg_ref[...], x_ref[...]], axis=-1)         # lane-aligned 128+128
    o_ref[...] = (jnp.dot(h, w_ref[...], preferred_element_type=jnp.float32)
                  + b_ref[...]).astype(o_ref.dtype)


def pallas_graphconv(agg, x, w_cat, b):
    n = x.shape[0]
    tile = _row_tile(n)
    return pl.pallas_call(
        _graphconv_kernel,
        out_shape=jax.ShapeDtypeStruct((n, PADW), jnp.bfloat16),
        grid=(n // tile,),
        in_specs=[
            pl.BlockSpec((tile, PADW), lambda i: (i, 0)),
            pl.BlockSpec((tile, PADW), lambda i: (i, 0)),
            pl.BlockSpec((2 * PADW, PADW), lambda i: (0, 0)),
            pl.BlockSpec((1, PADW), lambda i: (0, 0)),
        ],
        out_specs=pl.BlockSpec((tile, PADW), lambda i: (i, 0)),
        compiler_params=_cparams(1),
    )(agg, x, w_cat, b)


def graph_conv_apply(gc, x_slab, edge_index):
    # torch_geometric GraphConv(aggr='max'): out = lin_rel(max_j x_j) + lin_root(x_i)
    src, dst = edge_index[0], edge_index[1]
    msgs = jnp.take(x_slab, src, axis=0).astype(jnp.float32)
    agg = jax.ops.segment_max(msgs, dst, num_segments=x_slab.shape[0])
    agg = jnp.where(jnp.isfinite(agg), agg, 0.0).astype(jnp.bfloat16)
    return pallas_graphconv(agg, x_slab, gc["w_cat"], gc["b"])


# ----------------------------------------------------------------------------
# scatter_mean: bf16 one-hot built in-kernel, counts folded into the same matmul
# ----------------------------------------------------------------------------
def _scatter_mean_kernel(idx_ref, vals_ref, o_ref, acc, *, num_segments):
    step = pl.program_id(0)

    @pl.when(step == 0)
    def _():
        acc[...] = jnp.zeros_like(acc)

    ids = idx_ref[...]                                            # [1, tile] int32
    tile = ids.shape[1]
    seg_iota = lax.broadcasted_iota(jnp.int32, (num_segments, tile), 0)
    onehot = (seg_iota == ids).astype(jnp.bfloat16)               # [K, tile]
    acc[...] += jnp.dot(onehot, vals_ref[...], preferred_element_type=jnp.float32)

    @pl.when(step == pl.num_programs(0) - 1)
    def _():
        f = o_ref.shape[1]
        cnt = jnp.maximum(acc[:, f:f + 1], 1.0)                   # counts from the ones column
        o_ref[...] = acc[:, :f] / cnt


def scatter_mean_pallas(vals, idx, num_segments):
    n, f = vals.shape
    vals1 = jnp.concatenate(
        [vals.astype(jnp.bfloat16), jnp.ones((n, 1), jnp.bfloat16)], axis=-1)   # [n, F+1]
    tile = _row_tile(n, align=128)
    return pl.pallas_call(
        functools.partial(_scatter_mean_kernel, num_segments=num_segments),
        out_shape=jax.ShapeDtypeStruct((num_segments, f), jnp.float32),
        grid=(n // tile,),
        in_specs=[
            pl.BlockSpec((1, tile), lambda i: (0, i)),
            pl.BlockSpec((tile, f + 1), lambda i: (i, 0)),
        ],
        out_specs=pl.BlockSpec((num_segments, f), lambda i: (0, 0)),
        scratch_shapes=[pltpu.VMEM((num_segments, f + 1), jnp.float32)],
        compiler_params=_cparams(1, "arbitrary"),
    )(idx.reshape(1, n).astype(jnp.int32), vals1)


# ----------------------------------------------------------------------------
# RenderQTR (transposed layout: nodes on lanes, lane-dense [3, N] output)
# ----------------------------------------------------------------------------
def _render_qtr_kernel(g_ref, f_ref, o_ref):
    g = g_ref[...]                                   # [2, tile] f32
    f = f_ref[...].astype(jnp.float32)               # [20, tile]
    dx = g[0:1] - f[0:1]
    dy = g[1:2] - f[1:2]
    dxx, dyy, dxy = dx * dx, dy * dy, dx * dy
    outs = []
    for c in range(3):
        bp = f[2 + 6 * c: 8 + 6 * c]                 # [6, tile]
        outs.append(bp[0:1] + bp[1:2] * dx + bp[2:3] * dy
                    + bp[3:4] * dxx + bp[4:5] * dyy + bp[5:6] * dxy)
    o_ref[...] = jnp.concatenate(outs, axis=0).astype(o_ref.dtype)


def pallas_render_qtr(grid_t, feats_t):
    """grid_t: [2, N] pixel coords; feats_t: [20, N] = [centroids | 18 qtr params]^T."""
    n = grid_t.shape[1]
    d = feats_t.shape[0]
    tile = _row_tile(n, align=128)
    return pl.pallas_call(
        _render_qtr_kernel,
        out_shape=jax.ShapeDtypeStruct((3, n), jnp.float32),
        grid=(n // tile,),
        in_specs=[
            pl.BlockSpec((2, tile), lambda i: (0, i)),
            pl.BlockSpec((d, tile), lambda i: (0, i)),
        ],
        out_specs=pl.BlockSpec((3, tile), lambda i: (0, i)),
        compiler_params=_cparams(1),
    )(grid_t.astype(jnp.float32), feats_t.astype(jnp.bfloat16))


# ----------------------------------------------------------------------------
# Graph helpers (JAX glue)
# ----------------------------------------------------------------------------
def build_perception(size, length):
    edges = [[], []]
    for i in range(size):
        for j in range(size):
            loc = i * size + j
            for dx in range(-length, length + 1):
                for dy in range(-length, length + 1):
                    if 0 <= i + dx < size and 0 <= j + dy < size:
                        edges[0].append(loc)
                        edges[1].append((i + dx) * size + (j + dy))
    return jnp.asarray(edges, dtype=jnp.int32)


def make_grid_coords(size):
    ii, jj = jnp.meshgrid(jnp.arange(size), jnp.arange(size), indexing="ij")
    return jnp.stack([ii.reshape(-1), jj.reshape(-1)], axis=-1).astype(jnp.float32)


def p1_cluster(side, batch_size):
    # TODO(synk): P1AffinityAggregation (learned affinity clustering) source not provided;
    # deterministic 2x2 spatial pooling stands in for it and affinity losses are 0.
    new_side = side // 2
    n_per = side * side
    k_per = new_side * new_side
    node_idx = jnp.arange(batch_size * n_per)
    b_idx = node_idx // n_per
    rem = node_idx % n_per
    ii, jj = rem // side, rem % side
    cluster = (b_idx * k_per + (ii // 2) * new_side + (jj // 2)).astype(jnp.int32)
    return cluster, batch_size * k_per


# ----------------------------------------------------------------------------
# Parameter init (deterministic, synthetic; bf16 weights, f32 biases, padded/folded at init)
# ----------------------------------------------------------------------------
def init_params(key, node_feat_size):
    f = node_feat_size
    keys = jax.random.split(key, 64)
    it = iter(keys)

    def lin(din, dout):
        k = next(it)
        kw, kb = jax.random.split(k)
        lim = 1.0 / math.sqrt(din)
        return (jax.random.uniform(kw, (din, dout), jnp.float32, -lim, lim),
                jax.random.uniform(kb, (dout,), jnp.float32, -lim, lim))

    def conv_w(cin, cout):
        # im2col layout: rows ordered tap-major (di, dj) with cin innermost.
        w, b = lin(9 * cin, cout)
        return w.astype(jnp.bfloat16), b.reshape(1, cout).astype(jnp.float32)

    def mlp(in_f, hidden, nhl, out_f, in_width=None, scale_rows=None, scale=1.0):
        assert hidden <= PADW and out_f <= PADW
        in_width = in_f if in_width is None else in_width
        dims = [in_f] + [hidden] * (nhl + 1) + [out_f]
        layers = [lin(dims[i], dims[i + 1]) for i in range(len(dims) - 1)]
        w0, _ = layers[0]
        if scale_rows is not None:      # fold the reference's 10x centroid/moment cast into W0
            w0 = w0.at[scale_rows[0]:scale_rows[1], :].multiply(scale)
        w0p = jnp.pad(w0, ((0, in_width - in_f), (0, PADW - w0.shape[1]))).astype(jnp.bfloat16)
        wr = jnp.stack([jnp.pad(wl, ((0, PADW - wl.shape[0]), (0, PADW - wl.shape[1])))
                        for wl, _ in layers[1:]]).astype(jnp.bfloat16)
        b = jnp.stack([jnp.pad(bl, (0, PADW - bl.shape[0]))[None, :]
                       for _, bl in layers]).astype(jnp.float32)
        return {"w0": w0p, "wr": wr, "b": b, "out_f": out_f, "n_layers": len(layers)}

    def gconv(fdim):
        w_rel, b_rel = lin(fdim, fdim)
        w_root, _ = lin(fdim, fdim)
        w_cat = jnp.zeros((2 * PADW, PADW), jnp.float32)
        w_cat = w_cat.at[:fdim, :fdim].set(w_rel)
        w_cat = w_cat.at[PADW:PADW + fdim, :fdim].set(w_root)
        b = jnp.pad(b_rel, (0, PADW - fdim))[None, :]
        return {"w_cat": w_cat.astype(jnp.bfloat16), "b": b.astype(jnp.float32)}

    return {
        "node_feat_size": f,
        # TODO(synk): full RDN (4 RDBs x 3 convs, growth 16, GFF) condensed to a 4-conv residual stack.
        "rdn": [conv_w(3, f), conv_w(f, f), conv_w(f, f), conv_w(f, f)],
        "node_transforms": [mlp(f + 4, 100, 2, f, scale_rows=(f, f + 4), scale=10.0)
                            for _ in range(2)],
        "graph_convs": [gconv(f) for _ in range(2)],
        "node_to_qtr_p2": mlp(f, 100, 3, 6 * 3, in_width=PADW),
    }


# ----------------------------------------------------------------------------
# PSGNet forward
# ----------------------------------------------------------------------------
def psgnet_forward(params, img, imsize, perception_size):
    batch_size, h, w, _ = img.shape
    assert h == imsize and w == imsize
    f = params["node_feat_size"]
    n_per = imsize * imsize

    spatial_coords = make_grid_coords(imsize) / imsize                 # [H*W, 2]
    spatial_edges = build_perception(imsize, perception_size)          # [2, E] per image
    coords_rep = jnp.tile(spatial_coords, (batch_size, 1))             # [B*H*W, 2] f32
    coords_sq = jnp.concatenate([coords_rep, coords_rep ** 2], -1)     # [B*H*W, 4]

    # ---- fused RDN stand-in (single kernel, bf16 output) ----
    im_feats = rdn_forward(params["rdn"], img)                         # [B,H,W,F] bf16
    x_pix = im_feats.reshape(batch_size * n_per, f)

    # ---- batched graph (Batch.from_data_list equivalent) ----
    edge_index = jnp.concatenate(
        [spatial_edges + b * n_per for b in range(batch_size)], axis=1)
    batch = jnp.repeat(jnp.arange(batch_size), n_per)

    # level-0 merged scatter values: [features | coords | coords^2]  -> one MXU pass
    lvl0_vals = jnp.concatenate([x_pix, coords_sq.astype(jnp.bfloat16)], axis=-1)  # [N, F+4]

    clusters, composed_clusters, all_losses = [], [], []
    intermediates, level_centroids, level_moments, level_batch = [], [], [], []
    x_slab = None
    cluster_r = None
    side = imsize
    for lvl in range(2):  # struct = [1, 1]
        batch_unc = batch
        cluster, num_clusters = p1_cluster(side, batch_size)
        side //= 2
        new_edges = jnp.take(cluster, edge_index)      # coarsened edges (dupes ok for max aggr)
        new_batch = jnp.repeat(jnp.arange(batch_size), num_clusters // batch_size)
        clusters.append((cluster, batch_unc))
        cluster_r = cluster if lvl == 0 else jnp.take(cluster, cluster_r)   # pixel -> level
        composed_clusters.append(cluster_r)

        if lvl == 0:
            # one scatter for pooled features + centroids + moments (shared cluster map)
            pooled = scatter_mean_pallas(lvl0_vals, cluster, num_clusters)   # [K, F+4] f32
            tin = pooled                                                     # [x | cent | mom]
            centroids, moments = pooled[:, f:f + 2], pooled[:, f + 2:f + 4]
        else:
            x_pooled = scatter_mean_pallas(x_slab[:, :f], cluster, num_clusters)     # [K, F]
            cm = scatter_mean_pallas(coords_sq, cluster_r, num_clusters)             # [K, 4]
            centroids, moments = cm[:, :2], cm[:, 2:]
            tin = jnp.concatenate([x_pooled, cm], axis=-1)                           # [K, F+4]

        # FCBlock (10x scale folded into W0) -> GraphConv, both on lane-dense 128-wide slabs
        x_slab = pallas_fcblock(params["node_transforms"][lvl], tin)
        x_slab = graph_conv_apply(params["graph_convs"][lvl], x_slab, new_edges)

        edge_index, batch = new_edges, new_batch
        all_losses.append(jnp.float32(0.0))
        intermediates.append(x_slab)
        level_centroids.append(centroids)
        level_moments.append(moments)
        level_batch.append(new_batch)

    # ---- joint spatial features + paint-by-numbers reconstructions ----
    coords_rep_t = coords_rep.T                                        # [2, N_pix]
    recons = []
    for i in range(len(clusters)):
        # fused: node_to_qtr_p2 MLP + centroid columns written in-kernel -> [K,128] slab
        jsf_slab = pallas_fcblock(params["node_to_qtr_p2"], intermediates[i],
                                  extra=level_centroids[i])
        jsf = jsf_slab[:, :20]                                         # [qtr(18) | centroids(2)]
        jsf_pix = jnp.take(jsf, composed_clusters[i], axis=0)          # uncoarsen to pixels
        rendered = pallas_render_qtr(coords_rep_t, jsf_pix.T)          # [3, N_pix]
        recons.append(rendered.T.reshape(batch_size, n_per, 3))        # to_dense_batch (equal sizes)

    features = [s[:, :f].astype(jnp.float32) for s in intermediates]

    return {
        "recons": recons,
        "clusters": clusters,
        "losses": all_losses,
        "features": features,
        "centroids": level_centroids,
        "moments": level_moments,
        "batch": level_batch,
    }


# ----------------------------------------------------------------------------
if __name__ == "__main__":
    imsize = 8
    perception_size = 1
    node_feat_size = 16
    batch = 2

    key = jax.random.PRNGKey(0)
    k_img, k_params = jax.random.split(key)
    img = jax.random.uniform(k_img, (batch, imsize, imsize, 3), jnp.float32)  # NHWC

    params = init_params(k_params, node_feat_size)
    out = psgnet_forward(params, img, imsize, perception_size)
    out = jax.block_until_ready(out)

    assert out["recons"][0].shape == (batch, imsize * imsize, 3)
    assert out["recons"][1].shape == (batch, imsize * imsize, 3)
    assert out["features"][0].shape == (batch * (imsize // 2) ** 2, node_feat_size)
    assert out["features"][1].shape == (batch * (imsize // 4) ** 2, node_feat_size)
    print("KERNEL_OK")
</pallas_src>

<mosaic_0001>
module attributes {stable_mosaic.version = 11 : i64} {
  func.func @_rdn_kernel(%arg0: i32, %arg1: memref<1x10x10x3xbf16, #tpu.memory_space<vmem>>, %arg2: memref<27x16xbf16, #tpu.memory_space<vmem>>, %arg3: memref<1x16xf32, #tpu.memory_space<vmem>>, %arg4: memref<144x16xbf16, #tpu.memory_space<vmem>>, %arg5: memref<1x16xf32, #tpu.memory_space<vmem>>, %arg6: memref<144x16xbf16, #tpu.memory_space<vmem>>, %arg7: memref<1x16xf32, #tpu.memory_space<vmem>>, %arg8: memref<144x16xbf16, #tpu.memory_space<vmem>>, %arg9: memref<1x16xf32, #tpu.memory_space<vmem>>, %arg10: memref<1x8x8x16xbf16, #tpu.memory_space<vmem>>, %arg11: memref<10x10x16xbf16, #tpu.memory_space<vmem>>) attributes {dimension_semantics = [#tpu.dimension_semantics<parallel>], iteration_bounds = array<i64: 2>, scalar_prefetch = 0 : i64, scratch_operands = 1 : i64, tpu.core_type = #tpu.core_type<tc>, window_params = [{transform_indices = @transform_0, window_bounds = array<i64: 1, 10, 10, 3>}, {pipeline_mode = #tpu.pipeline_mode<synchronous>, transform_indices = @transform_1, window_bounds = array<i64: 27, 16>}, {pipeline_mode = #tpu.pipeline_mode<synchronous>, transform_indices = @transform_2, window_bounds = array<i64: 1, 16>}, {pipeline_mode = #tpu.pipeline_mode<synchronous>, transform_indices = @transform_3, window_bounds = array<i64: 144, 16>}, {pipeline_mode = #tpu.pipeline_mode<synchronous>, transform_indices = @transform_4, window_bounds = array<i64: 1, 16>}, {pipeline_mode = #tpu.pipeline_mode<synchronous>, transform_indices = @transform_5, window_bounds = array<i64: 144, 16>}, {pipeline_mode = #tpu.pipeline_mode<synchronous>, transform_indices = @transform_6, window_bounds = array<i64: 1, 16>}, {pipeline_mode = #tpu.pipeline_mode<synchronous>, transform_indices = @transform_7, window_bounds = array<i64: 144, 16>}, {pipeline_mode = #tpu.pipeline_mode<synchronous>, transform_indices = @transform_8, window_bounds = array<i64: 1, 16>}, {transform_indices = @transform_9, window_bounds = array<i64: 1, 8, 8, 16>}]} {
    %c0 = arith.constant 0 : index
    %c0_0 = arith.constant 0 : index
    %c0_1 = arith.constant 0 : index
    %c0_2 = arith.constant 0 : index
    %0 = vector.load %arg1[%c0, %c0_0, %c0_1, %c0_2] : memref<1x10x10x3xbf16, #tpu.memory_space<vmem>>, vector<1x10x10x3xbf16>
    %1 = vector.shape_cast %0 : vector<1x10x10x3xbf16> to vector<10x10x3xbf16>
    %cst = arith.constant 0.000000e+00 : bf16
    %2 = vector.broadcast %cst : bf16 to vector<10x10x16xbf16>
    %c0_3 = arith.constant 0 : index
    %c0_4 = arith.constant 0 : index
    %c0_5 = arith.constant 0 : index
    %3 = vector.load %arg11[%c0_3, %c0_4, %c0_5] : memref<10x10x16xbf16, #tpu.memory_space<vmem>>, vector<10x10x16xbf16>
    tpu.vector_store %arg11[%c0_3, %c0_4, %c0_5], %2 {strides = array<i32>} : memref<10x10x16xbf16, #tpu.memory_space<vmem>>, vector<10x10x16xbf16>,
    %4 = vector.extract_strided_slice %1 {offsets = [0, 0, 0], sizes = [8, 8, 3], strides = [1, 1, 1]} : vector<10x10x3xbf16> to vector<8x8x3xbf16>
    %5 = vector.shape_cast %4 : vector<8x8x3xbf16> to vector<64x3xbf16>
    %6 = vector.extract_strided_slice %1 {offsets = [0, 1, 0], sizes = [8, 8, 3], strides = [1, 1, 1]} : vector<10x10x3xbf16> to vector<8x8x3xbf16>
    %7 = vector.shape_cast %6 : vector<8x8x3xbf16> to vector<64x3xbf16>
    %8 = vector.extract_strided_slice %1 {offsets = [0, 2, 0], sizes = [8, 8, 3], strides = [1, 1, 1]} : vector<10x10x3xbf16> to vector<8x8x3xbf16>
    %9 = vector.shape_cast %8 : vector<8x8x3xbf16> to vector<64x3xbf16>
    %10 = vector.extract_strided_slice %1 {offsets = [1, 0, 0], sizes = [8, 8, 3], strides = [1, 1, 1]} : vector<10x10x3xbf16> to vector<8x8x3xbf16>
    %11 = vector.shape_cast %10 : vector<8x8x3xbf16> to vector<64x3xbf16>
    %12 = vector.extract_strided_slice %1 {offsets = [1, 1, 0], sizes = [8, 8, 3], strides = [1, 1, 1]} : vector<10x10x3xbf16> to vector<8x8x3xbf16>
    %13 = vector.shape_cast %12 : vector<8x8x3xbf16> to vector<64x3xbf16>
    %14 = vector.extract_strided_slice %1 {offsets = [1, 2, 0], sizes = [8, 8, 3], strides = [1, 1, 1]} : vector<10x10x3xbf16> to vector<8x8x3xbf16>
    %15 = vector.shape_cast %14 : vector<8x8x3xbf16> to vector<64x3xbf16>
    %16 = vector.extract_strided_slice %1 {offsets = [2, 0, 0], sizes = [8, 8, 3], strides = [1, 1, 1]} : vector<10x10x3xbf16> to vector<8x8x3xbf16>
    %17 = vector.shape_cast %16 : vector<8x8x3xbf16> to vector<64x3xbf16>
    %18 = vector.extract_strided_slice %1 {offsets = [2, 1, 0], sizes = [8, 8, 3], strides = [1, 1, 1]} : vector<10x10x3xbf16> to vector<8x8x3xbf16>
    %19 = vector.shape_cast %18 : vector<8x8x3xbf16> to vector<64x3xbf16>
    %20 = vector.extract_strided_slice %1 {offsets = [2, 2, 0], sizes = [8, 8, 3], strides = [1, 1, 1]} : vector<10x10x3xbf16> to vector<8x8x3xbf16>
    %21 = vector.shape_cast %20 : vector<8x8x3xbf16> to vector<64x3xbf16>
    %22 = tpu.concatenate %5, %7, %9, %11, %13, %15, %17, %19, %21 in 1 : vector<64x3xbf16>, vector<64x3xbf16>, vector<64x3xbf16>, vector<64x3xbf16>, vector<64x3xbf16>, vector<64x3xbf16>, vector<64x3xbf16>, vector<64x3xbf16>, vector<64x3xbf16> -> vector<64x27xbf16>
    %c0_6 = arith.constant 0 : index
    %c0_7 = arith.constant 0 : index
    %23 = vector.load %arg2[%c0_6, %c0_7] : memref<27x16xbf16, #tpu.memory_space<vmem>>, vector<27x16xbf16>
    %cst_8 = arith.constant dense<0.000000e+00> : vector<64x16xf32>
    %24 = tpu.matmul %22, %23, %cst_8 {dimension_numbers = #tpu.dot_dimension_numbers<[1], [0], [0], [1], [0, 0, 1, 1], [], []>} : vector<64x27xbf16>, vector<27x16xbf16>, vector<64x16xf32> -> vector<64x16xf32>
    %c0_9 = arith.constant 0 : index
    %c0_10 = arith.constant 0 : index
    %25 = vector.load %arg3[%c0_9, %c0_10] : memref<1x16xf32, #tpu.memory_space<vmem>>, vector<1x16xf32>
    %26 = vector.broadcast %25 : vector<1x16xf32> to vector<64x16xf32>
    %27 = arith.addf %24, %26 : vector<64x16xf32>
    %28 = vector.shape_cast %27 : vector<64x16xf32> to vector<8x8x16xf32>
    %29 = arith.truncf %28 : vector<8x8x16xf32> to vector<8x8x16xbf16>
    %c1 = arith.constant 1 : index
    %c1_11 = arith.constant 1 : index
    %c0_12 = arith.constant 0 : index
    %30 = vector.load %arg11[%c1, %c1_11, %c0_12] : memref<10x10x16xbf16, #tpu.memory_space<vmem>>, vector<8x8x16xbf16>
    tpu.vector_store %arg11[%c1, %c1_11, %c0_12], %29 {strides = array<i32>} : memref<10x10x16xbf16, #tpu.memory_space<vmem>>, vector<8x8x16xbf16>,
    %c0_13 = arith.constant 0 : index
    %c0_14 = arith.constant 0 : index
    %c0_15 = arith.constant 0 : index
    %31 = vector.load %arg11[%c0_13, %c0_14, %c0_15] : memref<10x10x16xbf16, #tpu.memory_space<vmem>>, vector<8x8x16xbf16>
    %32 = vector.shape_cast %31 : vector<8x8x16xbf16> to vector<64x16xbf16>
    %c0_16 = arith.constant 0 : index
    %c1_17 = arith.constant 1 : index
    %c0_18 = arith.constant 0 : index
    %33 = vector.load %arg11[%c0_16, %c1_17, %c0_18] : memref<10x10x16xbf16, #tpu.memory_space<vmem>>, vector<8x8x16xbf16>
    %34 = vector.shape_cast %33 : vector<8x8x16xbf16> to vector<64x16xbf16>
    %c0_19 = arith.constant 0 : index
    %c2 = arith.constant 2 : index
    %c0_20 = arith.constant 0 : index
    %35 = vector.load %arg11[%c0_19, %c2, %c0_20] : memref<10x10x16xbf16, #tpu.memory_space<vmem>>, vector<8x8x16xbf16>
    %36 = vector.shape_cast %35 : vector<8x8x16xbf16> to vector<64x16xbf16>
    %c1_21 = arith.constant 1 : index
    %c0_22 = arith.constant 0 : index
    %c0_23 = arith.constant 0 : index
    %37 = vector.load %arg11[%c1_21, %c0_22, %c0_23] : memref<10x10x16xbf16, #tpu.memory_space<vmem>>, vector<8x8x16xbf16>
    %38 = vector.shape_cast %37 : vector<8x8x16xbf16> to vector<64x16xbf16>
    %c1_24 = arith.constant 1 : index
    %c1_25 = arith.constant 1 : index
    %c0_26 = arith.constant 0 : index
    %39 = vector.load %arg11[%c1_24, %c1_25, %c0_26] : memref<10x10x16xbf16, #tpu.memory_space<vmem>>, vector<8x8x16xbf16>
    %40 = vector.shape_cast %39 : vector<8x8x16xbf16> to vector<64x16xbf16>
    %c1_27 = arith.constant 1 : index
    %c2_28 = arith.constant 2 : index
    %c0_29 = arith.constant 0 : index
    %41 = vector.load %arg11[%c1_27, %c2_28, %c0_29] : memref<10x10x16xbf16, #tpu.memory_space<vmem>>, vector<8x8x16xbf16>
    %42 = vector.shape_cast %41 : vector<8x8x16xbf16> to vector<64x16xbf16>
    %c2_30 = arith.constant 2 : index
    %c0_31 = arith.constant 0 : index
    %c0_32 = arith.constant 0 : index
    %43 = vector.load %arg11[%c2_30, %c0_31, %c0_32] : memref<10x10x16xbf16, #tpu.memory_space<vmem>>, vector<8x8x16xbf16>
    %44 = vector.shape_cast %43 : vector<8x8x16xbf16> to vector<64x16xbf16>
    %c2_33 = arith.constant 2 : index
    %c1_34 = arith.constant 1 : index
    %c0_35 = arith.constant 0 : index
    %45 = vector.load %arg11[%c2_33, %c1_34, %c0_35] : memref<10x10x16xbf16, #tpu.memory_space<vmem>>, vector<8x8x16xbf16>
    %46 = vector.shape_cast %45 : vector<8x8x16xbf16> to vector<64x16xbf16>
    %c2_36 = arith.constant 2 : index
    %c2_37 = arith.constant 2 : index
    %c0_38 = arith.constant 0 : index
    %47 = vector.load %arg11[%c2_36, %c2_37, %c0_38] : memref<10x10x16xbf16, #tpu.memory_space<vmem>>, vector<8x8x16xbf16>
    %48 = vector.shape_cast %47 : vector<8x8x16xbf16> to vector<64x16xbf16>
    %49 = tpu.concatenate %32, %34, %36, %38, %40, %42, %44, %46, %48 in 1 : vector<64x16xbf16>, vector<64x16xbf16>, vector<64x16xbf16>, vector<64x16xbf16>, vector<64x16xbf16>, vector<64x16xbf16>, vector<64x16xbf16>, vector<64x16xbf16>, vector<64x16xbf16> -> vector<64x144xbf16>
    %c0_39 = arith.constant 0 : index
    %c0_40 = arith.constant 0 : index
    %50 = vector.load %arg4[%c0_39, %c0_40] : memref<144x16xbf16, #tpu.memory_space<vmem>>, vector<144x16xbf16>
    %cst_41 = arith.constant dense<0.000000e+00> : vector<64x16xf32>
    %51 = tpu.matmul %49, %50, %cst_41 {dimension_numbers = #tpu.dot_dimension_numbers<[1], [0], [0], [1], [0, 0, 1, 1], [], []>} : vector<64x144xbf16>, vector<144x16xbf16>, vector<64x16xf32> -> vector<64x16xf32>
    %c0_42 = arith.constant 0 : index
    %c0_43 = arith.constant 0 : index
    %52 = vector.load %arg5[%c0_42, %c0_43] : memref<1x16xf32, #tpu.memory_space<vmem>>, vector<1x16xf32>
    %53 = vector.broadcast %52 : vector<1x16xf32> to vector<64x16xf32>
    %54 = arith.addf %51, %53 : vector<64x16xf32>
    %55 = vector.shape_cast %54 : vector<64x16xf32> to vector<8x8x16xf32>
    %56 = arith.truncf %55 : vector<8x8x16xf32> to vector<8x8x16xbf16>
    %c1_44 = arith.constant 1 : index
    %c1_45 = arith.constant 1 : index
    %c0_46 = arith.constant 0 : index
    %57 = vector.load %arg11[%c1_44, %c1_45, %c0_46] : memref<10x10x16xbf16, #tpu.memory_space<vmem>>, vector<8x8x16xbf16>
    tpu.vector_store %arg11[%c1_44, %c1_45, %c0_46], %56 {strides = array<i32>} : memref<10x10x16xbf16, #tpu.memory_space<vmem>>, vector<8x8x16xbf16>,
    %c0_47 = arith.constant 0 : index
    %c0_48 = arith.constant 0 : index
    %c0_49 = arith.constant 0 : index
    %58 = vector.load %arg11[%c0_47, %c0_48, %c0_49] : memref<10x10x16xbf16, #tpu.memory_space<vmem>>, vector<8x8x16xbf16>
    %59 = vector.shape_cast %58 : vector<8x8x16xbf16> to vector<64x16xbf16>
    %c0_50 = arith.constant 0 : index
    %c1_51 = arith.constant 1 : index
    %c0_52 = arith.constant 0 : index
    %60 = vector.load %arg11[%c0_50, %c1_51, %c0_52] : memref<10x10x16xbf16, #tpu.memory_space<vmem>>, vector<8x8x16xbf16>
    %61 = vector.shape_cast %60 : vector<8x8x16xbf16> to vector<64x16xbf16>
    %c0_53 = arith.constant 0 : index
    %c2_54 = arith.constant 2 : index
    %c0_55 = arith.constant 0 : index
    %62 = vector.load %arg11[%c0_53, %c2_54, %c0_55] : memref<10x10x16xbf16, #tpu.memory_space<vmem>>, vector<8x8x16xbf16>
    %63 = vector.shape_cast %62 : vector<8x8x16xbf16> to vector<64x16xbf16>
    %c1_56 = arith.constant 1 : index
    %c0_57 = arith.constant 0 : index
    %c0_58 = arith.constant 0 : index
    %64 = vector.load %arg11[%c1_56, %c0_57, %c0_58] : memref<10x10x16xbf16, #tpu.memory_space<vmem>>, vector<8x8x16xbf16>
    %65 = vector.shape_cast %64 : vector<8x8x16xbf16> to vector<64x16xbf16>
    %c1_59 = arith.constant 1 : index
    %c1_60 = arith.constant 1 : index
    %c0_61 = arith.constant 0 : index
    %66 = vector.load %arg11[%c1_59, %c1_60, %c0_61] : memref<10x10x16xbf16, #tpu.memory_space<vmem>>, vector<8x8x16xbf16>
    %67 = vector.shape_cast %66 : vector<8x8x16xbf16> to vector<64x16xbf16>
    %c1_62 = arith.constant 1 : index
    %c2_63 = arith.constant 2 : index
    %c0_64 = arith.constant 0 : index
    %68 = vector.load %arg11[%c1_62, %c2_63, %c0_64] : memref<10x10x16xbf16, #tpu.memory_space<vmem>>, vector<8x8x16xbf16>
    %69 = vector.shape_cast %68 : vector<8x8x16xbf16> to vector<64x16xbf16>
    %c2_65 = arith.constant 2 : index
    %c0_66 = arith.constant 0 : index
    %c0_67 = arith.constant 0 : index
    %70 = vector.load %arg11[%c2_65, %c0_66, %c0_67] : memref<10x10x16xbf16, #tpu.memory_space<vmem>>, vector<8x8x16xbf16>
    %71 = vector.shape_cast %70 : vector<8x8x16xbf16> to vector<64x16xbf16>
    %c2_68 = arith.constant 2 : index
    %c1_69 = arith.constant 1 : index
    %c0_70 = arith.constant 0 : index
    %72 = vector.load %arg11[%c2_68, %c1_69, %c0_70] : memref<10x10x16xbf16, #tpu.memory_space<vmem>>, vector<8x8x16xbf16>
    %73 = vector.shape_cast %72 : vector<8x8x16xbf16> to vector<64x16xbf16>
    %c2_71 = arith.constant 2 : index
    %c2_72 = arith.constant 2 : index
    %c0_73 = arith.constant 0 : index
    %74 = vector.load %arg11[%c2_71, %c2_72, %c0_73] : memref<10x10x16xbf16, #tpu.memory_space<vmem>>, vector<8x8x16xbf16>
    %75 = vector.shape_cast %74 : vector<8x8x16xbf16> to vector<64x16xbf16>
    %76 = tpu.concatenate %59, %61, %63, %65, %67, %69, %71, %73, %75 in 1 : vector<64x16xbf16>, vector<64x16xbf16>, vector<64x16xbf16>, vector<64x16xbf16>, vector<64x16xbf16>, vector<64x16xbf16>, vector<64x16xbf16>, vector<64x16xbf16>, vector<64x16xbf16> -> vector<64x144xbf16>
    %c0_74 = arith.constant 0 : index
    %c0_75 = arith.constant 0 : index
    %77 = vector.load %arg6[%c0_74, %c0_75] : memref<144x16xbf16, #tpu.memory_space<vmem>>, vector<144x16xbf16>
    %cst_76 = arith.constant dense<0.000000e+00> : vector<64x16xf32>
    %78 = tpu.matmul %76, %77, %cst_76 {dimension_numbers = #tpu.dot_dimension_numbers<[1], [0], [0], [1], [0, 0, 1, 1], [], []>} : vector<64x144xbf16>, vector<144x16xbf16>, vector<64x16xf32> -> vector<64x16xf32>
    %c0_77 = arith.constant 0 : index
    %c0_78 = arith.constant 0 : index
    %79 = vector.load %arg7[%c0_77, %c0_78] : memref<1x16xf32, #tpu.memory_space<vmem>>, vector<1x16xf32>
    %80 = vector.broadcast %79 : vector<1x16xf32> to vector<64x16xf32>
    %81 = arith.addf %78, %80 : vector<64x16xf32>
    %cst_79 = arith.constant 0.000000e+00 : f32
    %82 = vector.broadcast %cst_79 : f32 to vector<64x16xf32>
    %83 = arith.maximumf %81, %82 : vector<64x16xf32>
    %84 = vector.shape_cast %83 : vector<64x16xf32> to vector<8x8x16xf32>
    %85 = arith.truncf %84 : vector<8x8x16xf32> to vector<8x8x16xbf16>
    %c1_80 = arith.constant 1 : index
    %c1_81 = arith.constant 1 : index
    %c0_82 = arith.constant 0 : index
    %86 = vector.load %arg11[%c1_80, %c1_81, %c0_82] : memref<10x10x16xbf16, #tpu.memory_space<vmem>>, vector<8x8x16xbf16>
    tpu.vector_store %arg11[%c1_80, %c1_81, %c0_82], %85 {strides = array<i32>} : memref<10x10x16xbf16, #tpu.memory_space<vmem>>, vector<8x8x16xbf16>,
    %c0_83 = arith.constant 0 : index
    %c0_84 = arith.constant 0 : index
    %c0_85 = arith.constant 0 : index
    %87 = vector.load %arg11[%c0_83, %c0_84, %c0_85] : memref<10x10x16xbf16, #tpu.memory_space<vmem>>, vector<8x8x16xbf16>
    %88 = vector.shape_cast %87 : vector<8x8x16xbf16> to vector<64x16xbf16>
    %c0_86 = arith.constant 0 : index
    %c1_87 = arith.constant 1 : index
    %c0_88 = arith.constant 0 : index
    %89 = vector.load %arg11[%c0_86, %c1_87, %c0_88] : memref<10x10x16xbf16, #tpu.memory_space<vmem>>, vector<8x8x16xbf16>
    %90 = vector.shape_cast %89 : vector<8x8x16xbf16> to vector<64x16xbf16>
    %c0_89 = arith.constant 0 : index
    %c2_90 = arith.constant 2 : index
    %c0_91 = arith.constant 0 : index
    %91 = vector.load %arg11[%c0_89, %c2_90, %c0_91] : memref<10x10x16xbf16, #tpu.memory_space<vmem>>, vector<8x8x16xbf16>
    %92 = vector.shape_cast %91 : vector<8x8x16xbf16> to vector<64x16xbf16>
    %c1_92 = arith.constant 1 : index
    %c0_93 = arith.constant 0 : index
    %c0_94 = arith.constant 0 : index
    %93 = vector.load %arg11[%c1_92, %c0_93, %c0_94] : memref<10x10x16xbf16, #tpu.memory_space<vmem>>, vector<8x8x16xbf16>
    %94 = vector.shape_cast %93 : vector<8x8x16xbf16> to vector<64x16xbf16>
    %c1_95 = arith.constant 1 : index
    %c1_96 = arith.constant 1 : index
    %c0_97 = arith.constant 0 : index
    %95 = vector.load %arg11[%c1_95, %c1_96, %c0_97] : memref<10x10x16xbf16, #tpu.memory_space<vmem>>, vector<8x8x16xbf16>
    %96 = vector.shape_cast %95 : vector<8x8x16xbf16> to vector<64x16xbf16>
    %c1_98 = arith.constant 1 : index
    %c2_99 = arith.constant 2 : index
    %c0_100 = arith.constant 0 : index
    %97 = vector.load %arg11[%c1_98, %c2_99, %c0_100] : memref<10x10x16xbf16, #tpu.memory_space<vmem>>, vector<8x8x16xbf16>
    %98 = vector.shape_cast %97 : vector<8x8x16xbf16> to vector<64x16xbf16>
    %c2_101 = arith.constant 2 : index
    %c0_102 = arith.constant 0 : index
    %c0_103 = arith.constant 0 : index
    %99 = vector.load %arg11[%c2_101, %c0_102, %c0_103] : memref<10x10x16xbf16, #tpu.memory_space<vmem>>, vector<8x8x16xbf16>
    %100 = vector.shape_cast %99 : vector<8x8x16xbf16> to vector<64x16xbf16>
    %c2_104 = arith.constant 2 : index
    %c1_105 = arith.constant 1 : index
    %c0_106 = arith.constant 0 : index
    %101 = vector.load %arg11[%c2_104, %c1_105, %c0_106] : memref<10x10x16xbf16, #tpu.memory_space<vmem>>, vector<8x8x16xbf16>
    %102 = vector.shape_cast %101 : vector<8x8x16xbf16> to vector<64x16xbf16>
    %c2_107 = arith.constant 2 : index
    %c2_108 = arith.constant 2 : index
    %c0_109 = arith.constant 0 : index
    %103 = vector.load %arg11[%c2_107, %c2_108, %c0_109] : memref<10x10x16xbf16, #tpu.memory_space<vmem>>, vector<8x8x16xbf16>
    %104 = vector.shape_cast %103 : vector<8x8x16xbf16> to vector<64x16xbf16>
    %105 = tpu.concatenate %88, %90, %92, %94, %96, %98, %100, %102, %104 in 1 : vector<64x16xbf16>, vector<64x16xbf16>, vector<64x16xbf16>, vector<64x16xbf16>, vector<64x16xbf16>, vector<64x16xbf16>, vector<64x16xbf16>, vector<64x16xbf16>, vector<64x16xbf16> -> vector<64x144xbf16>
    %c0_110 = arith.constant 0 : index
    %c0_111 = arith.constant 0 : index
    %106 = vector.load %arg8[%c0_110, %c0_111] : memref<144x16xbf16, #tpu.memory_space<vmem>>, vector<144x16xbf16>
    %cst_112 = arith.constant dense<0.000000e+00> : vector<64x16xf32>
    %107 = tpu.matmul %105, %106, %cst_112 {dimension_numbers = #tpu.dot_dimension_numbers<[1], [0], [0], [1], [0, 0, 1, 1], [], []>} : vector<64x144xbf16>, vector<144x16xbf16>, vector<64x16xf32> -> vector<64x16xf32>
    %c0_113 = arith.constant 0 : index
    %c0_114 = arith.constant 0 : index
    %108 = vector.load %arg9[%c0_113, %c0_114] : memref<1x16xf32, #tpu.memory_space<vmem>>, vector<1x16xf32>
    %109 = vector.broadcast %108 : vector<1x16xf32> to vector<64x16xf32>
    %110 = arith.addf %107, %109 : vector<64x16xf32>
    %111 = arith.addf %110, %27 : vector<64x16xf32>
    %112 = vector.shape_cast %111 : vector<64x16xf32> to vector<8x8x16xf32>
    %113 = arith.truncf %112 : vector<8x8x16xf32> to vector<8x8x16xbf16>
    %c0_115 = arith.constant 0 : index
    %c0_116 = arith.constant 0 : index
    %c0_117 = arith.constant 0 : index
    %c0_118 = arith.constant 0 : index
    %114 = vector.load %arg10[%c0_115, %c0_116, %c0_117, %c0_118] : memref<1x8x8x16xbf16, #tpu.memory_space<vmem>>, vector<1x8x8x16xbf16>
    %115 = vector.shape_cast %114 : vector<1x8x8x16xbf16> to vector<8x8x16xbf16>
    %116 = vector.shape_cast %113 : vector<8x8x16xbf16> to vector<1x8x8x16xbf16>
    tpu.vector_store %arg10[%c0_115, %c0_116, %c0_117, %c0_118], %116 {strides = array<i32>} : memref<1x8x8x16xbf16, #tpu.memory_space<vmem>>, vector<1x8x8x16xbf16>,
    return
  }
  func.func @transform_0(%arg0: i32) -> (i32, i32, i32, i32) {
    %c0_i32 = arith.constant 0 : i32
    %c0_i32_0 = arith.constant 0 : i32
    %c0_i32_1 = arith.constant 0 : i32
    %c0_i32_2 = arith.constant 0 : i32
    return %arg0, %c0_i32, %c0_i32_0, %c0_i32_1 : i32, i32, i32, i32
  }
  func.func @transform_1(%arg0: i32) -> (i32, i32) {
    %c0_i32 = arith.constant 0 : i32
    %c0_i32_0 = arith.constant 0 : i32
    %c0_i32_1 = arith.constant 0 : i32
    return %c0_i32, %c0_i32_0 : i32, i32
  }
  func.func @transform_2(%arg0: i32) -> (i32, i32) {
    %c0_i32 = arith.constant 0 : i32
    %c0_i32_0 = arith.constant 0 : i32
    %c0_i32_1 = arith.constant 0 : i32
    return %c0_i32, %c0_i32_0 : i32, i32
  }
  func.func @transform_3(%arg0: i32) -> (i32, i32) {
    %c0_i32 = arith.constant 0 : i32
    %c0_i32_0 = arith.constant 0 : i32
    %c0_i32_1 = arith.constant 0 : i32
    return %c0_i32, %c0_i32_0 : i32, i32
  }
  func.func @transform_4(%arg0: i32) -> (i32, i32) {
    %c0_i32 = arith.constant 0 : i32
    %c0_i32_0 = arith.constant 0 : i32
    %c0_i32_1 = arith.constant 0 : i32
    return %c0_i32, %c0_i32_0 : i32, i32
  }
  func.func @transform_5(%arg0: i32) -> (i32, i32) {
    %c0_i32 = arith.constant 0 : i32
    %c0_i32_0 = arith.constant 0 : i32
    %c0_i32_1 = arith.constant 0 : i32
    return %c0_i32, %c0_i32_0 : i32, i32
  }
  func.func @transform_6(%arg0: i32) -> (i32, i32) {
    %c0_i32 = arith.constant 0 : i32
    %c0_i32_0 = arith.constant 0 : i32
    %c0_i32_1 = arith.constant 0 : i32
    return %c0_i32, %c0_i32_0 : i32, i32
  }
  func.func @transform_7(%arg0: i32) -> (i32, i32) {
    %c0_i32 = arith.constant 0 : i32
    %c0_i32_0 = arith.constant 0 : i32
    %c0_i32_1 = arith.constant 0 : i32
    return %c0_i32, %c0_i32_0 : i32, i32
  }
  func.func @transform_8(%arg0: i32) -> (i32, i32) {
    %c0_i32 = arith.constant 0 : i32
    %c0_i32_0 = arith.constant 0 : i32
    %c0_i32_1 = arith.constant 0 : i32
    return %c0_i32, %c0_i32_0 : i32, i32
  }
  func.func @transform_9(%arg0: i32) -> (i32, i32, i32, i32) {
    %c0_i32 = arith.constant 0 : i32
    %c0_i32_0 = arith.constant 0 : i32
    %c0_i32_1 = arith.constant 0 : i32
    %c0_i32_2 = arith.constant 0 : i32
    return %arg0, %c0_i32, %c0_i32_0, %c0_i32_1 : i32, i32, i32, i32
  }
}

</mosaic_0001>

<llo_original>
// kernel: tpu_custom_call.1
$region0: #{tpu_custom_call.1}
  #allocation0 [shape = 'u32[]', space=smem, size = 0x4, offset = 0x4, fixed_abs, tag = 'smem constant byte address 0x4 - core index']
  #allocation1 [shape = 'u32[144,128]{1,0:T(1,128)}', space=vmem, size = 0x12000, scoped, tag = 'internal scratch']
  #allocation2 [shape = 'bf16[10,10,16]{2,1,0:T(8,128)(2,1)}', space=vmem, size = 0xa000, scoped, tag = 'scratch operand']
  %s0 = inlined_call_operand.vmem [shape: bf16[2,10,10,3], index: 0, kind: input, shape index: {}]
  %s1 = inlined_call_operand.vmem [shape: bf16[27,16], index: 1, kind: input, shape index: {}]
  %s2 = inlined_call_operand.vmem [shape: f32[1,16], index: 2, kind: input, shape index: {}]
  %s3 = inlined_call_operand.vmem [shape: bf16[144,16], index: 3, kind: input, shape index: {}]
  %s4 = inlined_call_operand.vmem [shape: f32[1,16], index: 4, kind: input, shape index: {}]
  %s5 = inlined_call_operand.vmem [shape: bf16[144,16], index: 5, kind: input, shape index: {}]
  %s6 = inlined_call_operand.vmem [shape: f32[1,16], index: 6, kind: input, shape index: {}]
  %s7 = inlined_call_operand.vmem [shape: bf16[144,16], index: 7, kind: input, shape index: {}]
  %s8 = inlined_call_operand.vmem [shape: f32[1,16], index: 8, kind: input, shape index: {}]
  %s9 = inlined_call_operand.hbm [shape: bf16[2,8,8,16], index: 9, kind: output, shape index: {}]
  %s10 = sld [smem:[#allocation0]]
  $region69: #{tpu_custom_call.1} parent=0
    _
  %s12 = ssub.s32 1, %s10
  %s13 = scalar_select 0, %s12, %s10
  $region1: #{tpu_custom_call.1} parent=0
    #allocation3 [shape = 'u8[32768]{0}', space=vmem, size = 0x8000, scoped, tag = 'output window, operand 0']
    #allocation4 [shape = 's32[2]{0}', space=sflag, size = 0x8, scoped, tag = 'scoped memory for tpu_custom_call.1']
    %14 = vsyncpa [#allocation4], 0
    %s15 = scalar_lea.sflag [#allocation4], 1
    %16 = vsyncpa %s15, 0
    loop: start=0, step=1, limit=4
    $region2: #{tpu_custom_call.1} parent=1 // loop_pre_header
      _
    $region3: #{tpu_custom_call.1} parent=1 // loop_header
      %s18 = sphi 0, %s22
      %p19 = scmp.ge.s32.totalorder %s18, 4
      %s28 = sphi 0, %s30
      %s31 = sphi 0, %s28
      %s32 = sphi 0, %s31
      %s48 = sphi 0, %s32
      %s52 = sphi 0, %s52
      %s54 = sphi 0, %s52
      %s55 = sphi 0, %s54
      %s69 = sphi 0, %s55
      %s73 = sphi 0, %s73
      %s75 = sphi 0, %s73
      %s76 = sphi 0, %s75
      %s90 = sphi 0, %s76
      %s94 = sphi 0, %s94
      %s96 = sphi 0, %s94
      %s97 = sphi 0, %s96
      %s111 = sphi 0, %s97
      %s115 = sphi 0, %s115
      %s117 = sphi 0, %s115
      %s118 = sphi 0, %s117
      %s132 = sphi 0, %s118
      %s136 = sphi 0, %s136
      %s138 = sphi 0, %s136
      %s139 = sphi 0, %s138
      %s153 = sphi 0, %s139
      %s157 = sphi 0, %s157
      %s159 = sphi 0, %s157
      %s160 = sphi 0, %s159
      %s174 = sphi 0, %s160
      %s178 = sphi 0, %s178
      %s180 = sphi 0, %s178
      %s181 = sphi 0, %s180
      %s195 = sphi 0, %s181
      %s199 = sphi 0, %s199
      %s201 = sphi 0, %s199
      %s202 = sphi 0, %s201
      %s216 = sphi 0, %s202
      %s222 = sphi 0, %s224
      %s225 = sphi 0, %s222
      %s226 = sphi 0, %s225
      %s242 = sphi 0, %s226
    $region4: #{tpu_custom_call.1} parent=1 // loop_header_branch
      %21 = sbr.rel (%p19) target = $region8
    $region5: #{tpu_custom_call.1} parent=1 // loop_body
      %s23 = ssub.s32 %s18, 1
      %s24 = ssub.s32 %s18, 2
      %s25 = sadd.s32 %s18, 1
      %s26 = ssub.s32 %s18, %s25
      %p27 = scmp.eq.s32.totalorder %s26, 0
      %s29 = sadd.s32 %s28, 1
      %s30 = scalar_select %p27, %s28, %s29
      %p33 = pneg %p27
      %p34 = scmp.eq.s32.totalorder %s18, 1
      %p35 = por %p33, %p34
      %p36 = scmp.ne.s32.totalorder %s28, %s31
      %p37 = scmp.eq.s32.totalorder %s18, 0
      %p38 = por %p36, %p37
      %p39 = scmp.ne.s32.totalorder %s28, %s31
      %p40 = scmp.eq.s32.totalorder %s23, 1
      %p41 = por %p39, %p40
      %p42 = scmp.ne.s32.totalorder %s31, %s32
      %p43 = scmp.eq.s32.totalorder %s23, 0
      %p44 = por %p42, %p43
      %p45 = scmp.ne.s32.totalorder %s31, %s32
      %p46 = scmp.eq.s32.totalorder %s24, 1
      %p47 = por %p45, %p46
      %p49 = scmp.ne.s32.totalorder %s32, %s48
      %p50 = scmp.eq.s32.totalorder %s24, 0
      %p51 = por %p49, %p50
      %s53 = sadd.s32 %s52, 1
      %p56 = scmp.eq.s32.totalorder %s18, 1
      %p57 = scmp.ne.s32.totalorder %s52, %s54
      %p58 = scmp.eq.s32.totalorder %s18, 0
      %p59 = por %p57, %p58
      %p60 = scmp.ne.s32.totalorder %s52, %s54
      %p61 = scmp.eq.s32.totalorder %s23, 1
      %p62 = por %p60, %p61
      %p63 = scmp.ne.s32.totalorder %s54, %s55
      %p64 = scmp.eq.s32.totalorder %s23, 0
      %p65 = por %p63, %p64
      %p66 = scmp.ne.s32.totalorder %s54, %s55
      %p67 = scmp.eq.s32.totalorder %s24, 1
      %p68 = por %p66, %p67
      %p70 = scmp.ne.s32.totalorder %s55, %s69
      %p71 = scmp.eq.s32.totalorder %s24, 0
      %p72 = por %p70, %p71
      %s74 = sadd.s32 %s73, 1
      %p77 = scmp.eq.s32.totalorder %s18, 1
      %p78 = scmp.ne.s32.totalorder %s73, %s75
      %p79 = scmp.eq.s32.totalorder %s18, 0
      %p80 = por %p78, %p79
      %p81 = scmp.ne.s32.totalorder %s73, %s75
      %p82 = scmp.eq.s32.totalorder %s23, 1
      %p83 = por %p81, %p82
      %p84 = scmp.ne.s32.totalorder %s75, %s76
      %p85 = scmp.eq.s32.totalorder %s23, 0
      %p86 = por %p84, %p85
      %p87 = scmp.ne.s32.totalorder %s75, %s76
      %p88 = scmp.eq.s32.totalorder %s24, 1
      %p89 = por %p87, %p88
      %p91 = scmp.ne.s32.totalorder %s76, %s90
      %p92 = scmp.eq.s32.totalorder %s24, 0
      %p93 = por %p91, %p92
      %s95 = sadd.s32 %s94, 1
      %p98 = scmp.eq.s32.totalorder %s18, 1
      %p99 = scmp.ne.s32.totalorder %s94, %s96
      %p100 = scmp.eq.s32.totalorder %s18, 0
      %p101 = por %p99, %p100
      %p102 = scmp.ne.s32.totalorder %s94, %s96
      %p103 = scmp.eq.s32.totalorder %s23, 1
      %p104 = por %p102, %p103
      %p105 = scmp.ne.s32.totalorder %s96, %s97
      %p106 = scmp.eq.s32.totalorder %s23, 0
      %p107 = por %p105, %p106
      %p108 = scmp.ne.s32.totalorder %s96, %s97
      %p109 = scmp.eq.s32.totalorder %s24, 1
      %p110 = por %p108, %p109
      %p112 = scmp.ne.s32.totalorder %s97, %s111
      %p113 = scmp.eq.s32.totalorder %s24, 0
      %p114 = por %p112, %p113
      %s116 = sadd.s32 %s115, 1
      %p119 = scmp.eq.s32.totalorder %s18, 1
      %p120 = scmp.ne.s32.totalorder %s115, %s117
      %p121 = scmp.eq.s32.totalorder %s18, 0
      %p122 = por %p120, %p121
      %p123 = scmp.ne.s32.totalorder %s115, %s117
      %p124 = scmp.eq.s32.totalorder %s23, 1
      %p125 = por %p123, %p124
      %p126 = scmp.ne.s32.totalorder %s117, %s118
      %p127 = scmp.eq.s32.totalorder %s23, 0
      %p128 = por %p126, %p127
      %p129 = scmp.ne.s32.totalorder %s117, %s118
      %p130 = scmp.eq.s32.totalorder %s24, 1
      %p131 = por %p129, %p130
      %p133 = scmp.ne.s32.totalorder %s118, %s132
      %p134 = scmp.eq.s32.totalorder %s24, 0
      %p135 = por %p133, %p134
      %s137 = sadd.s32 %s136, 1
      %p140 = scmp.eq.s32.totalorder %s18, 1
      %p141 = scmp.ne.s32.totalorder %s136, %s138
      %p142 = scmp.eq.s32.totalorder %s18, 0
      %p143 = por %p141, %p142
      %p144 = scmp.ne.s32.totalorder %s136, %s138
      %p145 = scmp.eq.s32.totalorder %s23, 1
      %p146 = por %p144, %p145
      %p147 = scmp.ne.s32.totalorder %s138, %s139
      %p148 = scmp.eq.s32.totalorder %s23, 0
      %p149 = por %p147, %p148
      %p150 = scmp.ne.s32.totalorder %s138, %s139
      %p151 = scmp.eq.s32.totalorder %s24, 1
      %p152 = por %p150, %p151
      %p154 = scmp.ne.s32.totalorder %s139, %s153
      %p155 = scmp.eq.s32.totalorder %s24, 0
      %p156 = por %p154, %p155
      %s158 = sadd.s32 %s157, 1
      %p161 = scmp.eq.s32.totalorder %s18, 1
      %p162 = scmp.ne.s32.totalorder %s157, %s159
      %p163 = scmp.eq.s32.totalorder %s18, 0
      %p164 = por %p162, %p163
      %p165 = scmp.ne.s32.totalorder %s157, %s159
      %p166 = scmp.eq.s32.totalorder %s23, 1
      %p167 = por %p165, %p166
      %p168 = scmp.ne.s32.totalorder %s159, %s160
      %p169 = scmp.eq.s32.totalorder %s23, 0
      %p170 = por %p168, %p169
      %p171 = scmp.ne.s32.totalorder %s159, %s160
      %p172 = scmp.eq.s32.totalorder %s24, 1
      %p173 = por %p171, %p172
      %p175 = scmp.ne.s32.totalorder %s160, %s174
      %p176 = scmp.eq.s32.totalorder %s24, 0
      %p177 = por %p175, %p176
      %s179 = sadd.s32 %s178, 1
      %p182 = scmp.eq.s32.totalorder %s18, 1
      %p183 = scmp.ne.s32.totalorder %s178, %s180
      %p184 = scmp.eq.s32.totalorder %s18, 0
      %p185 = por %p183, %p184
      %p186 = scmp.ne.s32.totalorder %s178, %s180
      %p187 = scmp.eq.s32.totalorder %s23, 1
      %p188 = por %p186, %p187
      %p189 = scmp.ne.s32.totalorder %s180, %s181
      %p190 = scmp.eq.s32.totalorder %s23, 0
      %p191 = por %p189, %p190
      %p192 = scmp.ne.s32.totalorder %s180, %s181
      %p193 = scmp.eq.s32.totalorder %s24, 1
      %p194 = por %p192, %p193
      %p196 = scmp.ne.s32.totalorder %s181, %s195
      %p197 = scmp.eq.s32.totalorder %s24, 0
      %p198 = por %p196, %p197
      %s200 = sadd.s32 %s199, 1
      %p203 = scmp.eq.s32.totalorder %s18, 1
      %p204 = scmp.ne.s32.totalorder %s199, %s201
      %p205 = scmp.eq.s32.totalorder %s18, 0
      %p206 = por %p204, %p205
      %p207 = scmp.ne.s32.totalorder %s199, %s201
      %p208 = scmp.eq.s32.totalorder %s23, 1
      %p209 = por %p207, %p208
      %p210 = scmp.ne.s32.totalorder %s201, %s202
      %p211 = scmp.eq.s32.totalorder %s23, 0
      %p212 = por %p210, %p211
      %p213 = scmp.ne.s32.totalorder %s201, %s202
      %p214 = scmp.eq.s32.totalorder %s24, 1
      %p215 = por %p213, %p214
      %p217 = scmp.ne.s32.totalorder %s202, %s216
      %p218 = scmp.eq.s32.totalorder %s24, 0
      %p219 = por %p217, %p218
      %s220 = ssub.s32 %s18, %s25
      %p221 = scmp.eq.s32.totalorder %s220, 0
      %s223 = sadd.s32 %s222, 1
      %s224 = scalar_select %p221, %s222, %s223
      %p227 = pneg %p221
      %p228 = scmp.eq.s32.totalorder %s18, 1
      %p229 = por %p227, %p228
      %p230 = scmp.ne.s32.totalorder %s222, %s225
      %p231 = scmp.eq.s32.totalorder %s18, 0
      %p232 = por %p230, %p231
      %p233 = scmp.ne.s32.totalorder %s222, %s225
      %p234 = scmp.eq.s32.totalorder %s23, 1
      %p235 = por %p233, %p234
      %p236 = scmp.ne.s32.totalorder %s225, %s226
      %p237 = scmp.eq.s32.totalorder %s23, 0
      %p238 = por %p236, %p237
      %p239 = scmp.ne.s32.totalorder %s225, %s226
      %p240 = scmp.eq.s32.totalorder %s24, 1
      %p241 = por %p239, %p240
      %p243 = scmp.ne.s32.totalorder %s226, %s242
      %p244 = scmp.eq.s32.totalorder %s24, 0
      %p245 = por %p243, %p244
      %p246 = scmp.le.s32.totalorder 1, %s18
      %p247 = scmp.lt.s32.totalorder %s18, 3
      %p248 = pnand %p246, %p247
      %p249 = pneg %p248
      // Predicated region
      $region9: #{tpu_custom_call.1} parent=5 // pred_check
        _
      $region10: #{tpu_custom_call.1} parent=5 // pred_check_branch
        %251 = sbr.rel (%p248) target = $region12
      $region11: #{tpu_custom_call.1} parent=5 // pred_region
        %s252 = ssub.s32 %s18, 1
        // Predicated region
        $region13: #{tpu_custom_call.1} parent=11 // pred_check
          %p253 = pneg %p65
        $region14: #{tpu_custom_call.1} parent=11 // pred_check_branch
          %255 = sbr.rel (%p253) target = $region16
        $region15: #{tpu_custom_call.1} parent=11 // pred_region
          _
        $region16: #{tpu_custom_call.1} parent=11 // pred_fallthru
          _
        // Predicated region
        $region17: #{tpu_custom_call.1} parent=11 // pred_check
          %p256 = pneg %p86
        $region18: #{tpu_custom_call.1} parent=11 // pred_check_branch
          %258 = sbr.rel (%p256) target = $region20
        $region19: #{tpu_custom_call.1} parent=11 // pred_region
          _
        $region20: #{tpu_custom_call.1} parent=11 // pred_fallthru
          _
        // Predicated region
        $region21: #{tpu_custom_call.1} parent=11 // pred_check
          %p259 = pneg %p107
        $region22: #{tpu_custom_call.1} parent=11 // pred_check_branch
          %261 = sbr.rel (%p259) target = $region24
        $region23: #{tpu_custom_call.1} parent=11 // pred_region
          _
        $region24: #{tpu_custom_call.1} parent=11 // pred_fallthru
          _
        // Predicated region
        $region25: #{tpu_custom_call.1} parent=11 // pred_check
          %p262 = pneg %p128
        $region26: #{tpu_custom_call.1} parent=11 // pred_check_branch
          %264 = sbr.rel (%p262) target = $region28
        $region27: #{tpu_custom_call.1} parent=11 // pred_region
          _
        $region28: #{tpu_custom_call.1} parent=11 // pred_fallthru
          _
        // Predicated region
        $region29: #{tpu_custom_call.1} parent=11 // pred_check
          %p265 = pneg %p149
        $region30: #{tpu_custom_call.1} parent=11 // pred_check_branch
          %267 = sbr.rel (%p265) target = $region32
        $region31: #{tpu_custom_call.1} parent=11 // pred_region
          _
        $region32: #{tpu_custom_call.1} parent=11 // pred_fallthru
          _
        // Predicated region
        $region33: #{tpu_custom_call.1} parent=11 // pred_check
          %p268 = pneg %p170
        $region34: #{tpu_custom_call.1} parent=11 // pred_check_branch
          %270 = sbr.rel (%p268) target = $region36
        $region35: #{tpu_custom_call.1} parent=11 // pred_region
          _
        $region36: #{tpu_custom_call.1} parent=11 // pred_fallthru
          _
        // Predicated region
        $region37: #{tpu_custom_call.1} parent=11 // pred_check
          %p271 = pneg %p191
        $region38: #{tpu_custom_call.1} parent=11 // pred_check_branch
          %273 = sbr.rel (%p271) target = $region40
        $region39: #{tpu_custom_call.1} parent=11 // pred_region
          _
        $region40: #{tpu_custom_call.1} parent=11 // pred_fallthru
          _
        // Predicated region
        $region41: #{tpu_custom_call.1} parent=11 // pred_check
          %p274 = pneg %p212
        $region42: #{tpu_custom_call.1} parent=11 // pred_check_branch
          %276 = sbr.rel (%p274) target = $region44
        $region43: #{tpu_custom_call.1} parent=11 // pred_region
          _
        $region44: #{tpu_custom_call.1} parent=11 // pred_fallthru
          _
      $region12: #{tpu_custom_call.1} parent=5 // pred_fallthru
        _
      %p277 = scmp.lt.s32.totalorder %s18, 2
      // Predicated region
      $region45: #{tpu_custom_call.1} parent=5 // pred_check
        %p278 = pneg %p277
      $region46: #{tpu_custom_call.1} parent=5 // pred_check_branch
        %280 = sbr.rel (%p278) target = $region48
      $region47: #{tpu_custom_call.1} parent=5 // pred_region
        // Predicated region
        $region49: #{tpu_custom_call.1} parent=47 // pred_check
          %p281 = pneg %p38
        $region50: #{tpu_custom_call.1} parent=47 // pred_check_branch
          %283 = sbr.rel (%p281) target = $region52
        $region51: #{tpu_custom_call.1} parent=47 // pred_region
          %p284 = scmp.lt.s32.totalorder %s18, 1
          %s285 = scalar_select %p284, %s18, 1
          %s286 = smul.addr %s285, 20
          %s287 = smul.addr %s286, 4
          %s288 = scalar_lea.vmem %s0, %s287
        $region52: #{tpu_custom_call.1} parent=47 // pred_fallthru
          _
      $region48: #{tpu_custom_call.1} parent=5 // pred_fallthru
        _
      %p289 = scmp.le.s32.totalorder 1, %s18
      %p290 = scmp.lt.s32.totalorder %s18, 3
      %p291 = pnand %p289, %p290
      %p292 = pneg %p291
      // Predicated region
      $region53: #{tpu_custom_call.1} parent=5 // pred_check
        _
      $region54: #{tpu_custom_call.1} parent=5 // pred_check_branch
        %294 = sbr.rel (%p291) target = $region56
      $region55: #{tpu_custom_call.1} parent=5 // pred_region
        %s295 = ssub.s32 %s18, 1
        %p296 = scmp.lt.s32.totalorder %s23, 1
        %s297 = scalar_select %p296, %s23, 1
        %s298 = smul.addr %s297, 20
        %s299 = smul.addr %s298, 4
        %s300 = scalar_lea.vmem %s0, %s299
        %p301 = pneg %p44
        %p302 = pneg %p41
        %p303 = pneg %p65
        %p304 = pneg %p62
        %p305 = pneg %p86
        %p306 = pneg %p83
        %p307 = pneg %p107
        %p308 = pneg %p104
        %p309 = pneg %p128
        %p310 = pneg %p125
        %p311 = pneg %p149
        %p312 = pneg %p146
        %p313 = pneg %p170
        %p314 = pneg %p167
        %p315 = pneg %p191
        %p316 = pneg %p188
        %p317 = pneg %p212
        %p318 = pneg %p209
        %p319 = pneg %p238
        %p320 = pneg %p235
        %s321 = sand.u32 %s225, 1
        %s322 = scalar_lea.sflag [#allocation4], %s321
        %s323 = sand.u32 %s225, 1
        %s324 = smul.addr %s323, 32
        %s325 = scalar_lea.vmem [#allocation3], %s324
        %p326 = scmp.lt.s32.totalorder %s23, 1
        %s327 = scalar_select %p326, %s23, 1
        %s328 = smul.addr %s327, 20
        %s329 = smul.addr %s328, 4
        %s330 = scalar_lea.vmem %s0, %s329
        %v332 = vld [vmem:[%s330] sm:$0xf]
        %v333 = vld [vmem:[%s330 + $0x4] sm:$0x1]
        %v334 = vld [vmem:[%s330 + $0x8] sm:$0xf]
        %v335 = vld [vmem:[%s330 + $0xc] sm:$0x1]
        %v336 = vld [vmem:[%s330 + $0x10] sm:$0xf]
        %v337 = vld [vmem:[%s330 + $0x14] sm:$0x1]
        %v338 = vld [vmem:[%s330 + $0x18] sm:$0xf]
        %v339 = vld [vmem:[%s330 + $0x1c] sm:$0x1]
        %v340 = vld [vmem:[%s330 + $0x20] sm:$0xf]
        %v341 = vld [vmem:[%s330 + $0x24] sm:$0x1]
        %v342 = vld [vmem:[%s330 + $0x28] sm:$0xf]
        %v343 = vld [vmem:[%s330 + $0x2c] sm:$0x1]
        %v344 = vld [vmem:[%s330 + $0x30] sm:$0xf]
        %v345 = vld [vmem:[%s330 + $0x34] sm:$0x1]
        %v346 = vld [vmem:[%s330 + $0x38] sm:$0xf]
        %v347 = vld [vmem:[%s330 + $0x3c] sm:$0x1]
        %v348 = vld [vmem:[%s330 + $0x40] sm:$0xf]
        %v349 = vld [vmem:[%s330 + $0x44] sm:$0x1]
        %v350 = vld [vmem:[%s330 + $0x48] sm:$0xf]
        %v351 = vld [vmem:[%s330 + $0x4c] sm:$0x1]
        %vm352 = vcmask 125952
        %353 = vst.msk [vmem:[#allocation2] sm:$0xf] %vm352, 0
        %vm354 = vcmask 122880
        %355 = vst.msk [vmem:[#allocation2 + $0x4] sm:$0x1] %vm354, 0
        %356 = vst.msk [vmem:[#allocation2 + $0x8] sm:$0xf] %vm352, 0
        %357 = vst.msk [vmem:[#allocation2 + $0xc] sm:$0x1] %vm354, 0
        %358 = vst.msk [vmem:[#allocation2 + $0x10] sm:$0xf] %vm352, 0
        %359 = vst.msk [vmem:[#allocation2 + $0x14] sm:$0x1] %vm354, 0
        %360 = vst.msk [vmem:[#allocation2 + $0x18] sm:$0xf] %vm352, 0
        %361 = vst.msk [vmem:[#allocation2 + $0x1c] sm:$0x1] %vm354, 0
        %362 = vst.msk [vmem:[#allocation2 + $0x20] sm:$0xf] %vm352, 0
        %363 = vst.msk [vmem:[#allocation2 + $0x24] sm:$0x1] %vm354, 0
        %364 = vst.msk [vmem:[#allocation2 + $0x28] sm:$0xf] %vm352, 0
        %365 = vst.msk [vmem:[#allocation2 + $0x2c] sm:$0x1] %vm354, 0
        %366 = vst.msk [vmem:[#allocation2 + $0x30] sm:$0xf] %vm352, 0
        %367 = vst.msk [vmem:[#allocation2 + $0x34] sm:$0x1] %vm354, 0
        %368 = vst.msk [vmem:[#allocation2 + $0x38] sm:$0xf] %vm352, 0
        %369 = vst.msk [vmem:[#allocation2 + $0x3c] sm:$0x1] %vm354, 0
        %370 = vst.msk [vmem:[#allocation2 + $0x40] sm:$0xf] %vm352, 0
        %371 = vst.msk [vmem:[#allocation2 + $0x44] sm:$0x1] %vm354, 0
        %372 = vst.msk [vmem:[#allocation2 + $0x48] sm:$0xf] %vm352, 0
        %373 = vst.msk [vmem:[#allocation2 + $0x4c] sm:$0x1] %vm354, 0
        %vm374 = vsmask.f32 3328
        %vm375 = vsmask.f32 7440
        %vm376 = vmor %vm374, %vm375
        %v378 = vshrl.u32 %v332, 16
        %v380 = vrot.slane %v378, 4
        %v381 = vshll.u32 %v332, 16
        %v383 = vrot.slane %v381, 5
        %v384 = vor.u32 %v380, %v383
        %v385 = vrot.slane %v384, 4
        %v387 = vshll.u32 %v333, 16
        %v389 = vrot.slane %v387, 5
        %v390 = vsel %vm376, %v385, %v389
        %v392 = vshrl.u32 %v334, 16
        %v394 = vrot.slane %v392, 4
        %v395 = vshll.u32 %v334, 16
        %v397 = vrot.slane %v395, 5
        %v398 = vor.u32 %v394, %v397
        %v399 = vrot.slane %v398, 4
        %v401 = vshll.u32 %v335, 16
        %v403 = vrot.slane %v401, 5
        %v404 = vsel %vm376, %v399, %v403
        %v406 = vshrl.u32 %v336, 16
        %v408 = vrot.slane %v406, 4
        %v409 = vshll.u32 %v336, 16
        %v411 = vrot.slane %v409, 5
        %v412 = vor.u32 %v408, %v411
        %v413 = vrot.slane %v412, 4
        %v415 = vshll.u32 %v337, 16
        %v417 = vrot.slane %v415, 5
        %v418 = vsel %vm376, %v413, %v417
        %v420 = vshrl.u32 %v338, 16
        %v422 = vrot.slane %v420, 4
        %v423 = vshll.u32 %v338, 16
        %v425 = vrot.slane %v423, 5
        %v426 = vor.u32 %v422, %v425
        %v427 = vrot.slane %v426, 4
        %v429 = vshll.u32 %v339, 16
        %v431 = vrot.slane %v429, 5
        %v432 = vsel %vm376, %v427, %v431
        %v434 = vshrl.u32 %v340, 16
        %v436 = vrot.slane %v434, 4
        %v437 = vshll.u32 %v340, 16
        %v439 = vrot.slane %v437, 5
        %v440 = vor.u32 %v436, %v439
        %v441 = vrot.slane %v440, 4
        %v443 = vshll.u32 %v341, 16
        %v445 = vrot.slane %v443, 5
        %v446 = vsel %vm376, %v441, %v445
        %v448 = vshrl.u32 %v342, 16
        %v450 = vrot.slane %v448, 4
        %v451 = vshll.u32 %v342, 16
        %v453 = vrot.slane %v451, 5
        %v454 = vor.u32 %v450, %v453
        %v455 = vrot.slane %v454, 4
        %v457 = vshll.u32 %v343, 16
        %v459 = vrot.slane %v457, 5
        %v460 = vsel %vm376, %v455, %v459
        %v462 = vshrl.u32 %v344, 16
        %v464 = vrot.slane %v462, 4
        %v465 = vshll.u32 %v344, 16
        %v467 = vrot.slane %v465, 5
        %v468 = vor.u32 %v464, %v467
        %v469 = vrot.slane %v468, 4
        %v471 = vshll.u32 %v345, 16
        %v473 = vrot.slane %v471, 5
        %v474 = vsel %vm376, %v469, %v473
        %v476 = vshrl.u32 %v346, 16
        %v478 = vrot.slane %v476, 4
        %v479 = vshll.u32 %v346, 16
        %v481 = vrot.slane %v479, 5
        %v482 = vor.u32 %v478, %v481
        %v483 = vrot.slane %v482, 4
        %v485 = vshll.u32 %v347, 16
        %v487 = vrot.slane %v485, 5
        %v488 = vsel %vm376, %v483, %v487
        %vm505 = vcmask 1042432
        %vm506 = vcmask 1046532
        %vm507 = vmor %vm505, %vm506
        %v508 = vrot.slane %v332, 5
        %v509 = vrot.slane %v508, 4
        %v510 = vrot.slane %v333, 5
        %v511 = vsel %vm507, %v509, %v510
        %v512 = vrot.slane %v334, 5
        %v513 = vrot.slane %v512, 4
        %v514 = vrot.slane %v335, 5
        %v515 = vsel %vm507, %v513, %v514
        %v516 = vrot.slane %v336, 5
        %v517 = vrot.slane %v516, 4
        %v518 = vrot.slane %v337, 5
        %v519 = vsel %vm507, %v517, %v518
        %v520 = vrot.slane %v338, 5
        %v521 = vrot.slane %v520, 4
        %v522 = vrot.slane %v339, 5
        %v523 = vsel %vm507, %v521, %v522
        %v524 = vrot.slane %v340, 5
        %v525 = vrot.slane %v524, 4
        %v526 = vrot.slane %v341, 5
        %v527 = vsel %vm507, %v525, %v526
        %v528 = vrot.slane %v342, 5
        %v529 = vrot.slane %v528, 4
        %v530 = vrot.slane %v343, 5
        %v531 = vsel %vm507, %v529, %v530
        %v532 = vrot.slane %v344, 5
        %v533 = vrot.slane %v532, 4
        %v534 = vrot.slane %v345, 5
        %v535 = vsel %vm507, %v533, %v534
        %v536 = vrot.slane %v346, 5
        %v537 = vrot.slane %v536, 4
        %v538 = vrot.slane %v347, 5
        %v539 = vsel %vm507, %v537, %v538
        %v541 = vshrl.u32 %v348, 16
        %v543 = vrot.slane %v541, 4
        %v544 = vshll.u32 %v348, 16
        %v546 = vrot.slane %v544, 5
        %v547 = vor.u32 %v543, %v546
        %v548 = vrot.slane %v547, 4
        %v550 = vshll.u32 %v349, 16
        %v552 = vrot.slane %v550, 5
        %v553 = vsel %vm376, %v548, %v552
        %v556 = vrot.slane %v348, 5
        %v557 = vrot.slane %v556, 4
        %v558 = vrot.slane %v349, 5
        %v559 = vsel %vm507, %v557, %v558
        %v561 = vshrl.u32 %v350, 16
        %v563 = vrot.slane %v561, 4
        %v564 = vshll.u32 %v350, 16
        %v566 = vrot.slane %v564, 5
        %v567 = vor.u32 %v563, %v566
        %v568 = vrot.slane %v567, 4
        %v570 = vshll.u32 %v351, 16
        %v572 = vrot.slane %v570, 5
        %v573 = vsel %vm376, %v568, %v572
        %v576 = vrot.slane %v350, 5
        %v577 = vrot.slane %v576, 4
        %v578 = vrot.slane %v351, 5
        %v579 = vsel %vm507, %v577, %v578
        %v580 = vunpack.c.l.b16 %v332
        %v581 = vunpack.c.l.b16 %v334
        %v582 = vunpack.c.l.b16 %v336
        %v583 = vunpack.c.l.b16 %v338
        %v584 = vunpack.c.l.b16 %v340
        %v585 = vunpack.c.l.b16 %v342
        %v586 = vunpack.c.l.b16 %v344
        %v587 = vunpack.c.l.b16 %v346
        %v588 = vpack.c.b16 %v581, %v580
        %v589 = vpack.c.b16 %v583, %v582
        %v590 = vpack.c.b16 %v585, %v584
        %v591 = vpack.c.b16 %v587, %v586
        %v592 = vunpack.c.l.b16 %v390
        %v593 = vunpack.c.l.b16 %v404
        %v594 = vunpack.c.l.b16 %v418
        %v595 = vunpack.c.l.b16 %v432
        %v596 = vunpack.c.l.b16 %v446
        %v597 = vunpack.c.l.b16 %v460
        %v598 = vunpack.c.l.b16 %v474
        %v599 = vunpack.c.l.b16 %v488
        %v600 = vpack.c.b16 %v593, %v592
        %v601 = vpack.c.b16 %v595, %v594
        %v602 = vpack.c.b16 %v597, %v596
        %v603 = vpack.c.b16 %v599, %v598
        %604 = vrot.lane.b32.xlu0 %v600, 3
        %v605 = vpop.permute.xlu0 %604
        %606 = vrot.lane.b32.xlu0 %v601, 3
        %v607 = vpop.permute.xlu0 %606
        %608 = vrot.lane.b32.xlu0 %v602, 3
        %v609 = vpop.permute.xlu0 %608
        %610 = vrot.lane.b32.xlu0 %v603, 3
        %v611 = vpop.permute.xlu0 %610
        %v612 = vunpack.c.l.b16 %v511
        %v613 = vunpack.c.l.b16 %v515
        %v614 = vunpack.c.l.b16 %v519
        %v615 = vunpack.c.l.b16 %v523
        %v616 = vunpack.c.l.b16 %v527
        %v617 = vunpack.c.l.b16 %v531
        %v618 = vunpack.c.l.b16 %v535
        %v619 = vunpack.c.l.b16 %v539
        %v620 = vpack.c.b16 %v613, %v612
        %v621 = vpack.c.b16 %v615, %v614
        %v622 = vpack.c.b16 %v617, %v616
        %v623 = vpack.c.b16 %v619, %v618
        %624 = vrot.lane.b32.xlu0 %v620, 6
        %v625 = vpop.permute.xlu0 %624
        %626 = vrot.lane.b32.xlu0 %v621, 6
        %v627 = vpop.permute.xlu0 %626
        %628 = vrot.lane.b32.xlu0 %v622, 6
        %v629 = vpop.permute.xlu0 %628
        %630 = vrot.lane.b32.xlu0 %v623, 6
        %v631 = vpop.permute.xlu0 %630
        %v632 = vunpack.c.l.b16 %v348
        %v633 = vpack.c.b16 %v582, %v581
        %v634 = vpack.c.b16 %v584, %v583
        %v635 = vpack.c.b16 %v586, %v585
        %v636 = vpack.c.b16 %v632, %v587
        %637 = vrot.lane.b32.xlu0 %v633, 9
        %v638 = vpop.permute.xlu0 %637
        %639 = vrot.lane.b32.xlu0 %v634, 9
        %v640 = vpop.permute.xlu0 %639
        %641 = vrot.lane.b32.xlu0 %v635, 9
        %v642 = vpop.permute.xlu0 %641
        %643 = vrot.lane.b32.xlu0 %v636, 9
        %v644 = vpop.permute.xlu0 %643
        %v645 = vunpack.c.l.b16 %v553
        %v646 = vpack.c.b16 %v594, %v593
        %v647 = vpack.c.b16 %v596, %v595
        %v648 = vpack.c.b16 %v598, %v597
        %v649 = vpack.c.b16 %v645, %v599
        %650 = vrot.lane.b32.xlu0 %v646, 12
        %v651 = vpop.permute.xlu0 %650
        %652 = vrot.lane.b32.xlu0 %v647, 12
        %v653 = vpop.permute.xlu0 %652
        %654 = vrot.lane.b32.xlu0 %v648, 12
        %v655 = vpop.permute.xlu0 %654
        %656 = vrot.lane.b32.xlu0 %v649, 12
        %v657 = vpop.permute.xlu0 %656
        %v658 = vunpack.c.l.b16 %v559
        %v659 = vpack.c.b16 %v614, %v613
        %v660 = vpack.c.b16 %v616, %v615
        %v661 = vpack.c.b16 %v618, %v617
        %v662 = vpack.c.b16 %v658, %v619
        %663 = vrot.lane.b32.xlu0 %v659, 15
        %v664 = vpop.permute.xlu0 %663
        %665 = vrot.lane.b32.xlu0 %v660, 15
        %v666 = vpop.permute.xlu0 %665
        %667 = vrot.lane.b32.xlu0 %v661, 15
        %v668 = vpop.permute.xlu0 %667
        %669 = vrot.lane.b32.xlu0 %v662, 15
        %v670 = vpop.permute.xlu0 %669
        %v671 = vunpack.c.l.b16 %v350
        %v672 = vpack.c.b16 %v671, %v632
        %673 = vrot.lane.b32.xlu0 %v589, 18
        %v674 = vpop.permute.xlu0 %673
        %675 = vrot.lane.b32.xlu0 %v590, 18
        %v676 = vpop.permute.xlu0 %675
        %677 = vrot.lane.b32.xlu0 %v591, 18
        %v678 = vpop.permute.xlu0 %677
        %679 = vrot.lane.b32.xlu0 %v672, 18
        %v680 = vpop.permute.xlu0 %679
        %v681 = vunpack.c.l.b16 %v573
        %v682 = vpack.c.b16 %v681, %v645
        %683 = vrot.lane.b32.xlu0 %v601, 21
        %v684 = vpop.permute.xlu0 %683
        %685 = vrot.lane.b32.xlu0 %v602, 21
        %v686 = vpop.permute.xlu0 %685
        %687 = vrot.lane.b32.xlu0 %v603, 21
        %v688 = vpop.permute.xlu0 %687
        %689 = vrot.lane.b32.xlu0 %v682, 21
        %v690 = vpop.permute.xlu0 %689
        %v691 = vunpack.c.l.b16 %v579
        %v692 = vpack.c.b16 %v691, %v658
        %693 = vrot.lane.b32.xlu0 %v621, 24
        %v694 = vpop.permute.xlu0 %693
        %695 = vrot.lane.b32.xlu0 %v622, 24
        %v696 = vpop.permute.xlu0 %695
        %697 = vrot.lane.b32.xlu0 %v623, 24
        %v698 = vpop.permute.xlu0 %697
        %699 = vrot.lane.b32.xlu0 %v692, 24
        %v700 = vpop.permute.xlu0 %699
        %vm701 = vcmask 23552
        %v704 = vsel %vm701, %v588, %v605
        %v707 = vsel %vm701, %v589, %v607
        %v710 = vsel %vm701, %v590, %v609
        %v713 = vsel %vm701, %v591, %v611
        %vm714 = vcmask 48128
        %v716 = vsel %vm714, %v704, %v625
        %v718 = vsel %vm714, %v707, %v627
        %v720 = vsel %vm714, %v710, %v629
        %v722 = vsel %vm714, %v713, %v631
        %vm723 = vcmask 72704
        %v725 = vsel %vm723, %v716, %v638
        %v727 = vsel %vm723, %v718, %v640
        %v729 = vsel %vm723, %v720, %v642
        %v731 = vsel %vm723, %v722, %v644
        %vm732 = vcmask 97280
        %v734 = vsel %vm732, %v725, %v651
        %v736 = vsel %vm732, %v727, %v653
        %v738 = vsel %vm732, %v729, %v655
        %v740 = vsel %vm732, %v731, %v657
        %vm741 = vcmask 121856
        %v743 = vsel %vm741, %v734, %v664
        %v745 = vsel %vm741, %v736, %v666
        %v747 = vsel %vm741, %v738, %v668
        %v749 = vsel %vm741, %v740, %v670
        %vm750 = vcmask 146432
        %v752 = vsel %vm750, %v743, %v674
        %v754 = vsel %vm750, %v745, %v676
        %v756 = vsel %vm750, %v747, %v678
        %v758 = vsel %vm750, %v749, %v680
        %vm759 = vcmask 171008
        %v761 = vsel %vm759, %v752, %v684
        %v763 = vsel %vm759, %v754, %v686
        %v765 = vsel %vm759, %v756, %v688
        %v767 = vsel %vm759, %v758, %v690
        %vm768 = vcmask 195584
        %v770 = vsel %vm768, %v761, %v694
        %v772 = vsel %vm768, %v763, %v696
        %v774 = vsel %vm768, %v765, %v698
        %v776 = vsel %vm768, %v767, %v700
        %v777 = vld [vmem:[%s1] sm:$0xf]
        %v778 = vld [vmem:[%s1 + $0x4] sm:$0xf]
        %v779 = vld [vmem:[%s1 + $0x8] sm:$0xf]
        %v780 = vld [vmem:[%s1 + $0xc] sm:$0x3]
        %v781 = vld [vmem:[%s2] sm:$0x1]
        %v783 = vlaneseq
        %v784 = vshrl.u32 %v783, 7
        %v785 = vsub.s32 0, %v784
        %v786 = vrot.slane %v781, %v785
        %v792 = vunpack.c.l.b16 %v777
        %v793 = vunpack.c.l.b16 %v778
        %v794 = vunpack.c.l.b16 %v779
        %v795 = vunpack.c.l.b16 %v780
        %v796 = vpack.c.b16 %v793, %v792
        %v797 = vpack.c.b16 %v795, %v794
        %vm799 = vcmask 220160
        %v800 = vsel %vm799, %v770, 0
        %v802 = vsel %vm799, %v772, 0
        %v804 = vsel %vm799, %v774, 0
        %v806 = vsel %vm799, %v776, 0
        %vm808 = vcmask 1044480
        %vm809 = vcmask 1045504
        %v810 = vsel %vm808, 4294967295, 65535
        %v811 = vsel %vm809, %v810, 0
        %v813 = vand.u32 %v797, %v811
        %815 = vmatprep.subr.bf16.mxu0 0
        %816 = vmatpush1.bf16.msra.mxu0 0
        %817 = vmatprep.subr.bf16.mxu0 0
        %818 = vmatpush1.bf16.msra.mxu0 0
        %819 = vmatprep.subr.bf16.mxu0 0
        %820 = vmatpush1.bf16.msra.mxu0 0
        %821 = vmatprep.subr.bf16.mxu0 0
        %822 = vmatpush1.bf16.msra.mxu0 0
        %823 = vmatprep.subr.bf16.mxu0 0
        %824 = vmatpush1.bf16.msra.mxu0 0
        %825 = vmatprep.subr.bf16.mxu0 0
        %826 = vmatpush1.bf16.msra.mxu0 0
        %827 = vmatprep.subr.bf16.mxu0 0
        %828 = vmatpush1.bf16.msra.mxu0 %v813
        %829 = vmatprep.subr.bf16.mxu0 0
        %830 = vmatpush1.bf16.msra.mxu0 %v796
        %831 = vmatprep.subr.bf16.mxu0 0
        %832 = vmatpush2.bf16.msra.mxu0 0
        %833 = vmatprep.subr.bf16.mxu0 0
        %834 = vmatpush2.bf16.msra.mxu0 0
        %835 = vmatprep.subr.bf16.mxu0 0
        %836 = vmatpush2.bf16.msra.mxu0 0
        %837 = vmatprep.subr.bf16.mxu0 0
        %838 = vmatpush2.bf16.msra.mxu0 0
        %839 = vmatprep.subr.bf16.mxu0 0
        %840 = vmatpush2.bf16.msra.mxu0 0
        %841 = vmatprep.subr.bf16.mxu0 0
        %842 = vmatpush2.bf16.msra.mxu0 0
        %843 = vmatprep.subr.bf16.mxu0 0
        %844 = vmatpush2.bf16.msra.mxu0 0
        %845 = vmatprep.subr.bf16.mxu0 0
        %846 = vmatpush2.bf16.msra.mxu0 0
        %847 = vmatprep.mubr.bf16.mxu0 0
        %848 = vmatmul.mubr.bf16.gmra.mxu0 %v800
        %v849 = vpop.f32.mrf.mxu0
        %v850 = vadd.f32 %v786, %v849
        %v851 = vpop.f32.mrf.mxu0
        %v852 = vpop.f32.mrf.mxu0
        %v853 = vadd.f32 %v786, %v852
        %v854 = vpop.f32.mrf.mxu0
        %855 = vmatprep.mubr.bf16.mxu0 0
        %856 = vmatmul.mubr.bf16.gmra.mxu0 %v802
        %v857 = vpop.f32.mrf.mxu0
        %v858 = vadd.f32 %v786, %v857
        %v859 = vpop.f32.mrf.mxu0
        %v860 = vpop.f32.mrf.mxu0
        %v861 = vadd.f32 %v786, %v860
        %v862 = vpop.f32.mrf.mxu0
        %863 = vmatprep.mubr.bf16.mxu0 0
        %864 = vmatmul.mubr.bf16.gmra.mxu0 %v804
        %v865 = vpop.f32.mrf.mxu0
        %v866 = vadd.f32 %v786, %v865
        %v867 = vpop.f32.mrf.mxu0
        %v868 = vpop.f32.mrf.mxu0
        %v869 = vadd.f32 %v786, %v868
        %v870 = vpop.f32.mrf.mxu0
        %871 = vmatprep.mubr.bf16.mxu0 0
        %872 = vmatmul.mubr.bf16.gmra.mxu0 %v806
        %v873 = vpop.f32.mrf.mxu0
        %v874 = vadd.f32 %v786, %v873
        %v875 = vpop.f32.mrf.mxu0
        %v876 = vpop.f32.mrf.mxu0
        %v877 = vadd.f32 %v786, %v876
        %v878 = vpop.f32.mrf.mxu0
        %879 = vdwg.mxu0
        %v880 = vpack.c.bf16 %v850, %v850
        %v881 = vpack.c.bf16 %v853, %v853
        %v882 = vpack.c.bf16 %v858, %v858
        %v883 = vpack.c.bf16 %v861, %v861
        %v884 = vpack.c.bf16 %v866, %v866
        %v885 = vpack.c.bf16 %v869, %v869
        %v886 = vpack.c.bf16 %v874, %v874
        %v887 = vpack.c.bf16 %v877, %v877
        %v896 = vunpack.c.l.b16 %v880
        %v897 = vunpack.c.l.b16 %v881
        %v898 = vunpack.c.l.b16 %v882
        %v899 = vunpack.c.l.b16 %v883
        %v900 = vunpack.c.l.b16 %v884
        %v901 = vunpack.c.l.b16 %v885
        %v902 = vunpack.c.l.b16 %v886
        %v903 = vunpack.c.l.b16 %v887
        %v904 = vpack.c.b16 %v896, %v896
        %v905 = vpack.c.b16 %v897, %v897
        %v906 = vpack.c.b16 %v898, %v898
        %v907 = vpack.c.b16 %v899, %v899
        %v908 = vpack.c.b16 %v900, %v900
        %v909 = vpack.c.b16 %v901, %v901
        %v910 = vpack.c.b16 %v902, %v902
        %v911 = vpack.c.b16 %v903, %v903
        %v913 = vshrl.u32 %v904, 16
        %v915 = vrot.slane %v913, 7
        %v916 = vshll.u32 %v904, 16
        %v918 = vor.u32 %v915, %v916
        %v919 = vrot.slane %v915, 4
        %v921 = vshrl.u32 %v905, 16
        %v923 = vrot.slane %v921, 7
        %v924 = vshll.u32 %v905, 16
        %v926 = vor.u32 %v923, %v924
        %v927 = vrot.slane %v923, 4
        %v929 = vshrl.u32 %v906, 16
        %v931 = vrot.slane %v929, 7
        %v932 = vshll.u32 %v906, 16
        %v934 = vor.u32 %v931, %v932
        %v935 = vrot.slane %v931, 4
        %v937 = vshrl.u32 %v907, 16
        %v939 = vrot.slane %v937, 7
        %v940 = vshll.u32 %v907, 16
        %v942 = vor.u32 %v939, %v940
        %v943 = vrot.slane %v939, 4
        %v945 = vshrl.u32 %v908, 16
        %v947 = vrot.slane %v945, 7
        %v948 = vshll.u32 %v908, 16
        %v950 = vor.u32 %v947, %v948
        %v951 = vrot.slane %v947, 4
        %v953 = vshrl.u32 %v909, 16
        %v955 = vrot.slane %v953, 7
        %v956 = vshll.u32 %v909, 16
        %v958 = vor.u32 %v955, %v956
        %v959 = vrot.slane %v955, 4
        %v961 = vshrl.u32 %v910, 16
        %v963 = vrot.slane %v961, 7
        %v964 = vshll.u32 %v910, 16
        %v966 = vor.u32 %v963, %v964
        %v967 = vrot.slane %v963, 4
        %v969 = vshrl.u32 %v911, 16
        %v971 = vrot.slane %v969, 7
        %v972 = vshll.u32 %v911, 16
        %v974 = vor.u32 %v971, %v972
        %v975 = vrot.slane %v971, 4
        %s992 = scalar_lea.vmem [#allocation2], 8
        %vm993 = vcmask 125952
        %vm994 = vsmask.f32 7938
        %vm995 = vmand %vm993, %vm994
        %v996 = vld [vmem:[%s992] sm:$0xf]
        %v997 = vsel %vm995, %v918, %v996
        %998 = vst [vmem:[%s992] sm:$0xf] %v997
        %vm999 = vcmask 122880
        %vm1000 = vsmask.f32 256
        %vm1001 = vmand %vm999, %vm1000
        %v1002 = vld [vmem:[%s992 + $0x4] sm:$0x1]
        %v1003 = vsel %vm1001, %v919, %v1002
        %1004 = vst [vmem:[%s992 + $0x4] sm:$0x1] %v1003
        %v1005 = vld [vmem:[%s992 + $0x8] sm:$0xf]
        %v1006 = vsel %vm995, %v926, %v1005
        %1007 = vst [vmem:[%s992 + $0x8] sm:$0xf] %v1006
        %v1008 = vld [vmem:[%s992 + $0xc] sm:$0x1]
        %v1009 = vsel %vm1001, %v927, %v1008
        %1010 = vst [vmem:[%s992 + $0xc] sm:$0x1] %v1009
        %v1011 = vld [vmem:[%s992 + $0x10] sm:$0xf]
        %v1012 = vsel %vm995, %v934, %v1011
        %1013 = vst [vmem:[%s992 + $0x10] sm:$0xf] %v1012
        %v1014 = vld [vmem:[%s992 + $0x14] sm:$0x1]
        %v1015 = vsel %vm1001, %v935, %v1014
        %1016 = vst [vmem:[%s992 + $0x14] sm:$0x1] %v1015
        %v1017 = vld [vmem:[%s992 + $0x18] sm:$0xf]
        %v1018 = vsel %vm995, %v942, %v1017
        %1019 = vst [vmem:[%s992 + $0x18] sm:$0xf] %v1018
        %v1020 = vld [vmem:[%s992 + $0x1c] sm:$0x1]
        %v1021 = vsel %vm1001, %v943, %v1020
        %1022 = vst [vmem:[%s992 + $0x1c] sm:$0x1] %v1021
        %v1023 = vld [vmem:[%s992 + $0x20] sm:$0xf]
        %v1024 = vsel %vm995, %v950, %v1023
        %1025 = vst [vmem:[%s992 + $0x20] sm:$0xf] %v1024
        %v1026 = vld [vmem:[%s992 + $0x24] sm:$0x1]
        %v1027 = vsel %vm1001, %v951, %v1026
        %1028 = vst [vmem:[%s992 + $0x24] sm:$0x1] %v1027
        %v1029 = vld [vmem:[%s992 + $0x28] sm:$0xf]
        %v1030 = vsel %vm995, %v958, %v1029
        %1031 = vst [vmem:[%s992 + $0x28] sm:$0xf] %v1030
        %v1032 = vld [vmem:[%s992 + $0x2c] sm:$0x1]
        %v1033 = vsel %vm1001, %v959, %v1032
        %1034 = vst [vmem:[%s992 + $0x2c] sm:$0x1] %v1033
        %v1035 = vld [vmem:[%s992 + $0x30] sm:$0xf]
        %v1036 = vsel %vm995, %v966, %v1035
        %1037 = vst [vmem:[%s992 + $0x30] sm:$0xf] %v1036
        %v1038 = vld [vmem:[%s992 + $0x34] sm:$0x1]
        %v1039 = vsel %vm1001, %v967, %v1038
        %1040 = vst [vmem:[%s992 + $0x34] sm:$0x1] %v1039
        %v1041 = vld [vmem:[%s992 + $0x38] sm:$0xf]
        %v1042 = vsel %vm995, %v974, %v1041
        %1043 = vst [vmem:[%s992 + $0x38] sm:$0xf] %v1042
        %v1044 = vld [vmem:[%s992 + $0x3c] sm:$0x1]
        %v1045 = vsel %vm1001, %v975, %v1044
        %1046 = vst [vmem:[%s992 + $0x3c] sm:$0x1] %v1045
        %v1047 = vld [vmem:[#allocation2] sm:$0xf]
        %v1048 = vld [vmem:[#allocation2 + $0x8] sm:$0xf]
        %v1049 = vld [vmem:[#allocation2 + $0x10] sm:$0xf]
        %v1050 = vld [vmem:[#allocation2 + $0x18] sm:$0xf]
        %v1051 = vld [vmem:[#allocation2 + $0x20] sm:$0xf]
        %v1052 = vld [vmem:[#allocation2 + $0x28] sm:$0xf]
        %v1053 = vld [vmem:[#allocation2 + $0x30] sm:$0xf]
        %v1054 = vld [vmem:[#allocation2 + $0x38] sm:$0xf]
        %v1055 = vld [vmem:[#allocation2 + $0x4] sm:$0x1]
        %v1056 = vld [vmem:[#allocation2 + $0xc] sm:$0x1]
        %v1057 = vld [vmem:[#allocation2 + $0x14] sm:$0x1]
        %v1058 = vld [vmem:[#allocation2 + $0x1c] sm:$0x1]
        %v1059 = vld [vmem:[#allocation2 + $0x24] sm:$0x1]
        %v1060 = vld [vmem:[#allocation2 + $0x2c] sm:$0x1]
        %v1061 = vld [vmem:[#allocation2 + $0x34] sm:$0x1]
        %v1062 = vld [vmem:[#allocation2 + $0x3c] sm:$0x1]
        %v1064 = vshrl.u32 %v1047, 16
        %v1066 = vrot.slane %v1064, 4
        %v1067 = vshll.u32 %v1047, 16
        %v1069 = vrot.slane %v1067, 5
        %v1070 = vor.u32 %v1066, %v1069
        %v1071 = vrot.slane %v1070, 4
        %v1073 = vshll.u32 %v1055, 16
        %v1075 = vrot.slane %v1073, 5
        %v1076 = vsel %vm376, %v1071, %v1075
        %v1078 = vshrl.u32 %v1048, 16
        %v1080 = vrot.slane %v1078, 4
        %v1081 = vshll.u32 %v1048, 16
        %v1083 = vrot.slane %v1081, 5
        %v1084 = vor.u32 %v1080, %v1083
        %v1085 = vrot.slane %v1084, 4
        %v1087 = vshll.u32 %v1056, 16
        %v1089 = vrot.slane %v1087, 5
        %v1090 = vsel %vm376, %v1085, %v1089
        %v1092 = vshrl.u32 %v1049, 16
        %v1094 = vrot.slane %v1092, 4
        %v1095 = vshll.u32 %v1049, 16
        %v1097 = vrot.slane %v1095, 5
        %v1098 = vor.u32 %v1094, %v1097
        %v1099 = vrot.slane %v1098, 4
        %v1101 = vshll.u32 %v1057, 16
        %v1103 = vrot.slane %v1101, 5
        %v1104 = vsel %vm376, %v1099, %v1103
        %v1106 = vshrl.u32 %v1050, 16
        %v1108 = vrot.slane %v1106, 4
        %v1109 = vshll.u32 %v1050, 16
        %v1111 = vrot.slane %v1109, 5
        %v1112 = vor.u32 %v1108, %v1111
        %v1113 = vrot.slane %v1112, 4
        %v1115 = vshll.u32 %v1058, 16
        %v1117 = vrot.slane %v1115, 5
        %v1118 = vsel %vm376, %v1113, %v1117
        %v1120 = vshrl.u32 %v1051, 16
        %v1122 = vrot.slane %v1120, 4
        %v1123 = vshll.u32 %v1051, 16
        %v1125 = vrot.slane %v1123, 5
        %v1126 = vor.u32 %v1122, %v1125
        %v1127 = vrot.slane %v1126, 4
        %v1129 = vshll.u32 %v1059, 16
        %v1131 = vrot.slane %v1129, 5
        %v1132 = vsel %vm376, %v1127, %v1131
        %v1134 = vshrl.u32 %v1052, 16
        %v1136 = vrot.slane %v1134, 4
        %v1137 = vshll.u32 %v1052, 16
        %v1139 = vrot.slane %v1137, 5
        %v1140 = vor.u32 %v1136, %v1139
        %v1141 = vrot.slane %v1140, 4
        %v1143 = vshll.u32 %v1060, 16
        %v1145 = vrot.slane %v1143, 5
        %v1146 = vsel %vm376, %v1141, %v1145
        %v1148 = vshrl.u32 %v1053, 16
        %v1150 = vrot.slane %v1148, 4
        %v1151 = vshll.u32 %v1053, 16
        %v1153 = vrot.slane %v1151, 5
        %v1154 = vor.u32 %v1150, %v1153
        %v1155 = vrot.slane %v1154, 4
        %v1157 = vshll.u32 %v1061, 16
        %v1159 = vrot.slane %v1157, 5
        %v1160 = vsel %vm376, %v1155, %v1159
        %v1162 = vshrl.u32 %v1054, 16
        %v1164 = vrot.slane %v1162, 4
        %v1165 = vshll.u32 %v1054, 16
        %v1167 = vrot.slane %v1165, 5
        %v1168 = vor.u32 %v1164, %v1167
        %v1169 = vrot.slane %v1168, 4
        %v1171 = vshll.u32 %v1062, 16
        %v1173 = vrot.slane %v1171, 5
        %v1174 = vsel %vm376, %v1169, %v1173
        %v1175 = vld [vmem:[#allocation2] sm:$0xe]
        %v1176 = vld [vmem:[#allocation2 + $0x8] sm:$0xe]
        %v1177 = vld [vmem:[#allocation2 + $0x10] sm:$0xe]
        %v1178 = vld [vmem:[#allocation2 + $0x18] sm:$0xe]
        %v1179 = vld [vmem:[#allocation2 + $0x20] sm:$0xe]
        %v1180 = vld [vmem:[#allocation2 + $0x28] sm:$0xe]
        %v1181 = vld [vmem:[#allocation2 + $0x30] sm:$0xe]
        %v1182 = vld [vmem:[#allocation2 + $0x38] sm:$0xe]
        %v1199 = vrot.slane %v1175, 5
        %v1200 = vrot.slane %v1199, 4
        %v1201 = vrot.slane %v1055, 5
        %v1202 = vsel %vm507, %v1200, %v1201
        %v1203 = vrot.slane %v1176, 5
        %v1204 = vrot.slane %v1203, 4
        %v1205 = vrot.slane %v1056, 5
        %v1206 = vsel %vm507, %v1204, %v1205
        %v1207 = vrot.slane %v1177, 5
        %v1208 = vrot.slane %v1207, 4
        %v1209 = vrot.slane %v1057, 5
        %v1210 = vsel %vm507, %v1208, %v1209
        %v1211 = vrot.slane %v1178, 5
        %v1212 = vrot.slane %v1211, 4
        %v1213 = vrot.slane %v1058, 5
        %v1214 = vsel %vm507, %v1212, %v1213
        %v1215 = vrot.slane %v1179, 5
        %v1216 = vrot.slane %v1215, 4
        %v1217 = vrot.slane %v1059, 5
        %v1218 = vsel %vm507, %v1216, %v1217
        %v1219 = vrot.slane %v1180, 5
        %v1220 = vrot.slane %v1219, 4
        %v1221 = vrot.slane %v1060, 5
        %v1222 = vsel %vm507, %v1220, %v1221
        %v1223 = vrot.slane %v1181, 5
        %v1224 = vrot.slane %v1223, 4
        %v1225 = vrot.slane %v1061, 5
        %v1226 = vsel %vm507, %v1224, %v1225
        %v1227 = vrot.slane %v1182, 5
        %v1228 = vrot.slane %v1227, 4
        %v1229 = vrot.slane %v1062, 5
        %v1230 = vsel %vm507, %v1228, %v1229
        %v1231 = vld [vmem:[%s992] sm:$0xf]
        %v1232 = vld [vmem:[%s992 + $0x8] sm:$0xf]
        %v1233 = vld [vmem:[%s992 + $0x10] sm:$0xf]
        %v1234 = vld [vmem:[%s992 + $0x18] sm:$0xf]
        %v1235 = vld [vmem:[%s992 + $0x20] sm:$0xf]
        %v1236 = vld [vmem:[%s992 + $0x28] sm:$0xf]
        %v1237 = vld [vmem:[%s992 + $0x30] sm:$0xf]
        %v1238 = vld [vmem:[%s992 + $0x38] sm:$0xf]
        %v1239 = vld [vmem:[%s992 + $0x4] sm:$0x1]
        %v1240 = vld [vmem:[%s992 + $0xc] sm:$0x1]
        %v1241 = vld [vmem:[%s992 + $0x14] sm:$0x1]
        %v1242 = vld [vmem:[%s992 + $0x1c] sm:$0x1]
        %v1243 = vld [vmem:[%s992 + $0x24] sm:$0x1]
        %v1244 = vld [vmem:[%s992 + $0x2c] sm:$0x1]
        %v1245 = vld [vmem:[%s992 + $0x34] sm:$0x1]
        %v1246 = vld [vmem:[%s992 + $0x3c] sm:$0x1]
        %v1248 = vshrl.u32 %v1231, 16
        %v1250 = vrot.slane %v1248, 4
        %v1251 = vshll.u32 %v1231, 16
        %v1253 = vrot.slane %v1251, 5
        %v1254 = vor.u32 %v1250, %v1253
        %v1255 = vrot.slane %v1254, 4
        %v1257 = vshll.u32 %v1239, 16
        %v1259 = vrot.slane %v1257, 5
        %v1260 = vsel %vm376, %v1255, %v1259
        %v1262 = vshrl.u32 %v1232, 16
        %v1264 = vrot.slane %v1262, 4
        %v1265 = vshll.u32 %v1232, 16
        %v1267 = vrot.slane %v1265, 5
        %v1268 = vor.u32 %v1264, %v1267
        %v1269 = vrot.slane %v1268, 4
        %v1271 = vshll.u32 %v1240, 16
        %v1273 = vrot.slane %v1271, 5
        %v1274 = vsel %vm376, %v1269, %v1273
        %v1276 = vshrl.u32 %v1233, 16
        %v1278 = vrot.slane %v1276, 4
        %v1279 = vshll.u32 %v1233, 16
        %v1281 = vrot.slane %v1279, 5
        %v1282 = vor.u32 %v1278, %v1281
        %v1283 = vrot.slane %v1282, 4
        %v1285 = vshll.u32 %v1241, 16
        %v1287 = vrot.slane %v1285, 5
        %v1288 = vsel %vm376, %v1283, %v1287
        %v1290 = vshrl.u32 %v1234, 16
        %v1292 = vrot.slane %v1290, 4
        %v1293 = vshll.u32 %v1234, 16
        %v1295 = vrot.slane %v1293, 5
        %v1296 = vor.u32 %v1292, %v1295
        %v1297 = vrot.slane %v1296, 4
        %v1299 = vshll.u32 %v1242, 16
        %v1301 = vrot.slane %v1299, 5
        %v1302 = vsel %vm376, %v1297, %v1301
        %v1304 = vshrl.u32 %v1235, 16
        %v1306 = vrot.slane %v1304, 4
        %v1307 = vshll.u32 %v1235, 16
        %v1309 = vrot.slane %v1307, 5
        %v1310 = vor.u32 %v1306, %v1309
        %v1311 = vrot.slane %v1310, 4
        %v1313 = vshll.u32 %v1243, 16
        %v1315 = vrot.slane %v1313, 5
        %v1316 = vsel %vm376, %v1311, %v1315
        %v1318 = vshrl.u32 %v1236, 16
        %v1320 = vrot.slane %v1318, 4
        %v1321 = vshll.u32 %v1236, 16
        %v1323 = vrot.slane %v1321, 5
        %v1324 = vor.u32 %v1320, %v1323
        %v1325 = vrot.slane %v1324, 4
        %v1327 = vshll.u32 %v1244, 16
        %v1329 = vrot.slane %v1327, 5
        %v1330 = vsel %vm376, %v1325, %v1329
        %v1332 = vshrl.u32 %v1237, 16
        %v1334 = vrot.slane %v1332, 4
        %v1335 = vshll.u32 %v1237, 16
        %v1337 = vrot.slane %v1335, 5
        %v1338 = vor.u32 %v1334, %v1337
        %v1339 = vrot.slane %v1338, 4
        %v1341 = vshll.u32 %v1245, 16
        %v1343 = vrot.slane %v1341, 5
        %v1344 = vsel %vm376, %v1339, %v1343
        %v1346 = vshrl.u32 %v1238, 16
        %v1348 = vrot.slane %v1346, 4
        %v1349 = vshll.u32 %v1238, 16
        %v1351 = vrot.slane %v1349, 5
        %v1352 = vor.u32 %v1348, %v1351
        %v1353 = vrot.slane %v1352, 4
        %v1355 = vshll.u32 %v1246, 16
        %v1357 = vrot.slane %v1355, 5
        %v1358 = vsel %vm376, %v1353, %v1357
        %v1359 = vld [vmem:[%s992] sm:$0xe]
        %v1360 = vld [vmem:[%s992 + $0x8] sm:$0xe]
        %v1361 = vld [vmem:[%s992 + $0x10] sm:$0xe]
        %v1362 = vld [vmem:[%s992 + $0x18] sm:$0xe]
        %v1363 = vld [vmem:[%s992 + $0x20] sm:$0xe]
        %v1364 = vld [vmem:[%s992 + $0x28] sm:$0xe]
        %v1365 = vld [vmem:[%s992 + $0x30] sm:$0xe]
        %v1366 = vld [vmem:[%s992 + $0x38] sm:$0xe]
        %v1383 = vrot.slane %v1359, 5
        %v1384 = vrot.slane %v1383, 4
        %v1385 = vrot.slane %v1239, 5
        %v1386 = vsel %vm507, %v1384, %v1385
        %v1387 = vrot.slane %v1360, 5
        %v1388 = vrot.slane %v1387, 4
        %v1389 = vrot.slane %v1240, 5
        %v1390 = vsel %vm507, %v1388, %v1389
        %v1391 = vrot.slane %v1361, 5
        %v1392 = vrot.slane %v1391, 4
        %v1393 = vrot.slane %v1241, 5
        %v1394 = vsel %vm507, %v1392, %v1393
        %v1395 = vrot.slane %v1362, 5
        %v1396 = vrot.slane %v1395, 4
        %v1397 = vrot.slane %v1242, 5
        %v1398 = vsel %vm507, %v1396, %v1397
        %v1399 = vrot.slane %v1363, 5
        %v1400 = vrot.slane %v1399, 4
        %v1401 = vrot.slane %v1243, 5
        %v1402 = vsel %vm507, %v1400, %v1401
        %v1403 = vrot.slane %v1364, 5
        %v1404 = vrot.slane %v1403, 4
        %v1405 = vrot.slane %v1244, 5
        %v1406 = vsel %vm507, %v1404, %v1405
        %v1407 = vrot.slane %v1365, 5
        %v1408 = vrot.slane %v1407, 4
        %v1409 = vrot.slane %v1245, 5
        %v1410 = vsel %vm507, %v1408, %v1409
        %v1411 = vrot.slane %v1366, 5
        %v1412 = vrot.slane %v1411, 4
        %v1413 = vrot.slane %v1246, 5
        %v1414 = vsel %vm507, %v1412, %v1413
        %s1415 = scalar_lea.vmem [#allocation2], 16
        %v1416 = vld [vmem:[%s1415] sm:$0xf]
        %v1417 = vld [vmem:[%s1415 + $0x8] sm:$0xf]
        %v1418 = vld [vmem:[%s1415 + $0x10] sm:$0xf]
        %v1419 = vld [vmem:[%s1415 + $0x18] sm:$0xf]
        %v1420 = vld [vmem:[%s1415 + $0x20] sm:$0xf]
        %v1421 = vld [vmem:[%s1415 + $0x28] sm:$0xf]
        %v1422 = vld [vmem:[%s1415 + $0x30] sm:$0xf]
        %v1423 = vld [vmem:[%s1415 + $0x38] sm:$0xf]
        %v1424 = vld [vmem:[%s1415 + $0x4] sm:$0x1]
        %v1425 = vld [vmem:[%s1415 + $0xc] sm:$0x1]
        %v1426 = vld [vmem:[%s1415 + $0x14] sm:$0x1]
        %v1427 = vld [vmem:[%s1415 + $0x1c] sm:$0x1]
        %v1428 = vld [vmem:[%s1415 + $0x24] sm:$0x1]
        %v1429 = vld [vmem:[%s1415 + $0x2c] sm:$0x1]
        %v1430 = vld [vmem:[%s1415 + $0x34] sm:$0x1]
        %v1431 = vld [vmem:[%s1415 + $0x3c] sm:$0x1]
        %v1433 = vshrl.u32 %v1416, 16
        %v1435 = vrot.slane %v1433, 4
        %v1436 = vshll.u32 %v1416, 16
        %v1438 = vrot.slane %v1436, 5
        %v1439 = vor.u32 %v1435, %v1438
        %v1440 = vrot.slane %v1439, 4
        %v1442 = vshll.u32 %v1424, 16
        %v1444 = vrot.slane %v1442, 5
        %v1445 = vsel %vm376, %v1440, %v1444
        %v1447 = vshrl.u32 %v1417, 16
        %v1449 = vrot.slane %v1447, 4
        %v1450 = vshll.u32 %v1417, 16
        %v1452 = vrot.slane %v1450, 5
        %v1453 = vor.u32 %v1449, %v1452
        %v1454 = vrot.slane %v1453, 4
        %v1456 = vshll.u32 %v1425, 16
        %v1458 = vrot.slane %v1456, 5
        %v1459 = vsel %vm376, %v1454, %v1458
        %v1461 = vshrl.u32 %v1418, 16
        %v1463 = vrot.slane %v1461, 4
        %v1464 = vshll.u32 %v1418, 16
        %v1466 = vrot.slane %v1464, 5
        %v1467 = vor.u32 %v1463, %v1466
        %v1468 = vrot.slane %v1467, 4
        %v1470 = vshll.u32 %v1426, 16
        %v1472 = vrot.slane %v1470, 5
        %v1473 = vsel %vm376, %v1468, %v1472
        %v1475 = vshrl.u32 %v1419, 16
        %v1477 = vrot.slane %v1475, 4
        %v1478 = vshll.u32 %v1419, 16
        %v1480 = vrot.slane %v1478, 5
        %v1481 = vor.u32 %v1477, %v1480
        %v1482 = vrot.slane %v1481, 4
        %v1484 = vshll.u32 %v1427, 16
        %v1486 = vrot.slane %v1484, 5
        %v1487 = vsel %vm376, %v1482, %v1486
        %v1489 = vshrl.u32 %v1420, 16
        %v1491 = vrot.slane %v1489, 4
        %v1492 = vshll.u32 %v1420, 16
        %v1494 = vrot.slane %v1492, 5
        %v1495 = vor.u32 %v1491, %v1494
        %v1496 = vrot.slane %v1495, 4
        %v1498 = vshll.u32 %v1428, 16
        %v1500 = vrot.slane %v1498, 5
        %v1501 = vsel %vm376, %v1496, %v1500
        %v1503 = vshrl.u32 %v1421, 16
        %v1505 = vrot.slane %v1503, 4
        %v1506 = vshll.u32 %v1421, 16
        %v1508 = vrot.slane %v1506, 5
        %v1509 = vor.u32 %v1505, %v1508
        %v1510 = vrot.slane %v1509, 4
        %v1512 = vshll.u32 %v1429, 16
        %v1514 = vrot.slane %v1512, 5
        %v1515 = vsel %vm376, %v1510, %v1514
        %v1517 = vshrl.u32 %v1422, 16
        %v1519 = vrot.slane %v1517, 4
        %v1520 = vshll.u32 %v1422, 16
        %v1522 = vrot.slane %v1520, 5
        %v1523 = vor.u32 %v1519, %v1522
        %v1524 = vrot.slane %v1523, 4
        %v1526 = vshll.u32 %v1430, 16
        %v1528 = vrot.slane %v1526, 5
        %v1529 = vsel %vm376, %v1524, %v1528
        %v1531 = vshrl.u32 %v1423, 16
        %v1533 = vrot.slane %v1531, 4
        %v1534 = vshll.u32 %v1423, 16
        %v1536 = vrot.slane %v1534, 5
        %v1537 = vor.u32 %v1533, %v1536
        %v1538 = vrot.slane %v1537, 4
        %v1540 = vshll.u32 %v1431, 16
        %v1542 = vrot.slane %v1540, 5
        %v1543 = vsel %vm376, %v1538, %v1542
        %v1544 = vld [vmem:[%s1415] sm:$0xe]
        %v1545 = vld [vmem:[%s1415 + $0x8] sm:$0xe]
        %v1546 = vld [vmem:[%s1415 + $0x10] sm:$0xe]
        %v1547 = vld [vmem:[%s1415 + $0x18] sm:$0xe]
        %v1548 = vld [vmem:[%s1415 + $0x20] sm:$0xe]
        %v1549 = vld [vmem:[%s1415 + $0x28] sm:$0xe]
        %v1550 = vld [vmem:[%s1415 + $0x30] sm:$0xe]
        %v1551 = vld [vmem:[%s1415 + $0x38] sm:$0xe]
        %v1568 = vrot.slane %v1544, 5
        %v1569 = vrot.slane %v1568, 4
        %v1570 = vrot.slane %v1424, 5
        %v1571 = vsel %vm507, %v1569, %v1570
        %v1572 = vrot.slane %v1545, 5
        %v1573 = vrot.slane %v1572, 4
        %v1574 = vrot.slane %v1425, 5
        %v1575 = vsel %vm507, %v1573, %v1574
        %v1576 = vrot.slane %v1546, 5
        %v1577 = vrot.slane %v1576, 4
        %v1578 = vrot.slane %v1426, 5
        %v1579 = vsel %vm507, %v1577, %v1578
        %v1580 = vrot.slane %v1547, 5
        %v1581 = vrot.slane %v1580, 4
        %v1582 = vrot.slane %v1427, 5
        %v1583 = vsel %vm507, %v1581, %v1582
        %v1584 = vrot.slane %v1548, 5
        %v1585 = vrot.slane %v1584, 4
        %v1586 = vrot.slane %v1428, 5
        %v1587 = vsel %vm507, %v1585, %v1586
        %v1588 = vrot.slane %v1549, 5
        %v1589 = vrot.slane %v1588, 4
        %v1590 = vrot.slane %v1429, 5
        %v1591 = vsel %vm507, %v1589, %v1590
        %v1592 = vrot.slane %v1550, 5
        %v1593 = vrot.slane %v1592, 4
        %v1594 = vrot.slane %v1430, 5
        %v1595 = vsel %vm507, %v1593, %v1594
        %v1596 = vrot.slane %v1551, 5
        %v1597 = vrot.slane %v1596, 4
        %v1598 = vrot.slane %v1431, 5
        %v1599 = vsel %vm507, %v1597, %v1598
        %v1608 = vunpack.c.l.b16 %v1047
        %v1609 = vunpack.c.l.b16 %v1048
        %v1610 = vunpack.c.l.b16 %v1049
        %v1611 = vunpack.c.l.b16 %v1050
        %v1612 = vunpack.c.l.b16 %v1051
        %v1613 = vunpack.c.l.b16 %v1052
        %v1614 = vunpack.c.l.b16 %v1053
        %v1615 = vunpack.c.l.b16 %v1054
        %v1616 = vpack.c.b16 %v1609, %v1608
        %v1617 = vpack.c.b16 %v1611, %v1610
        %v1618 = vpack.c.b16 %v1613, %v1612
        %v1619 = vpack.c.b16 %v1615, %v1614
        %v1620 = vunpack.c.l.b16 %v1076
        %v1621 = vunpack.c.l.b16 %v1090
        %v1622 = vunpack.c.l.b16 %v1104
        %v1623 = vunpack.c.l.b16 %v1118
        %v1624 = vunpack.c.l.b16 %v1132
        %v1625 = vunpack.c.l.b16 %v1146
        %v1626 = vunpack.c.l.b16 %v1160
        %v1627 = vunpack.c.l.b16 %v1174
        %v1628 = vpack.c.b16 %v1621, %v1620
        %v1629 = vpack.c.b16 %v1623, %v1622
        %v1630 = vpack.c.b16 %v1625, %v1624
        %v1631 = vpack.c.b16 %v1627, %v1626
        %1632 = vrot.lane.b32.xlu0 %v1628, 16
        %v1633 = vpop.permute.xlu0 %1632
        %1634 = vrot.lane.b32.xlu0 %v1629, 16
        %v1635 = vpop.permute.xlu0 %1634
        %1636 = vrot.lane.b32.xlu0 %v1630, 16
        %v1637 = vpop.permute.xlu0 %1636
        %1638 = vrot.lane.b32.xlu0 %v1631, 16
        %v1639 = vpop.permute.xlu0 %1638
        %v1640 = vunpack.c.l.b16 %v1202
        %v1641 = vunpack.c.l.b16 %v1206
        %v1642 = vunpack.c.l.b16 %v1210
        %v1643 = vunpack.c.l.b16 %v1214
        %v1644 = vunpack.c.l.b16 %v1218
        %v1645 = vunpack.c.l.b16 %v1222
        %v1646 = vunpack.c.l.b16 %v1226
        %v1647 = vunpack.c.l.b16 %v1230
        %v1648 = vpack.c.b16 %v1641, %v1640
        %v1649 = vpack.c.b16 %v1643, %v1642
        %v1650 = vpack.c.b16 %v1645, %v1644
        %v1651 = vpack.c.b16 %v1647, %v1646
        %1652 = vrot.lane.b32.xlu0 %v1648, 32
        %v1653 = vpop.permute.xlu0 %1652
        %1654 = vrot.lane.b32.xlu0 %v1649, 32
        %v1655 = vpop.permute.xlu0 %1654
        %1656 = vrot.lane.b32.xlu0 %v1650, 32
        %v1657 = vpop.permute.xlu0 %1656
        %1658 = vrot.lane.b32.xlu0 %v1651, 32
        %v1659 = vpop.permute.xlu0 %1658
        %v1668 = vunpack.c.l.b16 %v1231
        %v1669 = vunpack.c.l.b16 %v1232
        %v1670 = vunpack.c.l.b16 %v1233
        %v1671 = vunpack.c.l.b16 %v1234
        %v1672 = vunpack.c.l.b16 %v1235
        %v1673 = vunpack.c.l.b16 %v1236
        %v1674 = vunpack.c.l.b16 %v1237
        %v1675 = vunpack.c.l.b16 %v1238
        %v1676 = vpack.c.b16 %v1669, %v1668
        %v1677 = vpack.c.b16 %v1671, %v1670
        %v1678 = vpack.c.b16 %v1673, %v1672
        %v1679 = vpack.c.b16 %v1675, %v1674
        %1680 = vrot.lane.b32.xlu0 %v1676, 48
        %v1681 = vpop.permute.xlu0 %1680
        %1682 = vrot.lane.b32.xlu0 %v1677, 48
        %v1683 = vpop.permute.xlu0 %1682
        %1684 = vrot.lane.b32.xlu0 %v1678, 48
        %v1685 = vpop.permute.xlu0 %1684
        %1686 = vrot.lane.b32.xlu0 %v1679, 48
        %v1687 = vpop.permute.xlu0 %1686
        %v1688 = vunpack.c.l.b16 %v1260
        %v1689 = vunpack.c.l.b16 %v1274
        %v1690 = vunpack.c.l.b16 %v1288
        %v1691 = vunpack.c.l.b16 %v1302
        %v1692 = vunpack.c.l.b16 %v1316
        %v1693 = vunpack.c.l.b16 %v1330
        %v1694 = vunpack.c.l.b16 %v1344
        %v1695 = vunpack.c.l.b16 %v1358
        %v1696 = vpack.c.b16 %v1689, %v1688
        %v1697 = vpack.c.b16 %v1691, %v1690
        %v1698 = vpack.c.b16 %v1693, %v1692
        %v1699 = vpack.c.b16 %v1695, %v1694
        %1700 = vrot.lane.b32.xlu0 %v1696, 64
        %v1701 = vpop.permute.xlu0 %1700
        %1702 = vrot.lane.b32.xlu0 %v1697, 64
        %v1703 = vpop.permute.xlu0 %1702
        %1704 = vrot.lane.b32.xlu0 %v1698, 64
        %v1705 = vpop.permute.xlu0 %1704
        %1706 = vrot.lane.b32.xlu0 %v1699, 64
        %v1707 = vpop.permute.xlu0 %1706
        %v1708 = vunpack.c.l.b16 %v1386
        %v1709 = vunpack.c.l.b16 %v1390
        %v1710 = vunpack.c.l.b16 %v1394
        %v1711 = vunpack.c.l.b16 %v1398
        %v1712 = vunpack.c.l.b16 %v1402
        %v1713 = vunpack.c.l.b16 %v1406
        %v1714 = vunpack.c.l.b16 %v1410
        %v1715 = vunpack.c.l.b16 %v1414
        %v1716 = vpack.c.b16 %v1709, %v1708
        %v1717 = vpack.c.b16 %v1711, %v1710
        %v1718 = vpack.c.b16 %v1713, %v1712
        %v1719 = vpack.c.b16 %v1715, %v1714
        %1720 = vrot.lane.b32.xlu0 %v1716, 80
        %v1721 = vpop.permute.xlu0 %1720
        %1722 = vrot.lane.b32.xlu0 %v1717, 80
        %v1723 = vpop.permute.xlu0 %1722
        %1724 = vrot.lane.b32.xlu0 %v1718, 80
        %v1725 = vpop.permute.xlu0 %1724
        %1726 = vrot.lane.b32.xlu0 %v1719, 80
        %v1727 = vpop.permute.xlu0 %1726
        %v1736 = vunpack.c.l.b16 %v1416
        %v1737 = vunpack.c.l.b16 %v1417
        %v1738 = vunpack.c.l.b16 %v1418
        %v1739 = vunpack.c.l.b16 %v1419
        %v1740 = vunpack.c.l.b16 %v1420
        %v1741 = vunpack.c.l.b16 %v1421
        %v1742 = vunpack.c.l.b16 %v1422
        %v1743 = vunpack.c.l.b16 %v1423
        %v1744 = vpack.c.b16 %v1737, %v1736
        %v1745 = vpack.c.b16 %v1739, %v1738
        %v1746 = vpack.c.b16 %v1741, %v1740
        %v1747 = vpack.c.b16 %v1743, %v1742
        %1748 = vrot.lane.b32.xlu0 %v1744, 96
        %v1749 = vpop.permute.xlu0 %1748
        %1750 = vrot.lane.b32.xlu0 %v1745, 96
        %v1751 = vpop.permute.xlu0 %1750
        %1752 = vrot.lane.b32.xlu0 %v1746, 96
        %v1753 = vpop.permute.xlu0 %1752
        %1754 = vrot.lane.b32.xlu0 %v1747, 96
        %v1755 = vpop.permute.xlu0 %1754
        %v1756 = vunpack.c.l.b16 %v1445
        %v1757 = vunpack.c.l.b16 %v1459
        %v1758 = vunpack.c.l.b16 %v1473
        %v1759 = vunpack.c.l.b16 %v1487
        %v1760 = vunpack.c.l.b16 %v1501
        %v1761 = vunpack.c.l.b16 %v1515
        %v1762 = vunpack.c.l.b16 %v1529
        %v1763 = vunpack.c.l.b16 %v1543
        %v1764 = vpack.c.b16 %v1757, %v1756
        %v1765 = vpack.c.b16 %v1759, %v1758
        %v1766 = vpack.c.b16 %v1761, %v1760
        %v1767 = vpack.c.b16 %v1763, %v1762
        %1768 = vrot.lane.b32.xlu0 %v1764, 112
        %v1769 = vpop.permute.xlu0 %1768
        %1770 = vrot.lane.b32.xlu0 %v1765, 112
        %v1771 = vpop.permute.xlu0 %1770
        %1772 = vrot.lane.b32.xlu0 %v1766, 112
        %v1773 = vpop.permute.xlu0 %1772
        %1774 = vrot.lane.b32.xlu0 %v1767, 112
        %v1775 = vpop.permute.xlu0 %1774
        %v1776 = vunpack.c.l.b16 %v1571
        %v1777 = vunpack.c.l.b16 %v1575
        %v1778 = vunpack.c.l.b16 %v1579
        %v1779 = vunpack.c.l.b16 %v1583
        %v1780 = vunpack.c.l.b16 %v1587
        %v1781 = vunpack.c.l.b16 %v1591
        %v1782 = vunpack.c.l.b16 %v1595
        %v1783 = vunpack.c.l.b16 %v1599
        %v1784 = vpack.c.b16 %v1777, %v1776
        %v1785 = vpack.c.b16 %v1779, %v1778
        %v1786 = vpack.c.b16 %v1781, %v1780
        %v1787 = vpack.c.b16 %v1783, %v1782
        %vm1788 = vcmask 130048
        %v1791 = vsel %vm1788, %v1616, %v1633
        %v1794 = vsel %vm1788, %v1617, %v1635
        %v1797 = vsel %vm1788, %v1618, %v1637
        %v1800 = vsel %vm1788, %v1619, %v1639
        %vm1801 = vcmask 261120
        %v1803 = vsel %vm1801, %v1791, %v1653
        %v1805 = vsel %vm1801, %v1794, %v1655
        %v1807 = vsel %vm1801, %v1797, %v1657
        %v1809 = vsel %vm1801, %v1800, %v1659
        %vm1810 = vcmask 392192
        %v1812 = vsel %vm1810, %v1803, %v1681
        %v1814 = vsel %vm1810, %v1805, %v1683
        %v1816 = vsel %vm1810, %v1807, %v1685
        %v1818 = vsel %vm1810, %v1809, %v1687
        %vm1819 = vcmask 523264
        %v1821 = vsel %vm1819, %v1812, %v1701
        %v1823 = vsel %vm1819, %v1814, %v1703
        %v1825 = vsel %vm1819, %v1816, %v1705
        %v1827 = vsel %vm1819, %v1818, %v1707
        %vm1828 = vcmask 654336
        %v1830 = vsel %vm1828, %v1821, %v1721
        %v1832 = vsel %vm1828, %v1823, %v1723
        %v1834 = vsel %vm1828, %v1825, %v1725
        %v1836 = vsel %vm1828, %v1827, %v1727
        %vm1837 = vcmask 785408
        %v1839 = vsel %vm1837, %v1830, %v1749
        %v1841 = vsel %vm1837, %v1832, %v1751
        %v1843 = vsel %vm1837, %v1834, %v1753
        %v1845 = vsel %vm1837, %v1836, %v1755
        %vm1846 = vcmask 916480
        %v1848 = vsel %vm1846, %v1839, %v1769
        %v1851 = vsel %vm1846, %v1841, %v1771
        %v1854 = vsel %vm1846, %v1843, %v1773
        %v1857 = vsel %vm1846, %v1845, %v1775
        %v1859 = vld [vmem:[%s3] sm:$0xf]
        %v1860 = vld [vmem:[%s3 + $0x4] sm:$0xf]
        %v1861 = vld [vmem:[%s3 + $0x8] sm:$0xf]
        %v1862 = vld [vmem:[%s3 + $0xc] sm:$0xf]
        %v1863 = vld [vmem:[%s3 + $0x10] sm:$0xf]
        %v1864 = vld [vmem:[%s3 + $0x14] sm:$0xf]
        %v1865 = vld [vmem:[%s3 + $0x18] sm:$0xf]
        %v1866 = vld [vmem:[%s3 + $0x1c] sm:$0xf]
        %v1867 = vld [vmem:[%s3 + $0x20] sm:$0xf]
        %v1868 = vld [vmem:[%s3 + $0x24] sm:$0xf]
        %v1869 = vld [vmem:[%s3 + $0x28] sm:$0xf]
        %v1870 = vld [vmem:[%s3 + $0x2c] sm:$0xf]
        %v1871 = vld [vmem:[%s3 + $0x30] sm:$0xf]
        %v1872 = vld [vmem:[%s3 + $0x34] sm:$0xf]
        %v1873 = vld [vmem:[%s3 + $0x38] sm:$0xf]
        %v1874 = vld [vmem:[%s3 + $0x3c] sm:$0xf]
        %v1875 = vld [vmem:[%s3 + $0x40] sm:$0xf]
        %v1876 = vld [vmem:[%s3 + $0x44] sm:$0xf]
        %v1877 = vld [vmem:[%s4] sm:$0x1]
        %v1879 = vlaneseq
        %v1880 = vshrl.u32 %v1879, 7
        %v1881 = vsub.s32 0, %v1880
        %v1882 = vrot.slane %v1877, %v1881
        %v1902 = vunpack.c.l.b16 %v1859
        %v1903 = vunpack.c.l.b16 %v1860
        %v1904 = vunpack.c.l.b16 %v1861
        %v1905 = vunpack.c.l.b16 %v1862
        %v1906 = vunpack.c.l.b16 %v1863
        %v1907 = vunpack.c.l.b16 %v1864
        %v1908 = vunpack.c.l.b16 %v1865
        %v1909 = vunpack.c.l.b16 %v1866
        %v1910 = vunpack.c.l.b16 %v1867
        %v1911 = vunpack.c.l.b16 %v1868
        %v1912 = vunpack.c.l.b16 %v1869
        %v1913 = vunpack.c.l.b16 %v1870
        %v1914 = vunpack.c.l.b16 %v1871
        %v1915 = vunpack.c.l.b16 %v1872
        %v1916 = vunpack.c.l.b16 %v1873
        %v1917 = vunpack.c.l.b16 %v1874
        %v1918 = vunpack.c.l.b16 %v1875
        %v1919 = vunpack.c.l.b16 %v1876
        %v1920 = vpack.c.b16 %v1903, %v1902
        %v1921 = vpack.c.b16 %v1905, %v1904
        %v1922 = vpack.c.b16 %v1907, %v1906
        %v1923 = vpack.c.b16 %v1909, %v1908
        %v1924 = vpack.c.b16 %v1911, %v1910
        %v1925 = vpack.c.b16 %v1913, %v1912
        %v1926 = vpack.c.b16 %v1915, %v1914
        %v1927 = vpack.c.b16 %v1917, %v1916
        %v1928 = vpack.c.b16 %v1919, %v1918
        %v1939 = vsel %vm1788, %v1784, 0
        %v1942 = vsel %vm1788, %v1785, 0
        %v1945 = vsel %vm1788, %v1786, 0
        %v1948 = vsel %vm1788, %v1787, 0
        %1950 = vmatprep.subr.bf16.mxu0 0
        %1951 = vmatpush1.bf16.msra.mxu0 %v1927
        %1952 = vmatprep.subr.bf16.mxu0 0
        %1953 = vmatpush1.bf16.msra.mxu0 %v1926
        %1954 = vmatprep.subr.bf16.mxu0 0
        %1955 = vmatpush1.bf16.msra.mxu0 %v1925
        %1956 = vmatprep.subr.bf16.mxu0 0
        %1957 = vmatpush1.bf16.msra.mxu0 %v1924
        %1958 = vmatprep.subr.bf16.mxu0 0
        %1959 = vmatpush1.bf16.msra.mxu0 %v1923
        %1960 = vmatprep.subr.bf16.mxu0 0
        %1961 = vmatpush1.bf16.msra.mxu0 %v1922
        %1962 = vmatprep.subr.bf16.mxu0 0
        %1963 = vmatpush1.bf16.msra.mxu0 %v1921
        %1964 = vmatprep.subr.bf16.mxu0 0
        %1965 = vmatpush1.bf16.msra.mxu0 %v1920
        %1966 = vmatprep.subr.bf16.mxu0 0
        %1967 = vmatpush2.bf16.msra.mxu0 0
        %1968 = vmatprep.subr.bf16.mxu0 0
        %1969 = vmatpush2.bf16.msra.mxu0 0
        %1970 = vmatprep.subr.bf16.mxu0 0
        %1971 = vmatpush2.bf16.msra.mxu0 0
        %1972 = vmatprep.subr.bf16.mxu0 0
        %1973 = vmatpush2.bf16.msra.mxu0 0
        %1974 = vmatprep.subr.bf16.mxu0 0
        %1975 = vmatpush2.bf16.msra.mxu0 0
        %1976 = vmatprep.subr.bf16.mxu0 0
        %1977 = vmatpush2.bf16.msra.mxu0 0
        %1978 = vmatprep.subr.bf16.mxu0 0
        %1979 = vmatpush2.bf16.msra.mxu0 0
        %1980 = vmatprep.subr.bf16.mxu0 0
        %1981 = vmatpush2.bf16.msra.mxu0 %v1928
        %1982 = vmatprep.mubr.bf16.mxu0 %v1939
        %1983 = vmatmul.mubr.bf16.gmra.mxu0 %v1848
        %v1984 = vpop.f32.mrf.mxu0
        %v1985 = vadd.f32 %v1882, %v1984
        %v1986 = vpop.f32.mrf.mxu0
        %v1987 = vpop.f32.mrf.mxu0
        %v1988 = vadd.f32 %v1882, %v1987
        %v1989 = vpop.f32.mrf.mxu0
        %1990 = vmatprep.mubr.bf16.mxu0 %v1942
        %1991 = vmatmul.mubr.bf16.gmra.mxu0 %v1851
        %v1992 = vpop.f32.mrf.mxu0
        %v1993 = vadd.f32 %v1882, %v1992
        %v1994 = vpop.f32.mrf.mxu0
        %v1995 = vpop.f32.mrf.mxu0
        %v1996 = vadd.f32 %v1882, %v1995
        %v1997 = vpop.f32.mrf.mxu0
        %1998 = vmatprep.mubr.bf16.mxu0 %v1945
        %1999 = vmatmul.mubr.bf16.gmra.mxu0 %v1854
        %v2000 = vpop.f32.mrf.mxu0
        %v2001 = vadd.f32 %v1882, %v2000
        %v2002 = vpop.f32.mrf.mxu0
        %v2003 = vpop.f32.mrf.mxu0
        %v2004 = vadd.f32 %v1882, %v2003
        %v2005 = vpop.f32.mrf.mxu0
        %2006 = vmatprep.mubr.bf16.mxu0 %v1948
        %2007 = vmatmul.mubr.bf16.gmra.mxu0 %v1857
        %v2008 = vpop.f32.mrf.mxu0
        %v2009 = vadd.f32 %v1882, %v2008
        %v2010 = vpop.f32.mrf.mxu0
        %v2011 = vpop.f32.mrf.mxu0
        %v2012 = vadd.f32 %v1882, %v2011
        %v2013 = vpop.f32.mrf.mxu0
        %2014 = vdwg.mxu0
        %v2015 = vpack.c.bf16 %v1985, %v1985
        %v2016 = vpack.c.bf16 %v1988, %v1988
        %v2017 = vpack.c.bf16 %v1993, %v1993
        %v2018 = vpack.c.bf16 %v1996, %v1996
        %v2019 = vpack.c.bf16 %v2001, %v2001
        %v2020 = vpack.c.bf16 %v2004, %v2004
        %v2021 = vpack.c.bf16 %v2009, %v2009
        %v2022 = vpack.c.bf16 %v2012, %v2012
        %v2031 = vunpack.c.l.b16 %v2015
        %v2032 = vunpack.c.l.b16 %v2016
        %v2033 = vunpack.c.l.b16 %v2017
        %v2034 = vunpack.c.l.b16 %v2018
        %v2035 = vunpack.c.l.b16 %v2019
        %v2036 = vunpack.c.l.b16 %v2020
        %v2037 = vunpack.c.l.b16 %v2021
        %v2038 = vunpack.c.l.b16 %v2022
        %v2039 = vpack.c.b16 %v2031, %v2031
        %v2040 = vpack.c.b16 %v2032, %v2032
        %v2041 = vpack.c.b16 %v2033, %v2033
        %v2042 = vpack.c.b16 %v2034, %v2034
        %v2043 = vpack.c.b16 %v2035, %v2035
        %v2044 = vpack.c.b16 %v2036, %v2036
        %v2045 = vpack.c.b16 %v2037, %v2037
        %v2046 = vpack.c.b16 %v2038, %v2038
        %v2048 = vshrl.u32 %v2039, 16
        %v2050 = vrot.slane %v2048, 7
        %v2051 = vshll.u32 %v2039, 16
        %v2053 = vor.u32 %v2050, %v2051
        %v2054 = vrot.slane %v2050, 4
        %v2056 = vshrl.u32 %v2040, 16
        %v2058 = vrot.slane %v2056, 7
        %v2059 = vshll.u32 %v2040, 16
        %v2061 = vor.u32 %v2058, %v2059
        %v2062 = vrot.slane %v2058, 4
        %v2064 = vshrl.u32 %v2041, 16
        %v2066 = vrot.slane %v2064, 7
        %v2067 = vshll.u32 %v2041, 16
        %v2069 = vor.u32 %v2066, %v2067
        %v2070 = vrot.slane %v2066, 4
        %v2072 = vshrl.u32 %v2042, 16
        %v2074 = vrot.slane %v2072, 7
        %v2075 = vshll.u32 %v2042, 16
        %v2077 = vor.u32 %v2074, %v2075
        %v2078 = vrot.slane %v2074, 4
        %v2080 = vshrl.u32 %v2043, 16
        %v2082 = vrot.slane %v2080, 7
        %v2083 = vshll.u32 %v2043, 16
        %v2085 = vor.u32 %v2082, %v2083
        %v2086 = vrot.slane %v2082, 4
        %v2088 = vshrl.u32 %v2044, 16
        %v2090 = vrot.slane %v2088, 7
        %v2091 = vshll.u32 %v2044, 16
        %v2093 = vor.u32 %v2090, %v2091
        %v2094 = vrot.slane %v2090, 4
        %v2096 = vshrl.u32 %v2045, 16
        %v2098 = vrot.slane %v2096, 7
        %v2099 = vshll.u32 %v2045, 16
        %v2101 = vor.u32 %v2098, %v2099
        %v2102 = vrot.slane %v2098, 4
        %v2104 = vshrl.u32 %v2046, 16
        %v2106 = vrot.slane %v2104, 7
        %v2107 = vshll.u32 %v2046, 16
        %v2109 = vor.u32 %v2106, %v2107
        %v2110 = vrot.slane %v2106, 4
        %v2127 = vsel %vm995, %v2053, %v1231
        %2128 = vst [vmem:[%s992] sm:$0xf] %v2127
        %v2129 = vld [vmem:[%s992 + $0x4] sm:$0x1]
        %v2130 = vsel %vm1001, %v2054, %v2129
        %2131 = vst [vmem:[%s992 + $0x4] sm:$0x1] %v2130
        %v2132 = vld [vmem:[%s992 + $0x8] sm:$0xf]
        %v2133 = vsel %vm995, %v2061, %v2132
        %2134 = vst [vmem:[%s992 + $0x8] sm:$0xf] %v2133
        %v2135 = vld [vmem:[%s992 + $0xc] sm:$0x1]
        %v2136 = vsel %vm1001, %v2062, %v2135
        %2137 = vst [vmem:[%s992 + $0xc] sm:$0x1] %v2136
        %v2138 = vld [vmem:[%s992 + $0x10] sm:$0xf]
        %v2139 = vsel %vm995, %v2069, %v2138
        %2140 = vst [vmem:[%s992 + $0x10] sm:$0xf] %v2139
        %v2141 = vld [vmem:[%s992 + $0x14] sm:$0x1]
        %v2142 = vsel %vm1001, %v2070, %v2141
        %2143 = vst [vmem:[%s992 + $0x14] sm:$0x1] %v2142
        %v2144 = vld [vmem:[%s992 + $0x18] sm:$0xf]
        %v2145 = vsel %vm995, %v2077, %v2144
        %2146 = vst [vmem:[%s992 + $0x18] sm:$0xf] %v2145
        %v2147 = vld [vmem:[%s992 + $0x1c] sm:$0x1]
        %v2148 = vsel %vm1001, %v2078, %v2147
        %2149 = vst [vmem:[%s992 + $0x1c] sm:$0x1] %v2148
        %v2150 = vld [vmem:[%s992 + $0x20] sm:$0xf]
        %v2151 = vsel %vm995, %v2085, %v2150
        %2152 = vst [vmem:[%s992 + $0x20] sm:$0xf] %v2151
        %v2153 = vld [vmem:[%s992 + $0x24] sm:$0x1]
        %v2154 = vsel %vm1001, %v2086, %v2153
        %2155 = vst [vmem:[%s992 + $0x24] sm:$0x1] %v2154
        %v2156 = vld [vmem:[%s992 + $0x28] sm:$0xf]
        %v2157 = vsel %vm995, %v2093, %v2156
        %2158 = vst [vmem:[%s992 + $0x28] sm:$0xf] %v2157
        %v2159 = vld [vmem:[%s992 + $0x2c] sm:$0x1]
        %v2160 = vsel %vm1001, %v2094, %v2159
        %2161 = vst [vmem:[%s992 + $0x2c] sm:$0x1] %v2160
        %v2162 = vld [vmem:[%s992 + $0x30] sm:$0xf]
        %v2163 = vsel %vm995, %v2101, %v2162
        %2164 = vst [vmem:[%s992 + $0x30] sm:$0xf] %v2163
        %v2165 = vld [vmem:[%s992 + $0x34] sm:$0x1]
        %v2166 = vsel %vm1001, %v2102, %v2165
        %2167 = vst [vmem:[%s992 + $0x34] sm:$0x1] %v2166
        %v2168 = vld [vmem:[%s992 + $0x38] sm:$0xf]
        %v2169 = vsel %vm995, %v2109, %v2168
        %2170 = vst [vmem:[%s992 + $0x38] sm:$0xf] %v2169
        %v2171 = vld [vmem:[%s992 + $0x3c] sm:$0x1]
        %v2172 = vsel %vm1001, %v2110, %v2171
        %2173 = vst [vmem:[%s992 + $0x3c] sm:$0x1] %v2172
        %v2174 = vld [vmem:[#allocation2] sm:$0xf]
        %v2175 = vld [vmem:[#allocation2 + $0x8] sm:$0xf]
        %v2176 = vld [vmem:[#allocation2 + $0x10] sm:$0xf]
        %v2177 = vld [vmem:[#allocation2 + $0x18] sm:$0xf]
        %v2178 = vld [vmem:[#allocation2 + $0x20] sm:$0xf]
        %v2179 = vld [vmem:[#allocation2 + $0x28] sm:$0xf]
        %v2180 = vld [vmem:[#allocation2 + $0x30] sm:$0xf]
        %v2181 = vld [vmem:[#allocation2 + $0x38] sm:$0xf]
        %v2182 = vld [vmem:[#allocation2 + $0x4] sm:$0x1]
        %v2183 = vld [vmem:[#allocation2 + $0xc] sm:$0x1]
        %v2184 = vld [vmem:[#allocation2 + $0x14] sm:$0x1]
        %v2185 = vld [vmem:[#allocation2 + $0x1c] sm:$0x1]
        %v2186 = vld [vmem:[#allocation2 + $0x24] sm:$0x1]
        %v2187 = vld [vmem:[#allocation2 + $0x2c] sm:$0x1]
        %v2188 = vld [vmem:[#allocation2 + $0x34] sm:$0x1]
        %v2189 = vld [vmem:[#allocation2 + $0x3c] sm:$0x1]
        %v2191 = vshrl.u32 %v2174, 16
        %v2193 = vrot.slane %v2191, 4
        %v2194 = vshll.u32 %v2174, 16
        %v2196 = vrot.slane %v2194, 5
        %v2197 = vor.u32 %v2193, %v2196
        %v2198 = vrot.slane %v2197, 4
        %v2200 = vshll.u32 %v2182, 16
        %v2202 = vrot.slane %v2200, 5
        %v2203 = vsel %vm376, %v2198, %v2202
        %v2205 = vshrl.u32 %v2175, 16
        %v2207 = vrot.slane %v2205, 4
        %v2208 = vshll.u32 %v2175, 16
        %v2210 = vrot.slane %v2208, 5
        %v2211 = vor.u32 %v2207, %v2210
        %v2212 = vrot.slane %v2211, 4
        %v2214 = vshll.u32 %v2183, 16
        %v2216 = vrot.slane %v2214, 5
        %v2217 = vsel %vm376, %v2212, %v2216
        %v2219 = vshrl.u32 %v2176, 16
        %v2221 = vrot.slane %v2219, 4
        %v2222 = vshll.u32 %v2176, 16
        %v2224 = vrot.slane %v2222, 5
        %v2225 = vor.u32 %v2221, %v2224
        %v2226 = vrot.slane %v2225, 4
        %v2228 = vshll.u32 %v2184, 16
        %v2230 = vrot.slane %v2228, 5
        %v2231 = vsel %vm376, %v2226, %v2230
        %v2233 = vshrl.u32 %v2177, 16
        %v2235 = vrot.slane %v2233, 4
        %v2236 = vshll.u32 %v2177, 16
        %v2238 = vrot.slane %v2236, 5
        %v2239 = vor.u32 %v2235, %v2238
        %v2240 = vrot.slane %v2239, 4
        %v2242 = vshll.u32 %v2185, 16
        %v2244 = vrot.slane %v2242, 5
        %v2245 = vsel %vm376, %v2240, %v2244
        %v2247 = vshrl.u32 %v2178, 16
        %v2249 = vrot.slane %v2247, 4
        %v2250 = vshll.u32 %v2178, 16
        %v2252 = vrot.slane %v2250, 5
        %v2253 = vor.u32 %v2249, %v2252
        %v2254 = vrot.slane %v2253, 4
        %v2256 = vshll.u32 %v2186, 16
        %v2258 = vrot.slane %v2256, 5
        %v2259 = vsel %vm376, %v2254, %v2258
        %v2261 = vshrl.u32 %v2179, 16
        %v2263 = vrot.slane %v2261, 4
        %v2264 = vshll.u32 %v2179, 16
        %v2266 = vrot.slane %v2264, 5
        %v2267 = vor.u32 %v2263, %v2266
        %v2268 = vrot.slane %v2267, 4
        %v2270 = vshll.u32 %v2187, 16
        %v2272 = vrot.slane %v2270, 5
        %v2273 = vsel %vm376, %v2268, %v2272
        %v2275 = vshrl.u32 %v2180, 16
        %v2277 = vrot.slane %v2275, 4
        %v2278 = vshll.u32 %v2180, 16
        %v2280 = vrot.slane %v2278, 5
        %v2281 = vor.u32 %v2277, %v2280
        %v2282 = vrot.slane %v2281, 4
        %v2284 = vshll.u32 %v2188, 16
        %v2286 = vrot.slane %v2284, 5
        %v2287 = vsel %vm376, %v2282, %v2286
        %v2289 = vshrl.u32 %v2181, 16
        %v2291 = vrot.slane %v2289, 4
        %v2292 = vshll.u32 %v2181, 16
        %v2294 = vrot.slane %v2292, 5
        %v2295 = vor.u32 %v2291, %v2294
        %v2296 = vrot.slane %v2295, 4
        %v2298 = vshll.u32 %v2189, 16
        %v2300 = vrot.slane %v2298, 5
        %v2301 = vsel %vm376, %v2296, %v2300
        %v2302 = vld [vmem:[#allocation2] sm:$0xe]
        %v2303 = vld [vmem:[#allocation2 + $0x8] sm:$0xe]
        %v2304 = vld [vmem:[#allocation2 + $0x10] sm:$0xe]
        %v2305 = vld [vmem:[#allocation2 + $0x18] sm:$0xe]
        %v2306 = vld [vmem:[#allocation2 + $0x20] sm:$0xe]
        %v2307 = vld [vmem:[#allocation2 + $0x28] sm:$0xe]
        %v2308 = vld [vmem:[#allocation2 + $0x30] sm:$0xe]
        %v2309 = vld [vmem:[#allocation2 + $0x38] sm:$0xe]
        %v2326 = vrot.slane %v2302, 5
        %v2327 = vrot.slane %v2326, 4
        %v2328 = vrot.slane %v2182, 5
        %v2329 = vsel %vm507, %v2327, %v2328
        %v2330 = vrot.slane %v2303, 5
        %v2331 = vrot.slane %v2330, 4
        %v2332 = vrot.slane %v2183, 5
        %v2333 = vsel %vm507, %v2331, %v2332
        %v2334 = vrot.slane %v2304, 5
        %v2335 = vrot.slane %v2334, 4
        %v2336 = vrot.slane %v2184, 5
        %v2337 = vsel %vm507, %v2335, %v2336
        %v2338 = vrot.slane %v2305, 5
        %v2339 = vrot.slane %v2338, 4
        %v2340 = vrot.slane %v2185, 5
        %v2341 = vsel %vm507, %v2339, %v2340
        %v2342 = vrot.slane %v2306, 5
        %v2343 = vrot.slane %v2342, 4
        %v2344 = vrot.slane %v2186, 5
        %v2345 = vsel %vm507, %v2343, %v2344
        %v2346 = vrot.slane %v2307, 5
        %v2347 = vrot.slane %v2346, 4
        %v2348 = vrot.slane %v2187, 5
        %v2349 = vsel %vm507, %v2347, %v2348
        %v2350 = vrot.slane %v2308, 5
        %v2351 = vrot.slane %v2350, 4
        %v2352 = vrot.slane %v2188, 5
        %v2353 = vsel %vm507, %v2351, %v2352
        %v2354 = vrot.slane %v2309, 5
        %v2355 = vrot.slane %v2354, 4
        %v2356 = vrot.slane %v2189, 5
        %v2357 = vsel %vm507, %v2355, %v2356
        %v2358 = vld [vmem:[%s992] sm:$0xf]
        %v2359 = vld [vmem:[%s992 + $0x8] sm:$0xf]
        %v2360 = vld [vmem:[%s992 + $0x10] sm:$0xf]
        %v2361 = vld [vmem:[%s992 + $0x18] sm:$0xf]
        %v2362 = vld [vmem:[%s992 + $0x20] sm:$0xf]
        %v2363 = vld [vmem:[%s992 + $0x28] sm:$0xf]
        %v2364 = vld [vmem:[%s992 + $0x30] sm:$0xf]
        %v2365 = vld [vmem:[%s992 + $0x38] sm:$0xf]
        %v2366 = vld [vmem:[%s992 + $0x4] sm:$0x1]
        %v2367 = vld [vmem:[%s992 + $0xc] sm:$0x1]
        %v2368 = vld [vmem:[%s992 + $0x14] sm:$0x1]
        %v2369 = vld [vmem:[%s992 + $0x1c] sm:$0x1]
        %v2370 = vld [vmem:[%s992 + $0x24] sm:$0x1]
        %v2371 = vld [vmem:[%s992 + $0x2c] sm:$0x1]
        %v2372 = vld [vmem:[%s992 + $0x34] sm:$0x1]
        %v2373 = vld [vmem:[%s992 + $0x3c] sm:$0x1]
        %v2375 = vshrl.u32 %v2358, 16
        %v2377 = vrot.slane %v2375, 4
        %v2378 = vshll.u32 %v2358, 16
        %v2380 = vrot.slane %v2378, 5
        %v2381 = vor.u32 %v2377, %v2380
        %v2382 = vrot.slane %v2381, 4
        %v2384 = vshll.u32 %v2366, 16
        %v2386 = vrot.slane %v2384, 5
        %v2387 = vsel %vm376, %v2382, %v2386
        %v2389 = vshrl.u32 %v2359, 16
        %v2391 = vrot.slane %v2389, 4
        %v2392 = vshll.u32 %v2359, 16
        %v2394 = vrot.slane %v2392, 5
        %v2395 = vor.u32 %v2391, %v2394
        %v2396 = vrot.slane %v2395, 4
        %v2398 = vshll.u32 %v2367, 16
        %v2400 = vrot.slane %v2398, 5
        %v2401 = vsel %vm376, %v2396, %v2400
        %v2403 = vshrl.u32 %v2360, 16
        %v2405 = vrot.slane %v2403, 4
        %v2406 = vshll.u32 %v2360, 16
        %v2408 = vrot.slane %v2406, 5
        %v2409 = vor.u32 %v2405, %v2408
        %v2410 = vrot.slane %v2409, 4
        %v2412 = vshll.u32 %v2368, 16
        %v2414 = vrot.slane %v2412, 5
        %v2415 = vsel %vm376, %v2410, %v2414
        %v2417 = vshrl.u32 %v2361, 16
        %v2419 = vrot.slane %v2417, 4
        %v2420 = vshll.u32 %v2361, 16
        %v2422 = vrot.slane %v2420, 5
        %v2423 = vor.u32 %v2419, %v2422
        %v2424 = vrot.slane %v2423, 4
        %v2426 = vshll.u32 %v2369, 16
        %v2428 = vrot.slane %v2426, 5
        %v2429 = vsel %vm376, %v2424, %v2428
        %v2431 = vshrl.u32 %v2362, 16
        %v2433 = vrot.slane %v2431, 4
        %v2434 = vshll.u32 %v2362, 16
        %v2436 = vrot.slane %v2434, 5
        %v2437 = vor.u32 %v2433, %v2436
        %v2438 = vrot.slane %v2437, 4
        %v2440 = vshll.u32 %v2370, 16
        %v2442 = vrot.slane %v2440, 5
        %v2443 = vsel %vm376, %v2438, %v2442
        %v2445 = vshrl.u32 %v2363, 16
        %v2447 = vrot.slane %v2445, 4
        %v2448 = vshll.u32 %v2363, 16
        %v2450 = vrot.slane %v2448, 5
        %v2451 = vor.u32 %v2447, %v2450
        %v2452 = vrot.slane %v2451, 4
        %v2454 = vshll.u32 %v2371, 16
        %v2456 = vrot.slane %v2454, 5
        %v2457 = vsel %vm376, %v2452, %v2456
        %v2459 = vshrl.u32 %v2364, 16
        %v2461 = vrot.slane %v2459, 4
        %v2462 = vshll.u32 %v2364, 16
        %v2464 = vrot.slane %v2462, 5
        %v2465 = vor.u32 %v2461, %v2464
        %v2466 = vrot.slane %v2465, 4
        %v2468 = vshll.u32 %v2372, 16
        %v2470 = vrot.slane %v2468, 5
        %v2471 = vsel %vm376, %v2466, %v2470
        %v2473 = vshrl.u32 %v2365, 16
        %v2475 = vrot.slane %v2473, 4
        %v2476 = vshll.u32 %v2365, 16
        %v2478 = vrot.slane %v2476, 5
        %v2479 = vor.u32 %v2475, %v2478
        %v2480 = vrot.slane %v2479, 4
        %v2482 = vshll.u32 %v2373, 16
        %v2484 = vrot.slane %v2482, 5
        %v2485 = vsel %vm376, %v2480, %v2484
        %v2486 = vld [vmem:[%s992] sm:$0xe]
        %v2487 = vld [vmem:[%s992 + $0x8] sm:$0xe]
        %v2488 = vld [vmem:[%s992 + $0x10] sm:$0xe]
        %v2489 = vld [vmem:[%s992 + $0x18] sm:$0xe]
        %v2490 = vld [vmem:[%s992 + $0x20] sm:$0xe]
        %v2491 = vld [vmem:[%s992 + $0x28] sm:$0xe]
        %v2492 = vld [vmem:[%s992 + $0x30] sm:$0xe]
        %v2493 = vld [vmem:[%s992 + $0x38] sm:$0xe]
        %v2510 = vrot.slane %v2486, 5
        %v2511 = vrot.slane %v2510, 4
        %v2512 = vrot.slane %v2366, 5
        %v2513 = vsel %vm507, %v2511, %v2512
        %v2514 = vrot.slane %v2487, 5
        %v2515 = vrot.slane %v2514, 4
        %v2516 = vrot.slane %v2367, 5
        %v2517 = vsel %vm507, %v2515, %v2516
        %v2518 = vrot.slane %v2488, 5
        %v2519 = vrot.slane %v2518, 4
        %v2520 = vrot.slane %v2368, 5
        %v2521 = vsel %vm507, %v2519, %v2520
        %v2522 = vrot.slane %v2489, 5
        %v2523 = vrot.slane %v2522, 4
        %v2524 = vrot.slane %v2369, 5
        %v2525 = vsel %vm507, %v2523, %v2524
        %v2526 = vrot.slane %v2490, 5
        %v2527 = vrot.slane %v2526, 4
        %v2528 = vrot.slane %v2370, 5
        %v2529 = vsel %vm507, %v2527, %v2528
        %v2530 = vrot.slane %v2491, 5
        %v2531 = vrot.slane %v2530, 4
        %v2532 = vrot.slane %v2371, 5
        %v2533 = vsel %vm507, %v2531, %v2532
        %v2534 = vrot.slane %v2492, 5
        %v2535 = vrot.slane %v2534, 4
        %v2536 = vrot.slane %v2372, 5
        %v2537 = vsel %vm507, %v2535, %v2536
        %v2538 = vrot.slane %v2493, 5
        %v2539 = vrot.slane %v2538, 4
        %v2540 = vrot.slane %v2373, 5
        %v2541 = vsel %vm507, %v2539, %v2540
        %v2542 = vld [vmem:[%s1415] sm:$0xf]
        %v2543 = vld [vmem:[%s1415 + $0x8] sm:$0xf]
        %v2544 = vld [vmem:[%s1415 + $0x10] sm:$0xf]
        %v2545 = vld [vmem:[%s1415 + $0x18] sm:$0xf]
        %v2546 = vld [vmem:[%s1415 + $0x20] sm:$0xf]
        %v2547 = vld [vmem:[%s1415 + $0x28] sm:$0xf]
        %v2548 = vld [vmem:[%s1415 + $0x30] sm:$0xf]
        %v2549 = vld [vmem:[%s1415 + $0x38] sm:$0xf]
        %v2550 = vld [vmem:[%s1415 + $0x4] sm:$0x1]
        %v2551 = vld [vmem:[%s1415 + $0xc] sm:$0x1]
        %v2552 = vld [vmem:[%s1415 + $0x14] sm:$0x1]
        %v2553 = vld [vmem:[%s1415 + $0x1c] sm:$0x1]
        %v2554 = vld [vmem:[%s1415 + $0x24] sm:$0x1]
        %v2555 = vld [vmem:[%s1415 + $0x2c] sm:$0x1]
        %v2556 = vld [vmem:[%s1415 + $0x34] sm:$0x1]
        %v2557 = vld [vmem:[%s1415 + $0x3c] sm:$0x1]
        %v2559 = vshrl.u32 %v2542, 16
        %v2561 = vrot.slane %v2559, 4
        %v2562 = vshll.u32 %v2542, 16
        %v2564 = vrot.slane %v2562, 5
        %v2565 = vor.u32 %v2561, %v2564
        %v2566 = vrot.slane %v2565, 4
        %v2568 = vshll.u32 %v2550, 16
        %v2570 = vrot.slane %v2568, 5
        %v2571 = vsel %vm376, %v2566, %v2570
        %v2573 = vshrl.u32 %v2543, 16
        %v2575 = vrot.slane %v2573, 4
        %v2576 = vshll.u32 %v2543, 16
        %v2578 = vrot.slane %v2576, 5
        %v2579 = vor.u32 %v2575, %v2578
        %v2580 = vrot.slane %v2579, 4
        %v2582 = vshll.u32 %v2551, 16
        %v2584 = vrot.slane %v2582, 5
        %v2585 = vsel %vm376, %v2580, %v2584
        %v2587 = vshrl.u32 %v2544, 16
        %v2589 = vrot.slane %v2587, 4
        %v2590 = vshll.u32 %v2544, 16
        %v2592 = vrot.slane %v2590, 5
        %v2593 = vor.u32 %v2589, %v2592
        %v2594 = vrot.slane %v2593, 4
        %v2596 = vshll.u32 %v2552, 16
        %v2598 = vrot.slane %v2596, 5
        %v2599 = vsel %vm376, %v2594, %v2598
        %v2601 = vshrl.u32 %v2545, 16
        %v2603 = vrot.slane %v2601, 4
        %v2604 = vshll.u32 %v2545, 16
        %v2606 = vrot.slane %v2604, 5
        %v2607 = vor.u32 %v2603, %v2606
        %v2608 = vrot.slane %v2607, 4
        %v2610 = vshll.u32 %v2553, 16
        %v2612 = vrot.slane %v2610, 5
        %v2613 = vsel %vm376, %v2608, %v2612
        %v2615 = vshrl.u32 %v2546, 16
        %v2617 = vrot.slane %v2615, 4
        %v2618 = vshll.u32 %v2546, 16
        %v2620 = vrot.slane %v2618, 5
        %v2621 = vor.u32 %v2617, %v2620
        %v2622 = vrot.slane %v2621, 4
        %v2624 = vshll.u32 %v2554, 16
        %v2626 = vrot.slane %v2624, 5
        %v2627 = vsel %vm376, %v2622, %v2626
        %v2629 = vshrl.u32 %v2547, 16
        %v2631 = vrot.slane %v2629, 4
        %v2632 = vshll.u32 %v2547, 16
        %v2634 = vrot.slane %v2632, 5
        %v2635 = vor.u32 %v2631, %v2634
        %v2636 = vrot.slane %v2635, 4
        %v2638 = vshll.u32 %v2555, 16
        %v2640 = vrot.slane %v2638, 5
        %v2641 = vsel %vm376, %v2636, %v2640
        %v2643 = vshrl.u32 %v2548, 16
        %v2645 = vrot.slane %v2643, 4
        %v2646 = vshll.u32 %v2548, 16
        %v2648 = vrot.slane %v2646, 5
        %v2649 = vor.u32 %v2645, %v2648
        %v2650 = vrot.slane %v2649, 4
        %v2652 = vshll.u32 %v2556, 16
        %v2654 = vrot.slane %v2652, 5
        %v2655 = vsel %vm376, %v2650, %v2654
        %v2657 = vshrl.u32 %v2549, 16
        %v2659 = vrot.slane %v2657, 4
        %v2660 = vshll.u32 %v2549, 16
        %v2662 = vrot.slane %v2660, 5
        %v2663 = vor.u32 %v2659, %v2662
        %v2664 = vrot.slane %v2663, 4
        %v2666 = vshll.u32 %v2557, 16
        %v2668 = vrot.slane %v2666, 5
        %v2669 = vsel %vm376, %v2664, %v2668
        %v2670 = vld [vmem:[%s1415] sm:$0xe]
        %v2671 = vld [vmem:[%s1415 + $0x8] sm:$0xe]
        %v2672 = vld [vmem:[%s1415 + $0x10] sm:$0xe]
        %v2673 = vld [vmem:[%s1415 + $0x18] sm:$0xe]
        %v2674 = vld [vmem:[%s1415 + $0x20] sm:$0xe]
        %v2675 = vld [vmem:[%s1415 + $0x28] sm:$0xe]
        %v2676 = vld [vmem:[%s1415 + $0x30] sm:$0xe]
        %v2677 = vld [vmem:[%s1415 + $0x38] sm:$0xe]
        %v2694 = vrot.slane %v2670, 5
        %v2695 = vrot.slane %v2694, 4
        %v2696 = vrot.slane %v2550, 5
        %v2697 = vsel %vm507, %v2695, %v2696
        %v2698 = vrot.slane %v2671, 5
        %v2699 = vrot.slane %v2698, 4
        %v2700 = vrot.slane %v2551, 5
        %v2701 = vsel %vm507, %v2699, %v2700
        %v2702 = vrot.slane %v2672, 5
        %v2703 = vrot.slane %v2702, 4
        %v2704 = vrot.slane %v2552, 5
        %v2705 = vsel %vm507, %v2703, %v2704
        %v2706 = vrot.slane %v2673, 5
        %v2707 = vrot.slane %v2706, 4
        %v2708 = vrot.slane %v2553, 5
        %v2709 = vsel %vm507, %v2707, %v2708
        %v2710 = vrot.slane %v2674, 5
        %v2711 = vrot.slane %v2710, 4
        %v2712 = vrot.slane %v2554, 5
        %v2713 = vsel %vm507, %v2711, %v2712
        %v2714 = vrot.slane %v2675, 5
        %v2715 = vrot.slane %v2714, 4
        %v2716 = vrot.slane %v2555, 5
        %v2717 = vsel %vm507, %v2715, %v2716
        %v2718 = vrot.slane %v2676, 5
        %v2719 = vrot.slane %v2718, 4
        %v2720 = vrot.slane %v2556, 5
        %v2721 = vsel %vm507, %v2719, %v2720
        %v2722 = vrot.slane %v2677, 5
        %v2723 = vrot.slane %v2722, 4
        %v2724 = vrot.slane %v2557, 5
        %v2725 = vsel %vm507, %v2723, %v2724
        %v2734 = vunpack.c.l.b16 %v2174
        %v2735 = vunpack.c.l.b16 %v2175
        %v2736 = vunpack.c.l.b16 %v2176
        %v2737 = vunpack.c.l.b16 %v2177
        %v2738 = vunpack.c.l.b16 %v2178
        %v2739 = vunpack.c.l.b16 %v2179
        %v2740 = vunpack.c.l.b16 %v2180
        %v2741 = vunpack.c.l.b16 %v2181
        %v2742 = vpack.c.b16 %v2735, %v2734
        %v2743 = vpack.c.b16 %v2737, %v2736
        %v2744 = vpack.c.b16 %v2739, %v2738
        %v2745 = vpack.c.b16 %v2741, %v2740
        %v2746 = vunpack.c.l.b16 %v2203
        %v2747 = vunpack.c.l.b16 %v2217
        %v2748 = vunpack.c.l.b16 %v2231
        %v2749 = vunpack.c.l.b16 %v2245
        %v2750 = vunpack.c.l.b16 %v2259
        %v2751 = vunpack.c.l.b16 %v2273
        %v2752 = vunpack.c.l.b16 %v2287
        %v2753 = vunpack.c.l.b16 %v2301
        %v2754 = vpack.c.b16 %v2747, %v2746
        %v2755 = vpack.c.b16 %v2749, %v2748
        %v2756 = vpack.c.b16 %v2751, %v2750
        %v2757 = vpack.c.b16 %v2753, %v2752
        %2758 = vrot.lane.b32.xlu0 %v2754, 16
        %v2759 = vpop.permute.xlu0 %2758
        %2760 = vrot.lane.b32.xlu0 %v2755, 16
        %v2761 = vpop.permute.xlu0 %2760
        %2762 = vrot.lane.b32.xlu0 %v2756, 16
        %v2763 = vpop.permute.xlu0 %2762
        %2764 = vrot.lane.b32.xlu0 %v2757, 16
        %v2765 = vpop.permute.xlu0 %2764
        %v2766 = vunpack.c.l.b16 %v2329
        %v2767 = vunpack.c.l.b16 %v2333
        %v2768 = vunpack.c.l.b16 %v2337
        %v2769 = vunpack.c.l.b16 %v2341
        %v2770 = vunpack.c.l.b16 %v2345
        %v2771 = vunpack.c.l.b16 %v2349
        %v2772 = vunpack.c.l.b16 %v2353
        %v2773 = vunpack.c.l.b16 %v2357
        %v2774 = vpack.c.b16 %v2767, %v2766
        %v2775 = vpack.c.b16 %v2769, %v2768
        %v2776 = vpack.c.b16 %v2771, %v2770
        %v2777 = vpack.c.b16 %v2773, %v2772
        %2778 = vrot.lane.b32.xlu0 %v2774, 32
        %v2779 = vpop.permute.xlu0 %2778
        %2780 = vrot.lane.b32.xlu0 %v2775, 32
        %v2781 = vpop.permute.xlu0 %2780
        %2782 = vrot.lane.b32.xlu0 %v2776, 32
        %v2783 = vpop.permute.xlu0 %2782
        %2784 = vrot.lane.b32.xlu0 %v2777, 32
        %v2785 = vpop.permute.xlu0 %2784
        %v2794 = vunpack.c.l.b16 %v2358
        %v2795 = vunpack.c.l.b16 %v2359
        %v2796 = vunpack.c.l.b16 %v2360
        %v2797 = vunpack.c.l.b16 %v2361
        %v2798 = vunpack.c.l.b16 %v2362
        %v2799 = vunpack.c.l.b16 %v2363
        %v2800 = vunpack.c.l.b16 %v2364
        %v2801 = vunpack.c.l.b16 %v2365
        %v2802 = vpack.c.b16 %v2795, %v2794
        %v2803 = vpack.c.b16 %v2797, %v2796
        %v2804 = vpack.c.b16 %v2799, %v2798
        %v2805 = vpack.c.b16 %v2801, %v2800
        %2806 = vrot.lane.b32.xlu0 %v2802, 48
        %v2807 = vpop.permute.xlu0 %2806
        %2808 = vrot.lane.b32.xlu0 %v2803, 48
        %v2809 = vpop.permute.xlu0 %2808
        %2810 = vrot.lane.b32.xlu0 %v2804, 48
        %v2811 = vpop.permute.xlu0 %2810
        %2812 = vrot.lane.b32.xlu0 %v2805, 48
        %v2813 = vpop.permute.xlu0 %2812
        %v2814 = vunpack.c.l.b16 %v2387
        %v2815 = vunpack.c.l.b16 %v2401
        %v2816 = vunpack.c.l.b16 %v2415
        %v2817 = vunpack.c.l.b16 %v2429
        %v2818 = vunpack.c.l.b16 %v2443
        %v2819 = vunpack.c.l.b16 %v2457
        %v2820 = vunpack.c.l.b16 %v2471
        %v2821 = vunpack.c.l.b16 %v2485
        %v2822 = vpack.c.b16 %v2815, %v2814
        %v2823 = vpack.c.b16 %v2817, %v2816
        %v2824 = vpack.c.b16 %v2819, %v2818
        %v2825 = vpack.c.b16 %v2821, %v2820
        %2826 = vrot.lane.b32.xlu0 %v2822, 64
        %v2827 = vpop.permute.xlu0 %2826
        %2828 = vrot.lane.b32.xlu0 %v2823, 64
        %v2829 = vpop.permute.xlu0 %2828
        %2830 = vrot.lane.b32.xlu0 %v2824, 64
        %v2831 = vpop.permute.xlu0 %2830
        %2832 = vrot.lane.b32.xlu0 %v2825, 64
        %v2833 = vpop.permute.xlu0 %2832
        %v2834 = vunpack.c.l.b16 %v2513
        %v2835 = vunpack.c.l.b16 %v2517
        %v2836 = vunpack.c.l.b16 %v2521
        %v2837 = vunpack.c.l.b16 %v2525
        %v2838 = vunpack.c.l.b16 %v2529
        %v2839 = vunpack.c.l.b16 %v2533
        %v2840 = vunpack.c.l.b16 %v2537
        %v2841 = vunpack.c.l.b16 %v2541
        %v2842 = vpack.c.b16 %v2835, %v2834
        %v2843 = vpack.c.b16 %v2837, %v2836
        %v2844 = vpack.c.b16 %v2839, %v2838
        %v2845 = vpack.c.b16 %v2841, %v2840
        %2846 = vrot.lane.b32.xlu0 %v2842, 80
        %v2847 = vpop.permute.xlu0 %2846
        %2848 = vrot.lane.b32.xlu0 %v2843, 80
        %v2849 = vpop.permute.xlu0 %2848
        %2850 = vrot.lane.b32.xlu0 %v2844, 80
        %v2851 = vpop.permute.xlu0 %2850
        %2852 = vrot.lane.b32.xlu0 %v2845, 80
        %v2853 = vpop.permute.xlu0 %2852
        %v2862 = vunpack.c.l.b16 %v2542
        %v2863 = vunpack.c.l.b16 %v2543
        %v2864 = vunpack.c.l.b16 %v2544
        %v2865 = vunpack.c.l.b16 %v2545
        %v2866 = vunpack.c.l.b16 %v2546
        %v2867 = vunpack.c.l.b16 %v2547
        %v2868 = vunpack.c.l.b16 %v2548
        %v2869 = vunpack.c.l.b16 %v2549
        %v2870 = vpack.c.b16 %v2863, %v2862
        %v2871 = vpack.c.b16 %v2865, %v2864
        %v2872 = vpack.c.b16 %v2867, %v2866
        %v2873 = vpack.c.b16 %v2869, %v2868
        %2874 = vrot.lane.b32.xlu0 %v2870, 96
        %v2875 = vpop.permute.xlu0 %2874
        %2876 = vrot.lane.b32.xlu0 %v2871, 96
        %v2877 = vpop.permute.xlu0 %2876
        %2878 = vrot.lane.b32.xlu0 %v2872, 96
        %v2879 = vpop.permute.xlu0 %2878
        %2880 = vrot.lane.b32.xlu0 %v2873, 96
        %v2881 = vpop.permute.xlu0 %2880
        %v2882 = vunpack.c.l.b16 %v2571
        %v2883 = vunpack.c.l.b16 %v2585
        %v2884 = vunpack.c.l.b16 %v2599
        %v2885 = vunpack.c.l.b16 %v2613
        %v2886 = vunpack.c.l.b16 %v2627
        %v2887 = vunpack.c.l.b16 %v2641
        %v2888 = vunpack.c.l.b16 %v2655
        %v2889 = vunpack.c.l.b16 %v2669
        %v2890 = vpack.c.b16 %v2883, %v2882
        %v2891 = vpack.c.b16 %v2885, %v2884
        %v2892 = vpack.c.b16 %v2887, %v2886
        %v2893 = vpack.c.b16 %v2889, %v2888
        %2894 = vrot.lane.b32.xlu0 %v2890, 112
        %v2895 = vpop.permute.xlu0 %2894
        %2896 = vrot.lane.b32.xlu0 %v2891, 112
        %v2897 = vpop.permute.xlu0 %2896
        %2898 = vrot.lane.b32.xlu0 %v2892, 112
        %v2899 = vpop.permute.xlu0 %2898
        %2900 = vrot.lane.b32.xlu0 %v2893, 112
        %v2901 = vpop.permute.xlu0 %2900
        %v2902 = vunpack.c.l.b16 %v2697
        %v2903 = vunpack.c.l.b16 %v2701
        %v2904 = vunpack.c.l.b16 %v2705
        %v2905 = vunpack.c.l.b16 %v2709
        %v2906 = vunpack.c.l.b16 %v2713
        %v2907 = vunpack.c.l.b16 %v2717
        %v2908 = vunpack.c.l.b16 %v2721
        %v2909 = vunpack.c.l.b16 %v2725
        %v2910 = vpack.c.b16 %v2903, %v2902
        %v2911 = vpack.c.b16 %v2905, %v2904
        %v2912 = vpack.c.b16 %v2907, %v2906
        %v2913 = vpack.c.b16 %v2909, %v2908
        %v2916 = vsel %vm1788, %v2742, %v2759
        %v2919 = vsel %vm1788, %v2743, %v2761
        %v2922 = vsel %vm1788, %v2744, %v2763
        %v2925 = vsel %vm1788, %v2745, %v2765
        %v2927 = vsel %vm1801, %v2916, %v2779
        %v2929 = vsel %vm1801, %v2919, %v2781
        %v2931 = vsel %vm1801, %v2922, %v2783
        %v2933 = vsel %vm1801, %v2925, %v2785
        %v2935 = vsel %vm1810, %v2927, %v2807
        %v2937 = vsel %vm1810, %v2929, %v2809
        %v2939 = vsel %vm1810, %v2931, %v2811
        %v2941 = vsel %vm1810, %v2933, %v2813
        %v2943 = vsel %vm1819, %v2935, %v2827
        %v2945 = vsel %vm1819, %v2937, %v2829
        %v2947 = vsel %vm1819, %v2939, %v2831
        %v2949 = vsel %vm1819, %v2941, %v2833
        %v2951 = vsel %vm1828, %v2943, %v2847
        %v2953 = vsel %vm1828, %v2945, %v2849
        %v2955 = vsel %vm1828, %v2947, %v2851
        %v2957 = vsel %vm1828, %v2949, %v2853
        %v2959 = vsel %vm1837, %v2951, %v2875
        %v2961 = vsel %vm1837, %v2953, %v2877
        %v2963 = vsel %vm1837, %v2955, %v2879
        %v2965 = vsel %vm1837, %v2957, %v2881
        %v2967 = vsel %vm1846, %v2959, %v2895
        %v2970 = vsel %vm1846, %v2961, %v2897
        %v2973 = vsel %vm1846, %v2963, %v2899
        %v2976 = vsel %vm1846, %v2965, %v2901
        %v2978 = vld [vmem:[%s5] sm:$0xf]
        %v2979 = vld [vmem:[%s5 + $0x4] sm:$0xf]
        %v2980 = vld [vmem:[%s5 + $0x8] sm:$0xf]
        %v2981 = vld [vmem:[%s5 + $0xc] sm:$0xf]
        %v2982 = vld [vmem:[%s5 + $0x10] sm:$0xf]
        %v2983 = vld [vmem:[%s5 + $0x14] sm:$0xf]
        %v2984 = vld [vmem:[%s5 + $0x18] sm:$0xf]
        %v2985 = vld [vmem:[%s5 + $0x1c] sm:$0xf]
        %v2986 = vld [vmem:[%s5 + $0x20] sm:$0xf]
        %v2987 = vld [vmem:[%s5 + $0x24] sm:$0xf]
        %v2988 = vld [vmem:[%s5 + $0x28] sm:$0xf]
        %v2989 = vld [vmem:[%s5 + $0x2c] sm:$0xf]
        %v2990 = vld [vmem:[%s5 + $0x30] sm:$0xf]
        %v2991 = vld [vmem:[%s5 + $0x34] sm:$0xf]
        %v2992 = vld [vmem:[%s5 + $0x38] sm:$0xf]
        %v2993 = vld [vmem:[%s5 + $0x3c] sm:$0xf]
        %v2994 = vld [vmem:[%s5 + $0x40] sm:$0xf]
        %v2995 = vld [vmem:[%s5 + $0x44] sm:$0xf]
        %v2996 = vld [vmem:[%s6] sm:$0x1]
        %v2998 = vlaneseq
        %v2999 = vshrl.u32 %v2998, 7
        %v3000 = vsub.s32 0, %v2999
        %v3001 = vrot.slane %v2996, %v3000
        %v3021 = vunpack.c.l.b16 %v2978
        %v3022 = vunpack.c.l.b16 %v2979
        %v3023 = vunpack.c.l.b16 %v2980
        %v3024 = vunpack.c.l.b16 %v2981
        %v3025 = vunpack.c.l.b16 %v2982
        %v3026 = vunpack.c.l.b16 %v2983
        %v3027 = vunpack.c.l.b16 %v2984
        %v3028 = vunpack.c.l.b16 %v2985
        %v3029 = vunpack.c.l.b16 %v2986
        %v3030 = vunpack.c.l.b16 %v2987
        %v3031 = vunpack.c.l.b16 %v2988
        %v3032 = vunpack.c.l.b16 %v2989
        %v3033 = vunpack.c.l.b16 %v2990
        %v3034 = vunpack.c.l.b16 %v2991
        %v3035 = vunpack.c.l.b16 %v2992
        %v3036 = vunpack.c.l.b16 %v2993
        %v3037 = vunpack.c.l.b16 %v2994
        %v3038 = vunpack.c.l.b16 %v2995
        %v3039 = vpack.c.b16 %v3022, %v3021
        %v3040 = vpack.c.b16 %v3024, %v3023
        %v3041 = vpack.c.b16 %v3026, %v3025
        %v3042 = vpack.c.b16 %v3028, %v3027
        %v3043 = vpack.c.b16 %v3030, %v3029
        %v3044 = vpack.c.b16 %v3032, %v3031
        %v3045 = vpack.c.b16 %v3034, %v3033
        %v3046 = vpack.c.b16 %v3036, %v3035
        %v3047 = vpack.c.b16 %v3038, %v3037
        %v3058 = vsel %vm1788, %v2910, 0
        %v3061 = vsel %vm1788, %v2911, 0
        %v3064 = vsel %vm1788, %v2912, 0
        %v3067 = vsel %vm1788, %v2913, 0
        %3069 = vmatprep.subr.bf16.mxu0 0
        %3070 = vmatpush1.bf16.msra.mxu0 %v3046
        %3071 = vmatprep.subr.bf16.mxu0 0
        %3072 = vmatpush1.bf16.msra.mxu0 %v3045
        %3073 = vmatprep.subr.bf16.mxu0 0
        %3074 = vmatpush1.bf16.msra.mxu0 %v3044
        %3075 = vmatprep.subr.bf16.mxu0 0
        %3076 = vmatpush1.bf16.msra.mxu0 %v3043
        %3077 = vmatprep.subr.bf16.mxu0 0
        %3078 = vmatpush1.bf16.msra.mxu0 %v3042
        %3079 = vmatprep.subr.bf16.mxu0 0
        %3080 = vmatpush1.bf16.msra.mxu0 %v3041
        %3081 = vmatprep.subr.bf16.mxu0 0
        %3082 = vmatpush1.bf16.msra.mxu0 %v3040
        %3083 = vmatprep.subr.bf16.mxu0 0
        %3084 = vmatpush1.bf16.msra.mxu0 %v3039
        %3085 = vmatprep.subr.bf16.mxu0 0
        %3086 = vmatpush2.bf16.msra.mxu0 0
        %3087 = vmatprep.subr.bf16.mxu0 0
        %3088 = vmatpush2.bf16.msra.mxu0 0
        %3089 = vmatprep.subr.bf16.mxu0 0
        %3090 = vmatpush2.bf16.msra.mxu0 0
        %3091 = vmatprep.subr.bf16.mxu0 0
        %3092 = vmatpush2.bf16.msra.mxu0 0
        %3093 = vmatprep.subr.bf16.mxu0 0
        %3094 = vmatpush2.bf16.msra.mxu0 0
        %3095 = vmatprep.subr.bf16.mxu0 0
        %3096 = vmatpush2.bf16.msra.mxu0 0
        %3097 = vmatprep.subr.bf16.mxu0 0
        %3098 = vmatpush2.bf16.msra.mxu0 0
        %3099 = vmatprep.subr.bf16.mxu0 0
        %3100 = vmatpush2.bf16.msra.mxu0 %v3047
        %3101 = vmatprep.mubr.bf16.mxu0 %v3058
        %3102 = vmatmul.mubr.bf16.gmra.mxu0 %v2967
        %v3103 = vpop.f32.mrf.mxu0
        %v3104 = vadd.f32 %v3001, %v3103
        %v3105 = vpop.f32.mrf.mxu0
        %v3106 = vpop.f32.mrf.mxu0
        %v3107 = vadd.f32 %v3001, %v3106
        %v3108 = vpop.f32.mrf.mxu0
        %3109 = vmatprep.mubr.bf16.mxu0 %v3061
        %3110 = vmatmul.mubr.bf16.gmra.mxu0 %v2970
        %v3111 = vpop.f32.mrf.mxu0
        %v3112 = vadd.f32 %v3001, %v3111
        %v3113 = vpop.f32.mrf.mxu0
        %v3114 = vpop.f32.mrf.mxu0
        %v3115 = vadd.f32 %v3001, %v3114
        %v3116 = vpop.f32.mrf.mxu0
        %3117 = vmatprep.mubr.bf16.mxu0 %v3064
        %3118 = vmatmul.mubr.bf16.gmra.mxu0 %v2973
        %v3119 = vpop.f32.mrf.mxu0
        %v3120 = vadd.f32 %v3001, %v3119
        %v3121 = vpop.f32.mrf.mxu0
        %v3122 = vpop.f32.mrf.mxu0
        %v3123 = vadd.f32 %v3001, %v3122
        %v3124 = vpop.f32.mrf.mxu0
        %3125 = vmatprep.mubr.bf16.mxu0 %v3067
        %3126 = vmatmul.mubr.bf16.gmra.mxu0 %v2976
        %v3127 = vpop.f32.mrf.mxu0
        %v3128 = vadd.f32 %v3001, %v3127
        %v3129 = vpop.f32.mrf.mxu0
        %v3130 = vpop.f32.mrf.mxu0
        %v3131 = vadd.f32 %v3001, %v3130
        %v3132 = vpop.f32.mrf.mxu0
        %3133 = vdwg.mxu0
        %v3134 = vmax.f32 %v3104, 0.0
        %v3135 = vmax.f32 %v3107, 0.0
        %v3136 = vmax.f32 %v3112, 0.0
        %v3137 = vmax.f32 %v3115, 0.0
        %v3138 = vmax.f32 %v3120, 0.0
        %v3139 = vmax.f32 %v3123, 0.0
        %v3140 = vmax.f32 %v3128, 0.0
        %v3141 = vmax.f32 %v3131, 0.0
        %v3142 = vpack.c.bf16 %v3134, %v3134
        %v3143 = vpack.c.bf16 %v3135, %v3135
        %v3144 = vpack.c.bf16 %v3136, %v3136
        %v3145 = vpack.c.bf16 %v3137, %v3137
        %v3146 = vpack.c.bf16 %v3138, %v3138
        %v3147 = vpack.c.bf16 %v3139, %v3139
        %v3148 = vpack.c.bf16 %v3140, %v3140
        %v3149 = vpack.c.bf16 %v3141, %v3141
        %v3158 = vunpack.c.l.b16 %v3142
        %v3159 = vunpack.c.l.b16 %v3143
        %v3160 = vunpack.c.l.b16 %v3144
        %v3161 = vunpack.c.l.b16 %v3145
        %v3162 = vunpack.c.l.b16 %v3146
        %v3163 = vunpack.c.l.b16 %v3147
        %v3164 = vunpack.c.l.b16 %v3148
        %v3165 = vunpack.c.l.b16 %v3149
        %v3166 = vpack.c.b16 %v3158, %v3158
        %v3167 = vpack.c.b16 %v3159, %v3159
        %v3168 = vpack.c.b16 %v3160, %v3160
        %v3169 = vpack.c.b16 %v3161, %v3161
        %v3170 = vpack.c.b16 %v3162, %v3162
        %v3171 = vpack.c.b16 %v3163, %v3163
        %v3172 = vpack.c.b16 %v3164, %v3164
        %v3173 = vpack.c.b16 %v3165, %v3165
        %v3175 = vshrl.u32 %v3166, 16
        %v3177 = vrot.slane %v3175, 7
        %v3178 = vshll.u32 %v3166, 16
        %v3180 = vor.u32 %v3177, %v3178
        %v3181 = vrot.slane %v3177, 4
        %v3183 = vshrl.u32 %v3167, 16
        %v3185 = vrot.slane %v3183, 7
        %v3186 = vshll.u32 %v3167, 16
        %v3188 = vor.u32 %v3185, %v3186
        %v3189 = vrot.slane %v3185, 4
        %v3191 = vshrl.u32 %v3168, 16
        %v3193 = vrot.slane %v3191, 7
        %v3194 = vshll.u32 %v3168, 16
        %v3196 = vor.u32 %v3193, %v3194
        %v3197 = vrot.slane %v3193, 4
        %v3199 = vshrl.u32 %v3169, 16
        %v3201 = vrot.slane %v3199, 7
        %v3202 = vshll.u32 %v3169, 16
        %v3204 = vor.u32 %v3201, %v3202
        %v3205 = vrot.slane %v3201, 4
        %v3207 = vshrl.u32 %v3170, 16
        %v3209 = vrot.slane %v3207, 7
        %v3210 = vshll.u32 %v3170, 16
        %v3212 = vor.u32 %v3209, %v3210
        %v3213 = vrot.slane %v3209, 4
        %v3215 = vshrl.u32 %v3171, 16
        %v3217 = vrot.slane %v3215, 7
        %v3218 = vshll.u32 %v3171, 16
        %v3220 = vor.u32 %v3217, %v3218
        %v3221 = vrot.slane %v3217, 4
        %v3223 = vshrl.u32 %v3172, 16
        %v3225 = vrot.slane %v3223, 7
        %v3226 = vshll.u32 %v3172, 16
        %v3228 = vor.u32 %v3225, %v3226
        %v3229 = vrot.slane %v3225, 4
        %v3231 = vshrl.u32 %v3173, 16
        %v3233 = vrot.slane %v3231, 7
        %v3234 = vshll.u32 %v3173, 16
        %v3236 = vor.u32 %v3233, %v3234
        %v3237 = vrot.slane %v3233, 4
        %v3254 = vsel %vm995, %v3180, %v2358
        %3255 = vst [vmem:[%s992] sm:$0xf] %v3254
        %v3256 = vld [vmem:[%s992 + $0x4] sm:$0x1]
        %v3257 = vsel %vm1001, %v3181, %v3256
        %3258 = vst [vmem:[%s992 + $0x4] sm:$0x1] %v3257
        %v3259 = vld [vmem:[%s992 + $0x8] sm:$0xf]
        %v3260 = vsel %vm995, %v3188, %v3259
        %3261 = vst [vmem:[%s992 + $0x8] sm:$0xf] %v3260
        %v3262 = vld [vmem:[%s992 + $0xc] sm:$0x1]
        %v3263 = vsel %vm1001, %v3189, %v3262
        %3264 = vst [vmem:[%s992 + $0xc] sm:$0x1] %v3263
        %v3265 = vld [vmem:[%s992 + $0x10] sm:$0xf]
        %v3266 = vsel %vm995, %v3196, %v3265
        %3267 = vst [vmem:[%s992 + $0x10] sm:$0xf] %v3266
        %v3268 = vld [vmem:[%s992 + $0x14] sm:$0x1]
        %v3269 = vsel %vm1001, %v3197, %v3268
        %3270 = vst [vmem:[%s992 + $0x14] sm:$0x1] %v3269
        %v3271 = vld [vmem:[%s992 + $0x18] sm:$0xf]
        %v3272 = vsel %vm995, %v3204, %v3271
        %3273 = vst [vmem:[%s992 + $0x18] sm:$0xf] %v3272
        %v3274 = vld [vmem:[%s992 + $0x1c] sm:$0x1]
        %v3275 = vsel %vm1001, %v3205, %v3274
        %3276 = vst [vmem:[%s992 + $0x1c] sm:$0x1] %v3275
        %v3277 = vld [vmem:[%s992 + $0x20] sm:$0xf]
        %v3278 = vsel %vm995, %v3212, %v3277
        %3279 = vst [vmem:[%s992 + $0x20] sm:$0xf] %v3278
        %v3280 = vld [vmem:[%s992 + $0x24] sm:$0x1]
        %v3281 = vsel %vm1001, %v3213, %v3280
        %3282 = vst [vmem:[%s992 + $0x24] sm:$0x1] %v3281
        %v3283 = vld [vmem:[%s992 + $0x28] sm:$0xf]
        %v3284 = vsel %vm995, %v3220, %v3283
        %3285 = vst [vmem:[%s992 + $0x28] sm:$0xf] %v3284
        %v3286 = vld [vmem:[%s992 + $0x2c] sm:$0x1]
        %v3287 = vsel %vm1001, %v3221, %v3286
        %3288 = vst [vmem:[%s992 + $0x2c] sm:$0x1] %v3287
        %v3289 = vld [vmem:[%s992 + $0x30] sm:$0xf]
        %v3290 = vsel %vm995, %v3228, %v3289
        %3291 = vst [vmem:[%s992 + $0x30] sm:$0xf] %v3290
        %v3292 = vld [vmem:[%s992 + $0x34] sm:$0x1]
        %v3293 = vsel %vm1001, %v3229, %v3292
        %3294 = vst [vmem:[%s992 + $0x34] sm:$0x1] %v3293
        %v3295 = vld [vmem:[%s992 + $0x38] sm:$0xf]
        %v3296 = vsel %vm995, %v3236, %v3295
        %3297 = vst [vmem:[%s992 + $0x38] sm:$0xf] %v3296
        %v3298 = vld [vmem:[%s992 + $0x3c] sm:$0x1]
        %v3299 = vsel %vm1001, %v3237, %v3298
        %3300 = vst [vmem:[%s992 + $0x3c] sm:$0x1] %v3299
        %v3301 = vld [vmem:[#allocation2] sm:$0xf]
        %v3302 = vld [vmem:[#allocation2 + $0x8] sm:$0xf]
        %v3303 = vld [vmem:[#allocation2 + $0x10] sm:$0xf]
        %v3304 = vld [vmem:[#allocation2 + $0x18] sm:$0xf]
        %v3305 = vld [vmem:[#allocation2 + $0x20] sm:$0xf]
        %v3306 = vld [vmem:[#allocation2 + $0x28] sm:$0xf]
        %v3307 = vld [vmem:[#allocation2 + $0x30] sm:$0xf]
        %v3308 = vld [vmem:[#allocation2 + $0x38] sm:$0xf]
        %v3309 = vld [vmem:[#allocation2 + $0x4] sm:$0x1]
        %v3310 = vld [vmem:[#allocation2 + $0xc] sm:$0x1]
        %v3311 = vld [vmem:[#allocation2 + $0x14] sm:$0x1]
        %v3312 = vld [vmem:[#allocation2 + $0x1c] sm:$0x1]
        %v3313 = vld [vmem:[#allocation2 + $0x24] sm:$0x1]
        %v3314 = vld [vmem:[#allocation2 + $0x2c] sm:$0x1]
        %v3315 = vld [vmem:[#allocation2 + $0x34] sm:$0x1]
        %v3316 = vld [vmem:[#allocation2 + $0x3c] sm:$0x1]
        %v3318 = vshrl.u32 %v3301, 16
        %v3320 = vrot.slane %v3318, 4
        %v3321 = vshll.u32 %v3301, 16
        %v3323 = vrot.slane %v3321, 5
        %v3324 = vor.u32 %v3320, %v3323
        %v3325 = vrot.slane %v3324, 4
        %v3327 = vshll.u32 %v3309, 16
        %v3329 = vrot.slane %v3327, 5
        %v3330 = vsel %vm376, %v3325, %v3329
        %v3332 = vshrl.u32 %v3302, 16
        %v3334 = vrot.slane %v3332, 4
        %v3335 = vshll.u32 %v3302, 16
        %v3337 = vrot.slane %v3335, 5
        %v3338 = vor.u32 %v3334, %v3337
        %v3339 = vrot.slane %v3338, 4
        %v3341 = vshll.u32 %v3310, 16
        %v3343 = vrot.slane %v3341, 5
        %v3344 = vsel %vm376, %v3339, %v3343
        %v3346 = vshrl.u32 %v3303, 16
        %v3348 = vrot.slane %v3346, 4
        %v3349 = vshll.u32 %v3303, 16
        %v3351 = vrot.slane %v3349, 5
        %v3352 = vor.u32 %v3348, %v3351
        %v3353 = vrot.slane %v3352, 4
        %v3355 = vshll.u32 %v3311, 16
        %v3357 = vrot.slane %v3355, 5
        %v3358 = vsel %vm376, %v3353, %v3357
        %v3360 = vshrl.u32 %v3304, 16
        %v3362 = vrot.slane %v3360, 4
        %v3363 = vshll.u32 %v3304, 16
        %v3365 = vrot.slane %v3363, 5
        %v3366 = vor.u32 %v3362, %v3365
        %v3367 = vrot.slane %v3366, 4
        %v3369 = vshll.u32 %v3312, 16
        %v3371 = vrot.slane %v3369, 5
        %v3372 = vsel %vm376, %v3367, %v3371
        %v3374 = vshrl.u32 %v3305, 16
        %v3376 = vrot.slane %v3374, 4
        %v3377 = vshll.u32 %v3305, 16
        %v3379 = vrot.slane %v3377, 5
        %v3380 = vor.u32 %v3376, %v3379
        %v3381 = vrot.slane %v3380, 4
        %v3383 = vshll.u32 %v3313, 16
        %v3385 = vrot.slane %v3383, 5
        %v3386 = vsel %vm376, %v3381, %v3385
        %v3388 = vshrl.u32 %v3306, 16
        %v3390 = vrot.slane %v3388, 4
        %v3391 = vshll.u32 %v3306, 16
        %v3393 = vrot.slane %v3391, 5
        %v3394 = vor.u32 %v3390, %v3393
        %v3395 = vrot.slane %v3394, 4
        %v3397 = vshll.u32 %v3314, 16
        %v3399 = vrot.slane %v3397, 5
        %v3400 = vsel %vm376, %v3395, %v3399
        %v3402 = vshrl.u32 %v3307, 16
        %v3404 = vrot.slane %v3402, 4
        %v3405 = vshll.u32 %v3307, 16
        %v3407 = vrot.slane %v3405, 5
        %v3408 = vor.u32 %v3404, %v3407
        %v3409 = vrot.slane %v3408, 4
        %v3411 = vshll.u32 %v3315, 16
        %v3413 = vrot.slane %v3411, 5
        %v3414 = vsel %vm376, %v3409, %v3413
        %v3416 = vshrl.u32 %v3308, 16
        %v3418 = vrot.slane %v3416, 4
        %v3419 = vshll.u32 %v3308, 16
        %v3421 = vrot.slane %v3419, 5
        %v3422 = vor.u32 %v3418, %v3421
        %v3423 = vrot.slane %v3422, 4
        %v3425 = vshll.u32 %v3316, 16
        %v3427 = vrot.slane %v3425, 5
        %v3428 = vsel %vm376, %v3423, %v3427
        %v3429 = vld [vmem:[#allocation2] sm:$0xe]
        %v3430 = vld [vmem:[#allocation2 + $0x8] sm:$0xe]
        %v3431 = vld [vmem:[#allocation2 + $0x10] sm:$0xe]
        %v3432 = vld [vmem:[#allocation2 + $0x18] sm:$0xe]
        %v3433 = vld [vmem:[#allocation2 + $0x20] sm:$0xe]
        %v3434 = vld [vmem:[#allocation2 + $0x28] sm:$0xe]
        %v3435 = vld [vmem:[#allocation2 + $0x30] sm:$0xe]
        %v3436 = vld [vmem:[#allocation2 + $0x38] sm:$0xe]
        %v3453 = vrot.slane %v3429, 5
        %v3454 = vrot.slane %v3453, 4
        %v3455 = vrot.slane %v3309, 5
        %v3456 = vsel %vm507, %v3454, %v3455
        %v3457 = vrot.slane %v3430, 5
        %v3458 = vrot.slane %v3457, 4
        %v3459 = vrot.slane %v3310, 5
        %v3460 = vsel %vm507, %v3458, %v3459
        %v3461 = vrot.slane %v3431, 5
        %v3462 = vrot.slane %v3461, 4
        %v3463 = vrot.slane %v3311, 5
        %v3464 = vsel %vm507, %v3462, %v3463
        %v3465 = vrot.slane %v3432, 5
        %v3466 = vrot.slane %v3465, 4
        %v3467 = vrot.slane %v3312, 5
        %v3468 = vsel %vm507, %v3466, %v3467
        %v3469 = vrot.slane %v3433, 5
        %v3470 = vrot.slane %v3469, 4
        %v3471 = vrot.slane %v3313, 5
        %v3472 = vsel %vm507, %v3470, %v3471
        %v3473 = vrot.slane %v3434, 5
        %v3474 = vrot.slane %v3473, 4
        %v3475 = vrot.slane %v3314, 5
        %v3476 = vsel %vm507, %v3474, %v3475
        %v3477 = vrot.slane %v3435, 5
        %v3478 = vrot.slane %v3477, 4
        %v3479 = vrot.slane %v3315, 5
        %v3480 = vsel %vm507, %v3478, %v3479
        %v3481 = vrot.slane %v3436, 5
        %v3482 = vrot.slane %v3481, 4
        %v3483 = vrot.slane %v3316, 5
        %v3484 = vsel %vm507, %v3482, %v3483
        %v3485 = vld [vmem:[%s992] sm:$0xf]
        %v3486 = vld [vmem:[%s992 + $0x8] sm:$0xf]
        %v3487 = vld [vmem:[%s992 + $0x10] sm:$0xf]
        %v3488 = vld [vmem:[%s992 + $0x18] sm:$0xf]
        %v3489 = vld [vmem:[%s992 + $0x20] sm:$0xf]
        %v3490 = vld [vmem:[%s992 + $0x28] sm:$0xf]
        %v3491 = vld [vmem:[%s992 + $0x30] sm:$0xf]
        %v3492 = vld [vmem:[%s992 + $0x38] sm:$0xf]
        %v3493 = vld [vmem:[%s992 + $0x4] sm:$0x1]
        %v3494 = vld [vmem:[%s992 + $0xc] sm:$0x1]
        %v3495 = vld [vmem:[%s992 + $0x14] sm:$0x1]
        %v3496 = vld [vmem:[%s992 + $0x1c] sm:$0x1]
        %v3497 = vld [vmem:[%s992 + $0x24] sm:$0x1]
        %v3498 = vld [vmem:[%s992 + $0x2c] sm:$0x1]
        %v3499 = vld [vmem:[%s992 + $0x34] sm:$0x1]
        %v3500 = vld [vmem:[%s992 + $0x3c] sm:$0x1]
        %v3502 = vshrl.u32 %v3485, 16
        %v3504 = vrot.slane %v3502, 4
        %v3505 = vshll.u32 %v3485, 16
        %v3507 = vrot.slane %v3505, 5
        %v3508 = vor.u32 %v3504, %v3507
        %v3509 = vrot.slane %v3508, 4
        %v3511 = vshll.u32 %v3493, 16
        %v3513 = vrot.slane %v3511, 5
        %v3514 = vsel %vm376, %v3509, %v3513
        %v3516 = vshrl.u32 %v3486, 16
        %v3518 = vrot.slane %v3516, 4
        %v3519 = vshll.u32 %v3486, 16
        %v3521 = vrot.slane %v3519, 5
        %v3522 = vor.u32 %v3518, %v3521
        %v3523 = vrot.slane %v3522, 4
        %v3525 = vshll.u32 %v3494, 16
        %v3527 = vrot.slane %v3525, 5
        %v3528 = vsel %vm376, %v3523, %v3527
        %v3530 = vshrl.u32 %v3487, 16
        %v3532 = vrot.slane %v3530, 4
        %v3533 = vshll.u32 %v3487, 16
        %v3535 = vrot.slane %v3533, 5
        %v3536 = vor.u32 %v3532, %v3535
        %v3537 = vrot.slane %v3536, 4
        %v3539 = vshll.u32 %v3495, 16
        %v3541 = vrot.slane %v3539, 5
        %v3542 = vsel %vm376, %v3537, %v3541
        %v3544 = vshrl.u32 %v3488, 16
        %v3546 = vrot.slane %v3544, 4
        %v3547 = vshll.u32 %v3488, 16
        %v3549 = vrot.slane %v3547, 5
        %v3550 = vor.u32 %v3546, %v3549
        %v3551 = vrot.slane %v3550, 4
        %v3553 = vshll.u32 %v3496, 16
        %v3555 = vrot.slane %v3553, 5
        %v3556 = vsel %vm376, %v3551, %v3555
        %v3558 = vshrl.u32 %v3489, 16
        %v3560 = vrot.slane %v3558, 4
        %v3561 = vshll.u32 %v3489, 16
        %v3563 = vrot.slane %v3561, 5
        %v3564 = vor.u32 %v3560, %v3563
        %v3565 = vrot.slane %v3564, 4
        %v3567 = vshll.u32 %v3497, 16
        %v3569 = vrot.slane %v3567, 5
        %v3570 = vsel %vm376, %v3565, %v3569
        %v3572 = vshrl.u32 %v3490, 16
        %v3574 = vrot.slane %v3572, 4
        %v3575 = vshll.u32 %v3490, 16
        %v3577 = vrot.slane %v3575, 5
        %v3578 = vor.u32 %v3574, %v3577
        %v3579 = vrot.slane %v3578, 4
        %v3581 = vshll.u32 %v3498, 16
        %v3583 = vrot.slane %v3581, 5
        %v3584 = vsel %vm376, %v3579, %v3583
        %v3586 = vshrl.u32 %v3491, 16
        %v3588 = vrot.slane %v3586, 4
        %v3589 = vshll.u32 %v3491, 16
        %v3591 = vrot.slane %v3589, 5
        %v3592 = vor.u32 %v3588, %v3591
        %v3593 = vrot.slane %v3592, 4
        %v3595 = vshll.u32 %v3499, 16
        %v3597 = vrot.slane %v3595, 5
        %v3598 = vsel %vm376, %v3593, %v3597
        %v3600 = vshrl.u32 %v3492, 16
        %v3602 = vrot.slane %v3600, 4
        %v3603 = vshll.u32 %v3492, 16
        %v3605 = vrot.slane %v3603, 5
        %v3606 = vor.u32 %v3602, %v3605
        %v3607 = vrot.slane %v3606, 4
        %v3609 = vshll.u32 %v3500, 16
        %v3611 = vrot.slane %v3609, 5
        %v3612 = vsel %vm376, %v3607, %v3611
        %v3613 = vld [vmem:[%s992] sm:$0xe]
        %v3614 = vld [vmem:[%s992 + $0x8] sm:$0xe]
        %v3615 = vld [vmem:[%s992 + $0x10] sm:$0xe]
        %v3616 = vld [vmem:[%s992 + $0x18] sm:$0xe]
        %v3617 = vld [vmem:[%s992 + $0x20] sm:$0xe]
        %v3618 = vld [vmem:[%s992 + $0x28] sm:$0xe]
        %v3619 = vld [vmem:[%s992 + $0x30] sm:$0xe]
        %v3620 = vld [vmem:[%s992 + $0x38] sm:$0xe]
        %v3637 = vrot.slane %v3613, 5
        %v3638 = vrot.slane %v3637, 4
        %v3639 = vrot.slane %v3493, 5
        %v3640 = vsel %vm507, %v3638, %v3639
        %v3641 = vrot.slane %v3614, 5
        %v3642 = vrot.slane %v3641, 4
        %v3643 = vrot.slane %v3494, 5
        %v3644 = vsel %vm507, %v3642, %v3643
        %v3645 = vrot.slane %v3615, 5
        %v3646 = vrot.slane %v3645, 4
        %v3647 = vrot.slane %v3495, 5
        %v3648 = vsel %vm507, %v3646, %v3647
        %v3649 = vrot.slane %v3616, 5
        %v3650 = vrot.slane %v3649, 4
        %v3651 = vrot.slane %v3496, 5
        %v3652 = vsel %vm507, %v3650, %v3651
        %v3653 = vrot.slane %v3617, 5
        %v3654 = vrot.slane %v3653, 4
        %v3655 = vrot.slane %v3497, 5
        %v3656 = vsel %vm507, %v3654, %v3655
        %v3657 = vrot.slane %v3618, 5
        %v3658 = vrot.slane %v3657, 4
        %v3659 = vrot.slane %v3498, 5
        %v3660 = vsel %vm507, %v3658, %v3659
        %v3661 = vrot.slane %v3619, 5
        %v3662 = vrot.slane %v3661, 4
        %v3663 = vrot.slane %v3499, 5
        %v3664 = vsel %vm507, %v3662, %v3663
        %v3665 = vrot.slane %v3620, 5
        %v3666 = vrot.slane %v3665, 4
        %v3667 = vrot.slane %v3500, 5
        %v3668 = vsel %vm507, %v3666, %v3667
        %v3669 = vld [vmem:[%s1415] sm:$0xf]
        %v3670 = vld [vmem:[%s1415 + $0x8] sm:$0xf]
        %v3671 = vld [vmem:[%s1415 + $0x10] sm:$0xf]
        %v3672 = vld [vmem:[%s1415 + $0x18] sm:$0xf]
        %v3673 = vld [vmem:[%s1415 + $0x20] sm:$0xf]
        %v3674 = vld [vmem:[%s1415 + $0x28] sm:$0xf]
        %v3675 = vld [vmem:[%s1415 + $0x30] sm:$0xf]
        %v3676 = vld [vmem:[%s1415 + $0x38] sm:$0xf]
        %v3677 = vld [vmem:[%s1415 + $0x4] sm:$0x1]
        %v3678 = vld [vmem:[%s1415 + $0xc] sm:$0x1]
        %v3679 = vld [vmem:[%s1415 + $0x14] sm:$0x1]
        %v3680 = vld [vmem:[%s1415 + $0x1c] sm:$0x1]
        %v3681 = vld [vmem:[%s1415 + $0x24] sm:$0x1]
        %v3682 = vld [vmem:[%s1415 + $0x2c] sm:$0x1]
        %v3683 = vld [vmem:[%s1415 + $0x34] sm:$0x1]
        %v3684 = vld [vmem:[%s1415 + $0x3c] sm:$0x1]
        %v3686 = vshrl.u32 %v3669, 16
        %v3688 = vrot.slane %v3686, 4
        %v3689 = vshll.u32 %v3669, 16
        %v3691 = vrot.slane %v3689, 5
        %v3692 = vor.u32 %v3688, %v3691
        %v3693 = vrot.slane %v3692, 4
        %v3695 = vshll.u32 %v3677, 16
        %v3697 = vrot.slane %v3695, 5
        %v3698 = vsel %vm376, %v3693, %v3697
        %v3700 = vshrl.u32 %v3670, 16
        %v3702 = vrot.slane %v3700, 4
        %v3703 = vshll.u32 %v3670, 16
        %v3705 = vrot.slane %v3703, 5
        %v3706 = vor.u32 %v3702, %v3705
        %v3707 = vrot.slane %v3706, 4
        %v3709 = vshll.u32 %v3678, 16
        %v3711 = vrot.slane %v3709, 5
        %v3712 = vsel %vm376, %v3707, %v3711
        %v3714 = vshrl.u32 %v3671, 16
        %v3716 = vrot.slane %v3714, 4
        %v3717 = vshll.u32 %v3671, 16
        %v3719 = vrot.slane %v3717, 5
        %v3720 = vor.u32 %v3716, %v3719
        %v3721 = vrot.slane %v3720, 4
        %v3723 = vshll.u32 %v3679, 16
        %v3725 = vrot.slane %v3723, 5
        %v3726 = vsel %vm376, %v3721, %v3725
        %v3728 = vshrl.u32 %v3672, 16
        %v3730 = vrot.slane %v3728, 4
        %v3731 = vshll.u32 %v3672, 16
        %v3733 = vrot.slane %v3731, 5
        %v3734 = vor.u32 %v3730, %v3733
        %v3735 = vrot.slane %v3734, 4
        %v3737 = vshll.u32 %v3680, 16
        %v3739 = vrot.slane %v3737, 5
        %v3740 = vsel %vm376, %v3735, %v3739
        %v3742 = vshrl.u32 %v3673, 16
        %v3744 = vrot.slane %v3742, 4
        %v3745 = vshll.u32 %v3673, 16
        %v3747 = vrot.slane %v3745, 5
        %v3748 = vor.u32 %v3744, %v3747
        %v3749 = vrot.slane %v3748, 4
        %v3751 = vshll.u32 %v3681, 16
        %v3753 = vrot.slane %v3751, 5
        %v3754 = vsel %vm376, %v3749, %v3753
        %v3756 = vshrl.u32 %v3674, 16
        %v3758 = vrot.slane %v3756, 4
        %v3759 = vshll.u32 %v3674, 16
        %v3761 = vrot.slane %v3759, 5
        %v3762 = vor.u32 %v3758, %v3761
        %v3763 = vrot.slane %v3762, 4
        %v3765 = vshll.u32 %v3682, 16
        %v3767 = vrot.slane %v3765, 5
        %v3768 = vsel %vm376, %v3763, %v3767
        %v3770 = vshrl.u32 %v3675, 16
        %v3772 = vrot.slane %v3770, 4
        %v3773 = vshll.u32 %v3675, 16
        %v3775 = vrot.slane %v3773, 5
        %v3776 = vor.u32 %v3772, %v3775
        %v3777 = vrot.slane %v3776, 4
        %v3779 = vshll.u32 %v3683, 16
        %v3781 = vrot.slane %v3779, 5
        %v3782 = vsel %vm376, %v3777, %v3781
        %v3784 = vshrl.u32 %v3676, 16
        %v3786 = vrot.slane %v3784, 4
        %v3787 = vshll.u32 %v3676, 16
        %v3789 = vrot.slane %v3787, 5
        %v3790 = vor.u32 %v3786, %v3789
        %v3791 = vrot.slane %v3790, 4
        %v3793 = vshll.u32 %v3684, 16
        %v3795 = vrot.slane %v3793, 5
        %v3796 = vsel %vm376, %v3791, %v3795
        %v3797 = vld [vmem:[%s1415] sm:$0xe]
        %v3798 = vld [vmem:[%s1415 + $0x8] sm:$0xe]
        %v3799 = vld [vmem:[%s1415 + $0x10] sm:$0xe]
        %v3800 = vld [vmem:[%s1415 + $0x18] sm:$0xe]
        %v3801 = vld [vmem:[%s1415 + $0x20] sm:$0xe]
        %v3802 = vld [vmem:[%s1415 + $0x28] sm:$0xe]
        %v3803 = vld [vmem:[%s1415 + $0x30] sm:$0xe]
        %v3804 = vld [vmem:[%s1415 + $0x38] sm:$0xe]
        %v3821 = vrot.slane %v3797, 5
        %v3822 = vrot.slane %v3821, 4
        %v3823 = vrot.slane %v3677, 5
        %v3824 = vsel %vm507, %v3822, %v3823
        %v3825 = vrot.slane %v3798, 5
        %v3826 = vrot.slane %v3825, 4
        %v3827 = vrot.slane %v3678, 5
        %v3828 = vsel %vm507, %v3826, %v3827
        %v3829 = vrot.slane %v3799, 5
        %v3830 = vrot.slane %v3829, 4
        %v3831 = vrot.slane %v3679, 5
        %v3832 = vsel %vm507, %v3830, %v3831
        %v3833 = vrot.slane %v3800, 5
        %v3834 = vrot.slane %v3833, 4
        %v3835 = vrot.slane %v3680, 5
        %v3836 = vsel %vm507, %v3834, %v3835
        %v3837 = vrot.slane %v3801, 5
        %v3838 = vrot.slane %v3837, 4
        %v3839 = vrot.slane %v3681, 5
        %v3840 = vsel %vm507, %v3838, %v3839
        %v3841 = vrot.slane %v3802, 5
        %v3842 = vrot.slane %v3841, 4
        %v3843 = vrot.slane %v3682, 5
        %v3844 = vsel %vm507, %v3842, %v3843
        %v3845 = vrot.slane %v3803, 5
        %v3846 = vrot.slane %v3845, 4
        %v3847 = vrot.slane %v3683, 5
        %v3848 = vsel %vm507, %v3846, %v3847
        %v3849 = vrot.slane %v3804, 5
        %v3850 = vrot.slane %v3849, 4
        %v3851 = vrot.slane %v3684, 5
        %v3852 = vsel %vm507, %v3850, %v3851
        %v3861 = vunpack.c.l.b16 %v3301
        %v3862 = vunpack.c.l.b16 %v3302
        %v3863 = vunpack.c.l.b16 %v3303
        %v3864 = vunpack.c.l.b16 %v3304
        %v3865 = vunpack.c.l.b16 %v3305
        %v3866 = vunpack.c.l.b16 %v3306
        %v3867 = vunpack.c.l.b16 %v3307
        %v3868 = vunpack.c.l.b16 %v3308
        %v3869 = vpack.c.b16 %v3862, %v3861
        %v3870 = vpack.c.b16 %v3864, %v3863
        %v3871 = vpack.c.b16 %v3866, %v3865
        %v3872 = vpack.c.b16 %v3868, %v3867
        %v3873 = vunpack.c.l.b16 %v3330
        %v3874 = vunpack.c.l.b16 %v3344
        %v3875 = vunpack.c.l.b16 %v3358
        %v3876 = vunpack.c.l.b16 %v3372
        %v3877 = vunpack.c.l.b16 %v3386
        %v3878 = vunpack.c.l.b16 %v3400
        %v3879 = vunpack.c.l.b16 %v3414
        %v3880 = vunpack.c.l.b16 %v3428
        %v3881 = vpack.c.b16 %v3874, %v3873
        %v3882 = vpack.c.b16 %v3876, %v3875
        %v3883 = vpack.c.b16 %v3878, %v3877
        %v3884 = vpack.c.b16 %v3880, %v3879
        %3885 = vrot.lane.b32.xlu0 %v3881, 16
        %v3886 = vpop.permute.xlu0 %3885
        %3887 = vrot.lane.b32.xlu0 %v3882, 16
        %v3888 = vpop.permute.xlu0 %3887
        %3889 = vrot.lane.b32.xlu0 %v3883, 16
        %v3890 = vpop.permute.xlu0 %3889
        %3891 = vrot.lane.b32.xlu0 %v3884, 16
        %v3892 = vpop.permute.xlu0 %3891
        %v3893 = vunpack.c.l.b16 %v3456
        %v3894 = vunpack.c.l.b16 %v3460
        %v3895 = vunpack.c.l.b16 %v3464
        %v3896 = vunpack.c.l.b16 %v3468
        %v3897 = vunpack.c.l.b16 %v3472
        %v3898 = vunpack.c.l.b16 %v3476
        %v3899 = vunpack.c.l.b16 %v3480
        %v3900 = vunpack.c.l.b16 %v3484
        %v3901 = vpack.c.b16 %v3894, %v3893
        %v3902 = vpack.c.b16 %v3896, %v3895
        %v3903 = vpack.c.b16 %v3898, %v3897
        %v3904 = vpack.c.b16 %v3900, %v3899
        %3905 = vrot.lane.b32.xlu0 %v3901, 32
        %v3906 = vpop.permute.xlu0 %3905
        %3907 = vrot.lane.b32.xlu0 %v3902, 32
        %v3908 = vpop.permute.xlu0 %3907
        %3909 = vrot.lane.b32.xlu0 %v3903, 32
        %v3910 = vpop.permute.xlu0 %3909
        %3911 = vrot.lane.b32.xlu0 %v3904, 32
        %v3912 = vpop.permute.xlu0 %3911
        %v3921 = vunpack.c.l.b16 %v3485
        %v3922 = vunpack.c.l.b16 %v3486
        %v3923 = vunpack.c.l.b16 %v3487
        %v3924 = vunpack.c.l.b16 %v3488
        %v3925 = vunpack.c.l.b16 %v3489
        %v3926 = vunpack.c.l.b16 %v3490
        %v3927 = vunpack.c.l.b16 %v3491
        %v3928 = vunpack.c.l.b16 %v3492
        %v3929 = vpack.c.b16 %v3922, %v3921
        %v3930 = vpack.c.b16 %v3924, %v3923
        %v3931 = vpack.c.b16 %v3926, %v3925
        %v3932 = vpack.c.b16 %v3928, %v3927
        %3933 = vrot.lane.b32.xlu0 %v3929, 48
        %v3934 = vpop.permute.xlu0 %3933
        %3935 = vrot.lane.b32.xlu0 %v3930, 48
        %v3936 = vpop.permute.xlu0 %3935
        %3937 = vrot.lane.b32.xlu0 %v3931, 48
        %v3938 = vpop.permute.xlu0 %3937
        %3939 = vrot.lane.b32.xlu0 %v3932, 48
        %v3940 = vpop.permute.xlu0 %3939
        %v3941 = vunpack.c.l.b16 %v3514
        %v3942 = vunpack.c.l.b16 %v3528
        %v3943 = vunpack.c.l.b16 %v3542
        %v3944 = vunpack.c.l.b16 %v3556
        %v3945 = vunpack.c.l.b16 %v3570
        %v3946 = vunpack.c.l.b16 %v3584
        %v3947 = vunpack.c.l.b16 %v3598
        %v3948 = vunpack.c.l.b16 %v3612
        %v3949 = vpack.c.b16 %v3942, %v3941
        %v3950 = vpack.c.b16 %v3944, %v3943
        %v3951 = vpack.c.b16 %v3946, %v3945
        %v3952 = vpack.c.b16 %v3948, %v3947
        %3953 = vrot.lane.b32.xlu0 %v3949, 64
        %v3954 = vpop.permute.xlu0 %3953
        %3955 = vrot.lane.b32.xlu0 %v3950, 64
        %v3956 = vpop.permute.xlu0 %3955
        %3957 = vrot.lane.b32.xlu0 %v3951, 64
        %v3958 = vpop.permute.xlu0 %3957
        %3959 = vrot.lane.b32.xlu0 %v3952, 64
        %v3960 = vpop.permute.xlu0 %3959
        %v3961 = vunpack.c.l.b16 %v3640
        %v3962 = vunpack.c.l.b16 %v3644
        %v3963 = vunpack.c.l.b16 %v3648
        %v3964 = vunpack.c.l.b16 %v3652
        %v3965 = vunpack.c.l.b16 %v3656
        %v3966 = vunpack.c.l.b16 %v3660
        %v3967 = vunpack.c.l.b16 %v3664
        %v3968 = vunpack.c.l.b16 %v3668
        %v3969 = vpack.c.b16 %v3962, %v3961
        %v3970 = vpack.c.b16 %v3964, %v3963
        %v3971 = vpack.c.b16 %v3966, %v3965
        %v3972 = vpack.c.b16 %v3968, %v3967
        %3973 = vrot.lane.b32.xlu0 %v3969, 80
        %v3974 = vpop.permute.xlu0 %3973
        %3975 = vrot.lane.b32.xlu0 %v3970, 80
        %v3976 = vpop.permute.xlu0 %3975
        %3977 = vrot.lane.b32.xlu0 %v3971, 80
        %v3978 = vpop.permute.xlu0 %3977
        %3979 = vrot.lane.b32.xlu0 %v3972, 80
        %v3980 = vpop.permute.xlu0 %3979
        %v3989 = vunpack.c.l.b16 %v3669
        %v3990 = vunpack.c.l.b16 %v3670
        %v3991 = vunpack.c.l.b16 %v3671
        %v3992 = vunpack.c.l.b16 %v3672
        %v3993 = vunpack.c.l.b16 %v3673
        %v3994 = vunpack.c.l.b16 %v3674
        %v3995 = vunpack.c.l.b16 %v3675
        %v3996 = vunpack.c.l.b16 %v3676
        %v3997 = vpack.c.b16 %v3990, %v3989
        %v3998 = vpack.c.b16 %v3992, %v3991
        %v3999 = vpack.c.b16 %v3994, %v3993
        %v4000 = vpack.c.b16 %v3996, %v3995
        %4001 = vrot.lane.b32.xlu0 %v3997, 96
        %v4002 = vpop.permute.xlu0 %4001
        %4003 = vrot.lane.b32.xlu0 %v3998, 96
        %v4004 = vpop.permute.xlu0 %4003
        %4005 = vrot.lane.b32.xlu0 %v3999, 96
        %v4006 = vpop.permute.xlu0 %4005
        %4007 = vrot.lane.b32.xlu0 %v4000, 96
        %v4008 = vpop.permute.xlu0 %4007
        %v4009 = vunpack.c.l.b16 %v3698
        %v4010 = vunpack.c.l.b16 %v3712
        %v4011 = vunpack.c.l.b16 %v3726
        %v4012 = vunpack.c.l.b16 %v3740
        %v4013 = vunpack.c.l.b16 %v3754
        %v4014 = vunpack.c.l.b16 %v3768
        %v4015 = vunpack.c.l.b16 %v3782
        %v4016 = vunpack.c.l.b16 %v3796
        %v4017 = vpack.c.b16 %v4010, %v4009
        %v4018 = vpack.c.b16 %v4012, %v4011
        %v4019 = vpack.c.b16 %v4014, %v4013
        %v4020 = vpack.c.b16 %v4016, %v4015
        %4021 = vrot.lane.b32.xlu0 %v4017, 112
        %v4022 = vpop.permute.xlu0 %4021
        %4023 = vrot.lane.b32.xlu0 %v4018, 112
        %v4024 = vpop.permute.xlu0 %4023
        %4025 = vrot.lane.b32.xlu0 %v4019, 112
        %v4026 = vpop.permute.xlu0 %4025
        %4027 = vrot.lane.b32.xlu0 %v4020, 112
        %v4028 = vpop.permute.xlu0 %4027
        %v4029 = vunpack.c.l.b16 %v3824
        %v4030 = vunpack.c.l.b16 %v3828
        %v4031 = vunpack.c.l.b16 %v3832
        %v4032 = vunpack.c.l.b16 %v3836
        %v4033 = vunpack.c.l.b16 %v3840
        %v4034 = vunpack.c.l.b16 %v3844
        %v4035 = vunpack.c.l.b16 %v3848
        %v4036 = vunpack.c.l.b16 %v3852
        %v4037 = vpack.c.b16 %v4030, %v4029
        %v4038 = vpack.c.b16 %v4032, %v4031
        %v4039 = vpack.c.b16 %v4034, %v4033
        %v4040 = vpack.c.b16 %v4036, %v4035
        %v4043 = vsel %vm1788, %v3869, %v3886
        %v4046 = vsel %vm1788, %v3870, %v3888
        %v4049 = vsel %vm1788, %v3871, %v3890
        %v4052 = vsel %vm1788, %v3872, %v3892
        %v4054 = vsel %vm1801, %v4043, %v3906
        %v4056 = vsel %vm1801, %v4046, %v3908
        %v4058 = vsel %vm1801, %v4049, %v3910
        %v4060 = vsel %vm1801, %v4052, %v3912
        %v4062 = vsel %vm1810, %v4054, %v3934
        %v4064 = vsel %vm1810, %v4056, %v3936
        %v4066 = vsel %vm1810, %v4058, %v3938
        %v4068 = vsel %vm1810, %v4060, %v3940
        %v4070 = vsel %vm1819, %v4062, %v3954
        %v4072 = vsel %vm1819, %v4064, %v3956
        %v4074 = vsel %vm1819, %v4066, %v3958
        %v4076 = vsel %vm1819, %v4068, %v3960
        %v4078 = vsel %vm1828, %v4070, %v3974
        %v4080 = vsel %vm1828, %v4072, %v3976
        %v4082 = vsel %vm1828, %v4074, %v3978
        %v4084 = vsel %vm1828, %v4076, %v3980
        %v4086 = vsel %vm1837, %v4078, %v4002
        %v4088 = vsel %vm1837, %v4080, %v4004
        %v4090 = vsel %vm1837, %v4082, %v4006
        %v4092 = vsel %vm1837, %v4084, %v4008
        %v4094 = vsel %vm1846, %v4086, %v4022
        %v4097 = vsel %vm1846, %v4088, %v4024
        %v4100 = vsel %vm1846, %v4090, %v4026
        %v4103 = vsel %vm1846, %v4092, %v4028
        %v4105 = vld [vmem:[%s7] sm:$0xf]
        %v4106 = vld [vmem:[%s7 + $0x4] sm:$0xf]
        %v4107 = vld [vmem:[%s7 + $0x8] sm:$0xf]
        %v4108 = vld [vmem:[%s7 + $0xc] sm:$0xf]
        %v4109 = vld [vmem:[%s7 + $0x10] sm:$0xf]
        %v4110 = vld [vmem:[%s7 + $0x14] sm:$0xf]
        %v4111 = vld [vmem:[%s7 + $0x18] sm:$0xf]
        %v4112 = vld [vmem:[%s7 + $0x1c] sm:$0xf]
        %v4113 = vld [vmem:[%s7 + $0x20] sm:$0xf]
        %v4114 = vld [vmem:[%s7 + $0x24] sm:$0xf]
        %v4115 = vld [vmem:[%s7 + $0x28] sm:$0xf]
        %v4116 = vld [vmem:[%s7 + $0x2c] sm:$0xf]
        %v4117 = vld [vmem:[%s7 + $0x30] sm:$0xf]
        %v4118 = vld [vmem:[%s7 + $0x34] sm:$0xf]
        %v4119 = vld [vmem:[%s7 + $0x38] sm:$0xf]
        %v4120 = vld [vmem:[%s7 + $0x3c] sm:$0xf]
        %v4121 = vld [vmem:[%s7 + $0x40] sm:$0xf]
        %v4122 = vld [vmem:[%s7 + $0x44] sm:$0xf]
        %v4123 = vld [vmem:[%s8] sm:$0x1]
        %v4125 = vlaneseq
        %v4126 = vshrl.u32 %v4125, 7
        %v4127 = vsub.s32 0, %v4126
        %v4128 = vrot.slane %v4123, %v4127
        %v4148 = vunpack.c.l.b16 %v4105
        %v4149 = vunpack.c.l.b16 %v4106
        %v4150 = vunpack.c.l.b16 %v4107
        %v4151 = vunpack.c.l.b16 %v4108
        %v4152 = vunpack.c.l.b16 %v4109
        %v4153 = vunpack.c.l.b16 %v4110
        %v4154 = vunpack.c.l.b16 %v4111
        %v4155 = vunpack.c.l.b16 %v4112
        %v4156 = vunpack.c.l.b16 %v4113
        %v4157 = vunpack.c.l.b16 %v4114
        %v4158 = vunpack.c.l.b16 %v4115
        %v4159 = vunpack.c.l.b16 %v4116
        %v4160 = vunpack.c.l.b16 %v4117
        %v4161 = vunpack.c.l.b16 %v4118
        %v4162 = vunpack.c.l.b16 %v4119
        %v4163 = vunpack.c.l.b16 %v4120
        %v4164 = vunpack.c.l.b16 %v4121
        %v4165 = vunpack.c.l.b16 %v4122
        %v4166 = vpack.c.b16 %v4149, %v4148
        %v4167 = vpack.c.b16 %v4151, %v4150
        %v4168 = vpack.c.b16 %v4153, %v4152
        %v4169 = vpack.c.b16 %v4155, %v4154
        %v4170 = vpack.c.b16 %v4157, %v4156
        %v4171 = vpack.c.b16 %v4159, %v4158
        %v4172 = vpack.c.b16 %v4161, %v4160
        %v4173 = vpack.c.b16 %v4163, %v4162
        %v4174 = vpack.c.b16 %v4165, %v4164
        %v4185 = vsel %vm1788, %v4037, 0
        %v4188 = vsel %vm1788, %v4038, 0
        %v4191 = vsel %vm1788, %v4039, 0
        %v4194 = vsel %vm1788, %v4040, 0
        %4196 = vmatprep.subr.bf16.mxu0 0
        %4197 = vmatpush1.bf16.msra.mxu0 %v4173
        %4198 = vmatprep.subr.bf16.mxu0 0
        %4199 = vmatpush1.bf16.msra.mxu0 %v4172
        %4200 = vmatprep.subr.bf16.mxu0 0
        %4201 = vmatpush1.bf16.msra.mxu0 %v4171
        %4202 = vmatprep.subr.bf16.mxu0 0
        %4203 = vmatpush1.bf16.msra.mxu0 %v4170
        %4204 = vmatprep.subr.bf16.mxu0 0
        %4205 = vmatpush1.bf16.msra.mxu0 %v4169
        %4206 = vmatprep.subr.bf16.mxu0 0
        %4207 = vmatpush1.bf16.msra.mxu0 %v4168
        %4208 = vmatprep.subr.bf16.mxu0 0
        %4209 = vmatpush1.bf16.msra.mxu0 %v4167
        %4210 = vmatprep.subr.bf16.mxu0 0
        %4211 = vmatpush1.bf16.msra.mxu0 %v4166
        %4212 = vmatprep.subr.bf16.mxu0 0
        %4213 = vmatpush2.bf16.msra.mxu0 0
        %4214 = vmatprep.subr.bf16.mxu0 0
        %4215 = vmatpush2.bf16.msra.mxu0 0
        %4216 = vmatprep.subr.bf16.mxu0 0
        %4217 = vmatpush2.bf16.msra.mxu0 0
        %4218 = vmatprep.subr.bf16.mxu0 0
        %4219 = vmatpush2.bf16.msra.mxu0 0
        %4220 = vmatprep.subr.bf16.mxu0 0
        %4221 = vmatpush2.bf16.msra.mxu0 0
        %4222 = vmatprep.subr.bf16.mxu0 0
        %4223 = vmatpush2.bf16.msra.mxu0 0
        %4224 = vmatprep.subr.bf16.mxu0 0
        %4225 = vmatpush2.bf16.msra.mxu0 0
        %4226 = vmatprep.subr.bf16.mxu0 0
        %4227 = vmatpush2.bf16.msra.mxu0 %v4174
        %4228 = vmatprep.mubr.bf16.mxu0 %v4185
        %4229 = vmatmul.mubr.bf16.gmra.mxu0 %v4094
        %v4230 = vpop.f32.mrf.mxu0
        %v4231 = vadd.f32 %v4128, %v4230
        %v4232 = vpop.f32.mrf.mxu0
        %v4233 = vpop.f32.mrf.mxu0
        %v4234 = vadd.f32 %v4128, %v4233
        %v4235 = vpop.f32.mrf.mxu0
        %4236 = vmatprep.mubr.bf16.mxu0 %v4188
        %4237 = vmatmul.mubr.bf16.gmra.mxu0 %v4097
        %v4238 = vpop.f32.mrf.mxu0
        %v4239 = vadd.f32 %v4128, %v4238
        %v4240 = vpop.f32.mrf.mxu0
        %v4241 = vpop.f32.mrf.mxu0
        %v4242 = vadd.f32 %v4128, %v4241
        %v4243 = vpop.f32.mrf.mxu0
        %4244 = vmatprep.mubr.bf16.mxu0 %v4191
        %4245 = vmatmul.mubr.bf16.gmra.mxu0 %v4100
        %v4246 = vpop.f32.mrf.mxu0
        %v4247 = vadd.f32 %v4128, %v4246
        %v4248 = vpop.f32.mrf.mxu0
        %v4249 = vpop.f32.mrf.mxu0
        %v4250 = vadd.f32 %v4128, %v4249
        %v4251 = vpop.f32.mrf.mxu0
        %4252 = vmatprep.mubr.bf16.mxu0 %v4194
        %4253 = vmatmul.mubr.bf16.gmra.mxu0 %v4103
        %v4254 = vpop.f32.mrf.mxu0
        %v4255 = vadd.f32 %v4128, %v4254
        %v4256 = vpop.f32.mrf.mxu0
        %v4257 = vpop.f32.mrf.mxu0
        %v4258 = vadd.f32 %v4128, %v4257
        %v4259 = vpop.f32.mrf.mxu0
        %4260 = vdwg.mxu0
        %v4261 = vadd.f32 %v4231, %v850
        %v4262 = vadd.f32 %v4234, %v853
        %v4263 = vadd.f32 %v4239, %v858
        %v4264 = vadd.f32 %v4242, %v861
        %v4265 = vadd.f32 %v4247, %v866
        %v4266 = vadd.f32 %v4250, %v869
        %v4267 = vadd.f32 %v4255, %v874
        %v4268 = vadd.f32 %v4258, %v877
        %v4269 = vpack.c.bf16 %v4261, %v4261
        %v4270 = vpack.c.bf16 %v4262, %v4262
        %v4271 = vpack.c.bf16 %v4263, %v4263
        %v4272 = vpack.c.bf16 %v4264, %v4264
        %v4273 = vpack.c.bf16 %v4265, %v4265
        %v4274 = vpack.c.bf16 %v4266, %v4266
        %v4275 = vpack.c.bf16 %v4267, %v4267
        %v4276 = vpack.c.bf16 %v4268, %v4268
        %4277 = vst.msk [vmem:[%s325] sm:$0xf] %vm352, %v4269
        %4278 = vst.msk [vmem:[%s325 + $0x4] sm:$0xf] %vm352, %v4270
        %4279 = vst.msk [vmem:[%s325 + $0x8] sm:$0xf] %vm352, %v4271
        %4280 = vst.msk [vmem:[%s325 + $0xc] sm:$0xf] %vm352, %v4272
        %4281 = vst.msk [vmem:[%s325 + $0x10] sm:$0xf] %vm352, %v4273
        %4282 = vst.msk [vmem:[%s325 + $0x14] sm:$0xf] %vm352, %v4274
        %4283 = vst.msk [vmem:[%s325 + $0x18] sm:$0xf] %vm352, %v4275
        %4284 = vst.msk [vmem:[%s325 + $0x1c] sm:$0xf] %vm352, %v4276
        %s4285 = sand.u32 %s225, 1
        %s4286 = scalar_lea.sflag [#allocation4], %s4285
        %s4287 = sand.u32 %s225, 1
        %s4288 = smul.addr %s4287, 32
        %s4289 = scalar_lea.vmem [#allocation3], %s4288
        // Predicated region
        $region57: #{tpu_custom_call.1} parent=55 // pred_check
          %p4290 = pneg %p235
        $region58: #{tpu_custom_call.1} parent=55 // pred_check_branch
          %4292 = sbr.rel (%p4290) target = $region60
        $region59: #{tpu_custom_call.1} parent=55 // pred_region
          %s4294 = ssub.s32 512, 512
          %4295 = vsyncadd %s4286, %s4294
          %s4296 = smul.addr %s23, 8
          %s4297 = smul.addr %s4296, 64
          %s4298 = scalar_lea.hbm %s9, %s4297
          %s4299 = sshll.u32 %s4289, 4
          %s4300 = int_to_ptr.vmem [resolvable:$true] %s4299
          %4305 = dma.vmem_to_hbm [thread:$0]  %s4300, 512, %s4298, %s4286, 64, 64, 4
        $region60: #{tpu_custom_call.1} parent=55 // pred_fallthru
          _
      $region56: #{tpu_custom_call.1} parent=5 // pred_fallthru
        _
      %p4306 = scmp.le.s32.totalorder 2, %s18
      // Predicated region
      $region61: #{tpu_custom_call.1} parent=5 // pred_check
        %p4307 = pneg %p4306
      $region62: #{tpu_custom_call.1} parent=5 // pred_check_branch
        %4309 = sbr.rel (%p4307) target = $region64
      $region63: #{tpu_custom_call.1} parent=5 // pred_region
        %s4310 = ssub.s32 %s18, 2
        // Predicated region
        $region65: #{tpu_custom_call.1} parent=63 // pred_check
          %p4311 = pneg %p241
        $region66: #{tpu_custom_call.1} parent=63 // pred_check_branch
          %4313 = sbr.rel (%p4311) target = $region68
        $region67: #{tpu_custom_call.1} parent=63 // pred_region
          %s4314 = sand.u32 %s226, 1
          %s4315 = scalar_lea.sflag [#allocation4], %s4314
          %s4316 = sand.u32 %s226, 1
          %s4317 = smul.addr %s4316, 32
          %s4318 = scalar_lea.vmem [#allocation3], %s4317
          %4319 = dma.done %s4315, 512
        $region68: #{tpu_custom_call.1} parent=63 // pred_fallthru
          _
      $region64: #{tpu_custom_call.1} parent=5 // pred_fallthru
        _
    $region6: #{tpu_custom_call.1} parent=1 // loop_footer
      %s22 = sadd.s32 1, %s18
    $region7: #{tpu_custom_call.1} parent=1 // loop_footer_branch
      %17 = sbr.rel target = $region3
    $region8: #{tpu_custom_call.1} parent=1 // loop_exit
      _
    %4320 = vsyncpa [#allocation4], 1
    %s4321 = scalar_lea.sflag [#allocation4], 1
    %4322 = vsyncpa %s4321, 1

</llo_original>
